<compile_context>
chip_gen: v5e
topology: v5e:2x2
jax: 0.10.0
libtpu: 0.0.40
codegen_flags: <defaults>
</compile_context>

<pallas_src>
import functools

import jax
import jax.numpy as jnp
from jax.experimental import pallas as pl
from jax.experimental.pallas import tpu as pltpu

_SELU_ALPHA = 1.6732632423543772
_SELU_SCALE = 1.0507009873554805
_BN_EPS = 1e-5
_NEG = -3.0e38          # finite stand-in for the -inf maxpool edge padding
_LANE = 128


def _selu(x):
    # exp(min(x, 0)) so the unselected branch of the where cannot overflow.
    return _SELU_SCALE * jnp.where(
        x > 0, x, _SELU_ALPHA * (jnp.exp(jnp.minimum(x, 0.0)) - 1.0))


def _bn_fold(gamma, beta, mean, var):
    s = gamma / jnp.sqrt(var + _BN_EPS)
    return s, beta - mean * s


# ----------------------------- one-time host-side weight packing -----------------------------

def _combine_branch_weights(ws, kmax):
    """Stack branch conv weights [(nf, bc, K_i)] into one (3*nf, kmax*bc) im2col weight."""
    pad_max = kmax // 2
    rows = []
    for w in ws:
        nf, bc, k = w.shape
        buf = jnp.zeros((nf, kmax, bc), w.dtype)
        j0 = pad_max - k // 2                      # tap k_i lands at global tap j = k_i + j0
        buf = buf.at[:, j0:j0 + k, :].set(jnp.transpose(w, (0, 2, 1)))
        rows.append(buf.reshape(nf, kmax * bc))
    return jnp.concatenate(rows, axis=0)


def prepare_inception_time(params, build_config, in_channels, outputs, use_bf16=False):
    """One-time packing of all weights for the fused forward.

    Returns (meta, weights):
      meta     static (Python) description of the network structure for the kernel builder
      weights  flat list of 2-D arrays, in the exact order the kernel consumes them
    """
    wdt = jnp.bfloat16 if use_bf16 else jnp.float32
    weights, blocks_meta = [], []
    c_in = in_channels
    nf_last = None
    for bp, node in zip(params['blocks'], build_config):
        use_bn = node.get('use_batch_norm', True)
        use_res = node.get('use_residual', True)
        mods_meta = []
        for mkey in ('m1', 'm2', 'm3'):
            p = bp[mkey]
            w1, w2, w3 = p['conv1_w'], p['conv2_w'], p['conv3_w']
            nf = w1.shape[0]
            kmax = max(w1.shape[2], w2.shape[2], w3.shape[2])
            has_b = p['bottleneck_w'] is not None
            bc = p['bottleneck_w'].shape[0] if has_b else c_in
            c4 = 4 * nf
            wbr = _combine_branch_weights([w1, w2, w3], kmax)          # (3*nf, kmax*bc)
            wmp = p['convmp_w'][:, :, 0]                               # (nf, c_in)
            if use_bn:
                s, t = _bn_fold(p['bn_gamma'], p['bn_beta'], p['bn_mean'], p['bn_var'])
            else:
                s = jnp.ones((c4,), jnp.float32)
                t = jnp.zeros((c4,), jnp.float32)
            # Block-diagonal combined weight [branch convs | maxpool conv]; BN scale folded
            # into the rows so the kernel does one matmul + bias per module.
            w_all = jnp.zeros((c4, kmax * bc + c_in), jnp.float32)
            w_all = w_all.at[:3 * nf, :kmax * bc].set(wbr)
            w_all = w_all.at[3 * nf:, kmax * bc:].set(wmp)
            w_all = w_all * s[:, None]
            if has_b:
                weights.append(p['bottleneck_w'][:, :, 0].astype(wdt))  # (bc, c_in)
            weights.append(w_all.astype(wdt))                           # (4nf, kmax*bc + c_in)
            weights.append(t.reshape(c4, 1).astype(jnp.float32))        # BN shift as bias
            mods_meta.append(dict(has_bottleneck=has_b, kmax=kmax, bc=bc, c_in=c_in, nf=nf))
            c_in = c4
            nf_last = nf
        if use_res:
            c4 = 4 * nf_last
            rs, rt = _bn_fold(bp['res_bn_gamma'], bp['res_bn_beta'],
                              bp['res_bn_mean'], bp['res_bn_var'])
            # r = BN(W x + b) = (rs*W) x + (rs*b + rt)
            weights.append((bp['res_w'][:, :, 0] * rs[:, None]).astype(wdt))          # (c4, Cr)
            weights.append((rs * bp['res_b'] + rt).reshape(c4, 1).astype(jnp.float32))
        blocks_meta.append(dict(use_residual=use_res, modules=mods_meta))
    c_last = 4 * nf_last
    if outputs > 0:
        weights.append(params['lin_w_t'].astype(jnp.float32))            # (c_last, O)
        weights.append(params['lin_b'].reshape(1, -1).astype(jnp.float32))
    elif outputs < 0:
        weights.append(params['final_conv_w'][:, :, 0].astype(wdt))      # (O, c_last)
    else:
        raise ValueError("Outputs cannot be 0.")
    meta = dict(blocks=blocks_meta, outputs=outputs, c_last=c_last)
    return meta, weights


# ----------------------------- fully fused network kernel -----------------------------

def _make_fused_kernel(meta, L, use_bf16):
    outputs = meta['outputs']

    def mx(a):
        return a.astype(jnp.bfloat16) if use_bf16 else a

    def kernel(*refs):
        refs = list(refs)
        o_ref = refs.pop()
        it = iter(refs)
        x_ref = next(it)                                  # (1, C_in, LPAD)
        LP = x_ref.shape[2]
        lane = jax.lax.broadcasted_iota(jnp.int32, (1, LP), 1)
        valid = lane < L                                  # valid time lanes

        cur = x_ref[0]                                    # (C_in, LPAD) f32, zeros at lanes >= L
        for blk in meta['blocks']:
            block_in = cur                                # saved for the residual path
            for mod in blk['modules']:
                kmax = mod['kmax']
                pad = kmax // 2
                # ---- bottleneck 1x1 conv ----
                if mod['has_bottleneck']:
                    zb = jnp.dot(next(it)[...], mx(cur), preferred_element_type=jnp.float32)
                else:
                    zb = cur
                w_all = next(it)[...]                     # (4nf, kmax*bc + c_in), BN scale folded
                bias_t = next(it)[...]                    # (4nf, 1), BN shift
                # ---- im2col via lane rolls (XLU).  Wrapped lanes only pollute padding-lane
                # outputs which are re-masked to zero below (requires L + pad <= LPAD). ----
                # TODO(synk): for the library-default config (kmax=41, bc=32) chunk the taps
                # and accumulate partial matmuls instead of materializing the full im2col.
                zb_m = mx(zb)
                cols = [zb_m if j == pad else pltpu.roll(zb_m, (pad - j) % LP, axis=1)
                        for j in range(kmax)]             # col_j[:, t] = zb[:, t + j - pad]
                # ---- MaxPool1d(3,1,1) with -inf edge semantics; its 1x1 conv is folded into
                # the block-diagonal w_all matmul below. ----
                xm = jnp.where(valid, cur, _NEG)
                mp = jnp.maximum(jnp.maximum(pltpu.roll(xm, 1, axis=1), xm),
                                 pltpu.roll(xm, LP - 1, axis=1))
                mp = jnp.where(valid, mp, 0.0)            # finite (and zero) before optional bf16 cast
                x_all = jnp.concatenate(cols + [mx(mp)], axis=0)
                # ---- all four branches + BN scale in ONE MXU matmul; BN shift as bias ----
                z = jnp.dot(w_all, x_all, preferred_element_type=jnp.float32) + bias_t
                cur = jnp.where(valid, _selu(z), 0.0)     # keep padding lanes exactly zero
            if blk['use_residual']:
                wr_f = next(it)[...]                      # (4nf, Cr), BN scale folded
                rb = next(it)[...]                        # (4nf, 1),  bias*scale + shift
                r = jnp.dot(wr_f, mx(block_in), preferred_element_type=jnp.float32) + rb
                cur = jnp.where(valid, _selu(cur + r), 0.0)

        # ---- head, fused into the same kernel ----
        if outputs > 0:
            w_t = next(it)[...]                           # (C_last, O)
            b = next(it)[...]                             # (1, O)
            m_col = jnp.sum(cur, axis=1, keepdims=True) * (1.0 / L)        # avg pool over L
            o_ref[0] = (jnp.sum(m_col * w_t, axis=0, keepdims=True) + b).astype(o_ref.dtype)
        else:
            wc = next(it)[...]                            # (O, C_last)
            y = jnp.dot(wc, mx(cur), preferred_element_type=jnp.float32)
            o_ref[0] = jnp.where(valid, y, 0.0).astype(o_ref.dtype)

        leftover = list(it)
        assert not leftover, f"unconsumed weight refs: {len(leftover)}"

    return kernel


def inception_time_forward(weights, x, *, meta, L, use_bf16=False):
    """Fused forward.  x: (B, C_in, LPAD) with valid data at lanes [0, L) and zeros elsewhere."""
    B, C_in, LPAD = x.shape
    outputs = meta['outputs']
    c_last = meta['c_last']

    max_pad = max(m['kmax'] // 2 for blk in meta['blocks'] for m in blk['modules'])
    assert LPAD % _LANE == 0 and L + max_pad <= LPAD, "roll-based halo needs L + pad <= LPAD"
    # TODO(synk): add a time-tile grid dimension (with halo handling) for long sequences so the
    # whole-length activation tiles stay inside v7x's 64 MiB VMEM.

    kern = _make_fused_kernel(meta, L=L, use_bf16=use_bf16)

    # All packed weights are 2-D; constant index maps (no re-fetch across grid steps).
    in_specs = [pl.BlockSpec((1, C_in, LPAD), lambda b: (b, 0, 0))]
    for w in weights:
        in_specs.append(pl.BlockSpec(w.shape, lambda b: (0, 0)))

    if outputs > 0:
        out_shape = jax.ShapeDtypeStruct((B, 1, outputs), jnp.float32)
        out_spec = pl.BlockSpec((1, 1, outputs), lambda b: (b, 0, 0))
        out_bytes = B * outputs * 4
    else:
        O = -outputs
        out_shape = jax.ShapeDtypeStruct((B, O, LPAD), jnp.float32)
        out_spec = pl.BlockSpec((1, O, LPAD), lambda b: (b, 0, 0))
        out_bytes = B * O * LPAD * 4

    # Advisory cost hint for XLA scheduling around the single custom call.
    flops, transc = 0, 0
    for blk in meta['blocks']:
        for m in blk['modules']:
            if m['has_bottleneck']:
                flops += 2 * m['bc'] * m['c_in'] * LPAD
            flops += 2 * (4 * m['nf']) * (m['kmax'] * m['bc'] + m['c_in']) * LPAD
            transc += 4 * m['nf'] * LPAD
        if blk['use_residual']:
            flops += 2 * (4 * blk['modules'][-1]['nf']) * blk['modules'][0]['c_in'] * LPAD
            transc += 4 * blk['modules'][-1]['nf'] * LPAD
    flops += 2 * c_last * abs(outputs) * (LPAD if outputs < 0 else 1)
    flops *= B
    transc *= B
    bytes_accessed = (x.size * x.dtype.itemsize + out_bytes
                      + sum(int(w.size) * w.dtype.itemsize for w in weights))

    y = pl.pallas_call(
        kern,
        out_shape=out_shape,
        grid=(B,),                       # keep a >=2-step "parallel" axis (v7x has 2 TCs)
        in_specs=in_specs,
        out_specs=out_spec,
        compiler_params=pltpu.CompilerParams(dimension_semantics=("parallel",)),
        cost_estimate=pl.CostEstimate(flops=int(flops), transcendentals=int(transc),
                                      bytes_accessed=int(bytes_accessed)),
    )(x, *weights)

    if outputs > 0:
        return y.reshape(B, outputs)     # out_activation=None -> identity
    return y[:, :, :L]
    # TODO(synk): strided inter-block MaxPool1d/AvgPool1d (pooling_size != None) not implemented;
    # the demo config uses pooling_size=None (identity), matching the module default path.


# ----------------------------- parameter init (deterministic, eval-mode BN) -----------------------------

def init_inception_module(key, in_channels, n_filters, kernel_sizes, bottleneck_channels):
    ks = jax.random.split(key, 7)
    s = 0.15
    if in_channels > 1:
        bw = s * jax.random.normal(ks[0], (bottleneck_channels, in_channels, 1), jnp.float32)
        bc = bottleneck_channels
    else:
        bw = None
        bc = 1
    c4 = 4 * n_filters
    return dict(
        bottleneck_w=bw,
        conv1_w=s * jax.random.normal(ks[1], (n_filters, bc, kernel_sizes[0]), jnp.float32),
        conv2_w=s * jax.random.normal(ks[2], (n_filters, bc, kernel_sizes[1]), jnp.float32),
        conv3_w=s * jax.random.normal(ks[3], (n_filters, bc, kernel_sizes[2]), jnp.float32),
        convmp_w=s * jax.random.normal(ks[4], (n_filters, in_channels, 1), jnp.float32),
        bn_gamma=1.0 + 0.1 * jax.random.normal(ks[5], (c4,), jnp.float32),
        bn_beta=0.1 * jax.random.normal(ks[6], (c4,), jnp.float32),
        bn_mean=jnp.zeros((c4,), jnp.float32),
        bn_var=jnp.ones((c4,), jnp.float32),
    )


def init_inception_block(key, in_channels, n_filters, kernel_sizes, bottleneck_channels,
                         use_residual):
    ks = jax.random.split(key, 5)
    s = 0.15
    p = dict(
        m1=init_inception_module(ks[0], in_channels, n_filters, kernel_sizes, bottleneck_channels),
        m2=init_inception_module(ks[1], 4 * n_filters, n_filters, kernel_sizes, bottleneck_channels),
        m3=init_inception_module(ks[2], 4 * n_filters, n_filters, kernel_sizes, bottleneck_channels),
    )
    if use_residual:
        c4 = 4 * n_filters
        p['res_w'] = s * jax.random.normal(ks[3], (c4, in_channels, 1), jnp.float32)
        p['res_b'] = 0.05 * jax.random.normal(ks[4], (c4,), jnp.float32)  # nn.Conv1d default bias=True
        p['res_bn_gamma'] = jnp.ones((c4,), jnp.float32)
        p['res_bn_beta'] = jnp.zeros((c4,), jnp.float32)
        p['res_bn_mean'] = jnp.zeros((c4,), jnp.float32)
        p['res_bn_var'] = jnp.ones((c4,), jnp.float32)
    return p


def init_inception_time(key, build_config, in_channels, outputs):
    keys = jax.random.split(key, len(build_config) + 1)
    blocks = []
    last_n_filters = in_channels
    last_kernel_sizes = None
    for i, node in enumerate(build_config):
        last_kernel_sizes = node.get('kernel_sizes', [11, 21, 41])
        n_filters = node.get('n_filters', 32)
        bottleneck = node.get('bottleneck_channels', 32)
        use_residual = node.get('use_residual', True)
        ic = last_n_filters if i == 0 else last_n_filters * 4
        blocks.append(init_inception_block(keys[i], ic, n_filters, last_kernel_sizes,
                                           bottleneck, use_residual))
        last_n_filters = n_filters
    params = dict(blocks=blocks)
    in_features = (1 + len(last_kernel_sizes)) * last_n_filters
    if outputs > 0:
        lw = 0.15 * jax.random.normal(keys[-1], (outputs, in_features), jnp.float32)
        params['lin_w_t'] = lw.T  # (in_features, outputs)
        params['lin_b'] = jnp.zeros((outputs,), jnp.float32)
    elif outputs < 0:
        params['final_conv_w'] = 0.15 * jax.random.normal(
            keys[-1], (-outputs, last_n_filters * 4, 1), jnp.float32)
    else:
        raise ValueError("Outputs cannot be 0.")
    return params


# ----------------------------- pure-JAX reference (for correctness check) -----------------------------

def _conv1d_same_ref(x, w, bias=None):
    pad = w.shape[2] // 2
    y = jax.lax.conv_general_dilated(
        x, w, window_strides=(1,), padding=[(pad, pad)],
        dimension_numbers=('NCH', 'OIH', 'NCH'),
        precision=jax.lax.Precision.HIGHEST)
    if bias is not None:
        y = y + bias[None, :, None]
    return y


def _maxpool3_ref(x):
    xp = jnp.pad(x, ((0, 0), (0, 0), (1, 1)), constant_values=_NEG)
    return jnp.maximum(jnp.maximum(xp[:, :, 0:-2], xp[:, :, 1:-1]), xp[:, :, 2:])


def _bn_ref(x, gamma, beta, mean, var):
    s, t = _bn_fold(gamma, beta, mean, var)
    return x * s[None, :, None] + t[None, :, None]


def inception_module_ref(p, x, use_batch_norm):
    zb = _conv1d_same_ref(x, p['bottleneck_w']) if p['bottleneck_w'] is not None else x
    z1 = _conv1d_same_ref(zb, p['conv1_w'])
    z2 = _conv1d_same_ref(zb, p['conv2_w'])
    z3 = _conv1d_same_ref(zb, p['conv3_w'])
    z4 = _conv1d_same_ref(_maxpool3_ref(x), p['convmp_w'])
    z = jnp.concatenate([z1, z2, z3, z4], axis=1)
    if use_batch_norm:
        z = _bn_ref(z, p['bn_gamma'], p['bn_beta'], p['bn_mean'], p['bn_var'])
    return _selu(z)


def inception_block_ref(p, x, use_residual, use_batch_norm):
    z = inception_module_ref(p['m1'], x, use_batch_norm)
    z = inception_module_ref(p['m2'], z, use_batch_norm)
    z = inception_module_ref(p['m3'], z, use_batch_norm)
    if use_residual:
        r = _conv1d_same_ref(x, p['res_w'], p['res_b'])
        r = _bn_ref(r, p['res_bn_gamma'], p['res_bn_beta'], p['res_bn_mean'], p['res_bn_var'])
        z = _selu(z + r)
    return z


def inception_time_ref(params, x, build_config, outputs):
    for bp, node in zip(params['blocks'], build_config):
        x = inception_block_ref(bp, x,
                                node.get('use_residual', True),
                                node.get('use_batch_norm', True))
    if outputs > 0:
        m = jnp.mean(x, axis=2)
        return m @ params['lin_w_t'] + params['lin_b']
    return _conv1d_same_ref(x, params['final_conv_w'])


# ----------------------------- main -----------------------------

if __name__ == "__main__":
    build_config = [
        dict(n_filters=8, kernel_sizes=[3, 5, 9], bottleneck_channels=8,
             use_residual=True, use_batch_norm=True, pooling_size=None),
        dict(n_filters=8, kernel_sizes=[3, 5, 9], bottleneck_channels=8,
             use_residual=True, use_batch_norm=True, pooling_size=None),
    ]
    in_channels = 4
    B, L = 2, 32
    LPAD = ((L + _LANE - 1) // _LANE) * _LANE   # lane-dense time axis (128)

    key = jax.random.PRNGKey(0)
    pkey, xkey = jax.random.split(key)
    x = jax.random.normal(xkey, (B, in_channels, L), jnp.float32)
    x_padded = jnp.pad(x, ((0, 0), (0, 0), (0, LPAD - L)))   # valid at [0, L), zero tail

    # ---- classification head (outputs > 0): single fused pallas_call ----
    outputs = 3
    params = init_inception_time(pkey, build_config, in_channels, outputs)
    meta, weights = prepare_inception_time(params, build_config, in_channels, outputs,
                                           use_bf16=False)
    fwd = jax.jit(functools.partial(inception_time_forward, meta=meta, L=L, use_bf16=False))
    y = jax.block_until_ready(fwd(weights, x_padded))
    assert y.shape == (B, outputs), y.shape
    assert bool(jnp.all(jnp.isfinite(y)))
    y_ref = inception_time_ref(params, x, build_config, outputs)
    err = float(jnp.max(jnp.abs(y - y_ref)))
    scale = max(1.0, float(jnp.max(jnp.abs(y_ref))))
    assert err <= 5e-2 * scale, f"kernel/reference mismatch (linear head): max abs err {err}"

    # ---- signal head (outputs < 0): same fused kernel, 1x1-conv epilogue ----
    outputs2 = -2
    params2 = init_inception_time(pkey, build_config, in_channels, outputs2)
    meta2, weights2 = prepare_inception_time(params2, build_config, in_channels, outputs2,
                                             use_bf16=False)
    fwd2 = jax.jit(functools.partial(inception_time_forward, meta=meta2, L=L, use_bf16=False))
    y2 = jax.block_until_ready(fwd2(weights2, x_padded))
    assert y2.shape == (B, -outputs2, L), y2.shape
    assert bool(jnp.all(jnp.isfinite(y2)))
    y2_ref = inception_time_ref(params2, x, build_config, outputs2)
    err2 = float(jnp.max(jnp.abs(y2 - y2_ref)))
    scale2 = max(1.0, float(jnp.max(jnp.abs(y2_ref))))
    assert err2 <= 5e-2 * scale2, f"kernel/reference mismatch (conv head): max abs err {err2}"

    print("KERNEL_OK")
</pallas_src>

<mosaic_0001>
module attributes {stable_mosaic.version = 11 : i64} {
  func.func @kernel(%arg0: i32, %arg1: memref<1x4x128xf32, #tpu.memory_space<vmem>>, %arg2: memref<8x4xf32, #tpu.memory_space<vmem>>, %arg3: memref<32x76xf32, #tpu.memory_space<vmem>>, %arg4: memref<32x1xf32, #tpu.memory_space<vmem>>, %arg5: memref<8x32xf32, #tpu.memory_space<vmem>>, %arg6: memref<32x104xf32, #tpu.memory_space<vmem>>, %arg7: memref<32x1xf32, #tpu.memory_space<vmem>>, %arg8: memref<8x32xf32, #tpu.memory_space<vmem>>, %arg9: memref<32x104xf32, #tpu.memory_space<vmem>>, %arg10: memref<32x1xf32, #tpu.memory_space<vmem>>, %arg11: memref<32x4xf32, #tpu.memory_space<vmem>>, %arg12: memref<32x1xf32, #tpu.memory_space<vmem>>, %arg13: memref<8x32xf32, #tpu.memory_space<vmem>>, %arg14: memref<32x104xf32, #tpu.memory_space<vmem>>, %arg15: memref<32x1xf32, #tpu.memory_space<vmem>>, %arg16: memref<8x32xf32, #tpu.memory_space<vmem>>, %arg17: memref<32x104xf32, #tpu.memory_space<vmem>>, %arg18: memref<32x1xf32, #tpu.memory_space<vmem>>, %arg19: memref<8x32xf32, #tpu.memory_space<vmem>>, %arg20: memref<32x104xf32, #tpu.memory_space<vmem>>, %arg21: memref<32x1xf32, #tpu.memory_space<vmem>>, %arg22: memref<32x32xf32, #tpu.memory_space<vmem>>, %arg23: memref<32x1xf32, #tpu.memory_space<vmem>>, %arg24: memref<32x3xf32, #tpu.memory_space<vmem>>, %arg25: memref<1x3xf32, #tpu.memory_space<vmem>>, %arg26: memref<1x1x3xf32, #tpu.memory_space<vmem>>) attributes {dimension_semantics = [#tpu.dimension_semantics<parallel>], iteration_bounds = array<i64: 2>, scalar_prefetch = 0 : i64, scratch_operands = 0 : i64, tpu.core_type = #tpu.core_type<tc>, window_params = [{transform_indices = @transform_0, window_bounds = array<i64: 1, 4, 128>}, {pipeline_mode = #tpu.pipeline_mode<synchronous>, transform_indices = @transform_1, window_bounds = array<i64: 8, 4>}, {pipeline_mode = #tpu.pipeline_mode<synchronous>, transform_indices = @transform_2, window_bounds = array<i64: 32, 76>}, {pipeline_mode = #tpu.pipeline_mode<synchronous>, transform_indices = @transform_3, window_bounds = array<i64: 32, 1>}, {pipeline_mode = #tpu.pipeline_mode<synchronous>, transform_indices = @transform_4, window_bounds = array<i64: 8, 32>}, {pipeline_mode = #tpu.pipeline_mode<synchronous>, transform_indices = @transform_5, window_bounds = array<i64: 32, 104>}, {pipeline_mode = #tpu.pipeline_mode<synchronous>, transform_indices = @transform_6, window_bounds = array<i64: 32, 1>}, {pipeline_mode = #tpu.pipeline_mode<synchronous>, transform_indices = @transform_7, window_bounds = array<i64: 8, 32>}, {pipeline_mode = #tpu.pipeline_mode<synchronous>, transform_indices = @transform_8, window_bounds = array<i64: 32, 104>}, {pipeline_mode = #tpu.pipeline_mode<synchronous>, transform_indices = @transform_9, window_bounds = array<i64: 32, 1>}, {pipeline_mode = #tpu.pipeline_mode<synchronous>, transform_indices = @transform_10, window_bounds = array<i64: 32, 4>}, {pipeline_mode = #tpu.pipeline_mode<synchronous>, transform_indices = @transform_11, window_bounds = array<i64: 32, 1>}, {pipeline_mode = #tpu.pipeline_mode<synchronous>, transform_indices = @transform_12, window_bounds = array<i64: 8, 32>}, {pipeline_mode = #tpu.pipeline_mode<synchronous>, transform_indices = @transform_13, window_bounds = array<i64: 32, 104>}, {pipeline_mode = #tpu.pipeline_mode<synchronous>, transform_indices = @transform_14, window_bounds = array<i64: 32, 1>}, {pipeline_mode = #tpu.pipeline_mode<synchronous>, transform_indices = @transform_15, window_bounds = array<i64: 8, 32>}, {pipeline_mode = #tpu.pipeline_mode<synchronous>, transform_indices = @transform_16, window_bounds = array<i64: 32, 104>}, {pipeline_mode = #tpu.pipeline_mode<synchronous>, transform_indices = @transform_17, window_bounds = array<i64: 32, 1>}, {pipeline_mode = #tpu.pipeline_mode<synchronous>, transform_indices = @transform_18, window_bounds = array<i64: 8, 32>}, {pipeline_mode = #tpu.pipeline_mode<synchronous>, transform_indices = @transform_19, window_bounds = array<i64: 32, 104>}, {pipeline_mode = #tpu.pipeline_mode<synchronous>, transform_indices = @transform_20, window_bounds = array<i64: 32, 1>}, {pipeline_mode = #tpu.pipeline_mode<synchronous>, transform_indices = @transform_21, window_bounds = array<i64: 32, 32>}, {pipeline_mode = #tpu.pipeline_mode<synchronous>, transform_indices = @transform_22, window_bounds = array<i64: 32, 1>}, {pipeline_mode = #tpu.pipeline_mode<synchronous>, transform_indices = @transform_23, window_bounds = array<i64: 32, 3>}, {pipeline_mode = #tpu.pipeline_mode<synchronous>, transform_indices = @transform_24, window_bounds = array<i64: 1, 3>}, {transform_indices = @transform_25, window_bounds = array<i64: 1, 1, 3>}]} {
    %0 = tpu.iota {dimensions = array<i32: 1>} : vector<1x128xi32>
    %c32_i32 = arith.constant 32 : i32
    %1 = vector.broadcast %c32_i32 : i32 to vector<1x128xi32>
    %2 = arith.cmpi slt, %0, %1 : vector<1x128xi32>
    %c0 = arith.constant 0 : index
    %c0_0 = arith.constant 0 : index
    %c0_1 = arith.constant 0 : index
    %3 = vector.load %arg1[%c0, %c0_0, %c0_1] : memref<1x4x128xf32, #tpu.memory_space<vmem>>, vector<1x4x128xf32>
    %4 = vector.shape_cast %3 : vector<1x4x128xf32> to vector<4x128xf32>
    %c0_2 = arith.constant 0 : index
    %c0_3 = arith.constant 0 : index
    %5 = vector.load %arg2[%c0_2, %c0_3] : memref<8x4xf32, #tpu.memory_space<vmem>>, vector<8x4xf32>
    %cst = arith.constant dense<0.000000e+00> : vector<8x128xf32>
    %6 = tpu.matmul %5, %4, %cst {dimension_numbers = #tpu.dot_dimension_numbers<[1], [0], [0], [1], [0, 0, 1, 1], [], []>} : vector<8x4xf32>, vector<4x128xf32>, vector<8x128xf32> -> vector<8x128xf32>
    %c0_4 = arith.constant 0 : index
    %c0_5 = arith.constant 0 : index
    %7 = vector.load %arg3[%c0_4, %c0_5] : memref<32x76xf32, #tpu.memory_space<vmem>>, vector<32x76xf32>
    %c0_6 = arith.constant 0 : index
    %c0_7 = arith.constant 0 : index
    %8 = vector.load %arg4[%c0_6, %c0_7] : memref<32x1xf32, #tpu.memory_space<vmem>>, vector<32x1xf32>
    %c4_i32 = arith.constant 4 : i32
    %9 = tpu.dynamic_rotate %6 by %c4_i32 dim 1 : vector<8x128xf32>, i32 -> vector<8x128xf32>
    %c3_i32 = arith.constant 3 : i32
    %10 = tpu.dynamic_rotate %6 by %c3_i32 dim 1 : vector<8x128xf32>, i32 -> vector<8x128xf32>
    %c2_i32 = arith.constant 2 : i32
    %11 = tpu.dynamic_rotate %6 by %c2_i32 dim 1 : vector<8x128xf32>, i32 -> vector<8x128xf32>
    %c1_i32 = arith.constant 1 : i32
    %12 = tpu.dynamic_rotate %6 by %c1_i32 dim 1 : vector<8x128xf32>, i32 -> vector<8x128xf32>
    %c127_i32 = arith.constant 127 : i32
    %13 = tpu.dynamic_rotate %6 by %c127_i32 dim 1 : vector<8x128xf32>, i32 -> vector<8x128xf32>
    %c126_i32 = arith.constant 126 : i32
    %14 = tpu.dynamic_rotate %6 by %c126_i32 dim 1 : vector<8x128xf32>, i32 -> vector<8x128xf32>
    %c125_i32 = arith.constant 125 : i32
    %15 = tpu.dynamic_rotate %6 by %c125_i32 dim 1 : vector<8x128xf32>, i32 -> vector<8x128xf32>
    %c124_i32 = arith.constant 124 : i32
    %16 = tpu.dynamic_rotate %6 by %c124_i32 dim 1 : vector<8x128xf32>, i32 -> vector<8x128xf32>
    %cst_8 = arith.constant -3.000000e+38 : f32
    %17 = vector.shape_cast %2 : vector<1x128xi1> to vector<1x128xi1>
    %18 = vector.broadcast %17 : vector<1x128xi1> to vector<4x128xi1>
    %19 = vector.broadcast %cst_8 : f32 to vector<4x128xf32>
    %20 = arith.select %18, %4, %19 : vector<4x128xi1>, vector<4x128xf32>
    %c1_i32_9 = arith.constant 1 : i32
    %21 = tpu.dynamic_rotate %20 by %c1_i32_9 dim 1 : vector<4x128xf32>, i32 -> vector<4x128xf32>
    %22 = arith.maximumf %21, %20 : vector<4x128xf32>
    %c127_i32_10 = arith.constant 127 : i32
    %23 = tpu.dynamic_rotate %20 by %c127_i32_10 dim 1 : vector<4x128xf32>, i32 -> vector<4x128xf32>
    %24 = arith.maximumf %22, %23 : vector<4x128xf32>
    %cst_11 = arith.constant 0.000000e+00 : f32
    %25 = vector.shape_cast %2 : vector<1x128xi1> to vector<1x128xi1>
    %26 = vector.broadcast %25 : vector<1x128xi1> to vector<4x128xi1>
    %27 = vector.broadcast %cst_11 : f32 to vector<4x128xf32>
    %28 = arith.select %26, %24, %27 : vector<4x128xi1>, vector<4x128xf32>
    %29 = tpu.concatenate %9, %10, %11, %12, %6, %13, %14, %15, %16, %28 in 0 : vector<8x128xf32>, vector<8x128xf32>, vector<8x128xf32>, vector<8x128xf32>, vector<8x128xf32>, vector<8x128xf32>, vector<8x128xf32>, vector<8x128xf32>, vector<8x128xf32>, vector<4x128xf32> -> vector<76x128xf32>
    %cst_12 = arith.constant dense<0.000000e+00> : vector<32x128xf32>
    %30 = tpu.matmul %7, %29, %cst_12 {dimension_numbers = #tpu.dot_dimension_numbers<[1], [0], [0], [1], [0, 0, 1, 1], [], []>} : vector<32x76xf32>, vector<76x128xf32>, vector<32x128xf32> -> vector<32x128xf32>
    %31 = vector.broadcast %8 : vector<32x1xf32> to vector<32x128xf32>
    %32 = arith.addf %30, %31 : vector<32x128xf32>
    %cst_13 = arith.constant 0.000000e+00 : f32
    %33 = vector.broadcast %cst_13 : f32 to vector<32x128xf32>
    %34 = arith.cmpf ogt, %32, %33 : vector<32x128xf32>
    %cst_14 = arith.constant 0.000000e+00 : f32
    %35 = vector.broadcast %cst_14 : f32 to vector<32x128xf32>
    %36 = arith.minimumf %32, %35 : vector<32x128xf32>
    %37 = math.exp %36 : vector<32x128xf32>
    %cst_15 = arith.constant 1.000000e+00 : f32
    %38 = vector.broadcast %cst_15 : f32 to vector<32x128xf32>
    %39 = arith.subf %37, %38 : vector<32x128xf32>
    %cst_16 = arith.constant 1.67326319 : f32
    %40 = vector.broadcast %cst_16 : f32 to vector<32x128xf32>
    %41 = arith.mulf %40, %39 : vector<32x128xf32>
    %42 = arith.select %34, %32, %41 : vector<32x128xi1>, vector<32x128xf32>
    %cst_17 = arith.constant 1.05070102 : f32
    %43 = vector.broadcast %cst_17 : f32 to vector<32x128xf32>
    %44 = arith.mulf %43, %42 : vector<32x128xf32>
    %cst_18 = arith.constant 0.000000e+00 : f32
    %45 = vector.shape_cast %2 : vector<1x128xi1> to vector<1x128xi1>
    %46 = vector.broadcast %45 : vector<1x128xi1> to vector<32x128xi1>
    %47 = vector.broadcast %cst_18 : f32 to vector<32x128xf32>
    %48 = arith.select %46, %44, %47 : vector<32x128xi1>, vector<32x128xf32>
    %c0_19 = arith.constant 0 : index
    %c0_20 = arith.constant 0 : index
    %49 = vector.load %arg5[%c0_19, %c0_20] : memref<8x32xf32, #tpu.memory_space<vmem>>, vector<8x32xf32>
    %cst_21 = arith.constant dense<0.000000e+00> : vector<8x128xf32>
    %50 = tpu.matmul %49, %48, %cst_21 {dimension_numbers = #tpu.dot_dimension_numbers<[1], [0], [0], [1], [0, 0, 1, 1], [], []>} : vector<8x32xf32>, vector<32x128xf32>, vector<8x128xf32> -> vector<8x128xf32>
    %c0_22 = arith.constant 0 : index
    %c0_23 = arith.constant 0 : index
    %51 = vector.load %arg6[%c0_22, %c0_23] : memref<32x104xf32, #tpu.memory_space<vmem>>, vector<32x104xf32>
    %c0_24 = arith.constant 0 : index
    %c0_25 = arith.constant 0 : index
    %52 = vector.load %arg7[%c0_24, %c0_25] : memref<32x1xf32, #tpu.memory_space<vmem>>, vector<32x1xf32>
    %c4_i32_26 = arith.constant 4 : i32
    %53 = tpu.dynamic_rotate %50 by %c4_i32_26 dim 1 : vector<8x128xf32>, i32 -> vector<8x128xf32>
    %c3_i32_27 = arith.constant 3 : i32
    %54 = tpu.dynamic_rotate %50 by %c3_i32_27 dim 1 : vector<8x128xf32>, i32 -> vector<8x128xf32>
    %c2_i32_28 = arith.constant 2 : i32
    %55 = tpu.dynamic_rotate %50 by %c2_i32_28 dim 1 : vector<8x128xf32>, i32 -> vector<8x128xf32>
    %c1_i32_29 = arith.constant 1 : i32
    %56 = tpu.dynamic_rotate %50 by %c1_i32_29 dim 1 : vector<8x128xf32>, i32 -> vector<8x128xf32>
    %c127_i32_30 = arith.constant 127 : i32
    %57 = tpu.dynamic_rotate %50 by %c127_i32_30 dim 1 : vector<8x128xf32>, i32 -> vector<8x128xf32>
    %c126_i32_31 = arith.constant 126 : i32
    %58 = tpu.dynamic_rotate %50 by %c126_i32_31 dim 1 : vector<8x128xf32>, i32 -> vector<8x128xf32>
    %c125_i32_32 = arith.constant 125 : i32
    %59 = tpu.dynamic_rotate %50 by %c125_i32_32 dim 1 : vector<8x128xf32>, i32 -> vector<8x128xf32>
    %c124_i32_33 = arith.constant 124 : i32
    %60 = tpu.dynamic_rotate %50 by %c124_i32_33 dim 1 : vector<8x128xf32>, i32 -> vector<8x128xf32>
    %cst_34 = arith.constant -3.000000e+38 : f32
    %61 = vector.shape_cast %2 : vector<1x128xi1> to vector<1x128xi1>
    %62 = vector.broadcast %61 : vector<1x128xi1> to vector<32x128xi1>
    %63 = vector.broadcast %cst_34 : f32 to vector<32x128xf32>
    %64 = arith.select %62, %48, %63 : vector<32x128xi1>, vector<32x128xf32>
    %c1_i32_35 = arith.constant 1 : i32
    %65 = tpu.dynamic_rotate %64 by %c1_i32_35 dim 1 : vector<32x128xf32>, i32 -> vector<32x128xf32>
    %66 = arith.maximumf %65, %64 : vector<32x128xf32>
    %c127_i32_36 = arith.constant 127 : i32
    %67 = tpu.dynamic_rotate %64 by %c127_i32_36 dim 1 : vector<32x128xf32>, i32 -> vector<32x128xf32>
    %68 = arith.maximumf %66, %67 : vector<32x128xf32>
    %cst_37 = arith.constant 0.000000e+00 : f32
    %69 = vector.shape_cast %2 : vector<1x128xi1> to vector<1x128xi1>
    %70 = vector.broadcast %69 : vector<1x128xi1> to vector<32x128xi1>
    %71 = vector.broadcast %cst_37 : f32 to vector<32x128xf32>
    %72 = arith.select %70, %68, %71 : vector<32x128xi1>, vector<32x128xf32>
    %73 = tpu.concatenate %53, %54, %55, %56, %50, %57, %58, %59, %60, %72 in 0 : vector<8x128xf32>, vector<8x128xf32>, vector<8x128xf32>, vector<8x128xf32>, vector<8x128xf32>, vector<8x128xf32>, vector<8x128xf32>, vector<8x128xf32>, vector<8x128xf32>, vector<32x128xf32> -> vector<104x128xf32>
    %cst_38 = arith.constant dense<0.000000e+00> : vector<32x128xf32>
    %74 = tpu.matmul %51, %73, %cst_38 {dimension_numbers = #tpu.dot_dimension_numbers<[1], [0], [0], [1], [0, 0, 1, 1], [], []>} : vector<32x104xf32>, vector<104x128xf32>, vector<32x128xf32> -> vector<32x128xf32>
    %75 = vector.broadcast %52 : vector<32x1xf32> to vector<32x128xf32>
    %76 = arith.addf %74, %75 : vector<32x128xf32>
    %cst_39 = arith.constant 0.000000e+00 : f32
    %77 = vector.broadcast %cst_39 : f32 to vector<32x128xf32>
    %78 = arith.cmpf ogt, %76, %77 : vector<32x128xf32>
    %cst_40 = arith.constant 0.000000e+00 : f32
    %79 = vector.broadcast %cst_40 : f32 to vector<32x128xf32>
    %80 = arith.minimumf %76, %79 : vector<32x128xf32>
    %81 = math.exp %80 : vector<32x128xf32>
    %cst_41 = arith.constant 1.000000e+00 : f32
    %82 = vector.broadcast %cst_41 : f32 to vector<32x128xf32>
    %83 = arith.subf %81, %82 : vector<32x128xf32>
    %cst_42 = arith.constant 1.67326319 : f32
    %84 = vector.broadcast %cst_42 : f32 to vector<32x128xf32>
    %85 = arith.mulf %84, %83 : vector<32x128xf32>
    %86 = arith.select %78, %76, %85 : vector<32x128xi1>, vector<32x128xf32>
    %cst_43 = arith.constant 1.05070102 : f32
    %87 = vector.broadcast %cst_43 : f32 to vector<32x128xf32>
    %88 = arith.mulf %87, %86 : vector<32x128xf32>
    %cst_44 = arith.constant 0.000000e+00 : f32
    %89 = vector.shape_cast %2 : vector<1x128xi1> to vector<1x128xi1>
    %90 = vector.broadcast %89 : vector<1x128xi1> to vector<32x128xi1>
    %91 = vector.broadcast %cst_44 : f32 to vector<32x128xf32>
    %92 = arith.select %90, %88, %91 : vector<32x128xi1>, vector<32x128xf32>
    %c0_45 = arith.constant 0 : index
    %c0_46 = arith.constant 0 : index
    %93 = vector.load %arg8[%c0_45, %c0_46] : memref<8x32xf32, #tpu.memory_space<vmem>>, vector<8x32xf32>
    %cst_47 = arith.constant dense<0.000000e+00> : vector<8x128xf32>
    %94 = tpu.matmul %93, %92, %cst_47 {dimension_numbers = #tpu.dot_dimension_numbers<[1], [0], [0], [1], [0, 0, 1, 1], [], []>} : vector<8x32xf32>, vector<32x128xf32>, vector<8x128xf32> -> vector<8x128xf32>
    %c0_48 = arith.constant 0 : index
    %c0_49 = arith.constant 0 : index
    %95 = vector.load %arg9[%c0_48, %c0_49] : memref<32x104xf32, #tpu.memory_space<vmem>>, vector<32x104xf32>
    %c0_50 = arith.constant 0 : index
    %c0_51 = arith.constant 0 : index
    %96 = vector.load %arg10[%c0_50, %c0_51] : memref<32x1xf32, #tpu.memory_space<vmem>>, vector<32x1xf32>
    %c4_i32_52 = arith.constant 4 : i32
    %97 = tpu.dynamic_rotate %94 by %c4_i32_52 dim 1 : vector<8x128xf32>, i32 -> vector<8x128xf32>
    %c3_i32_53 = arith.constant 3 : i32
    %98 = tpu.dynamic_rotate %94 by %c3_i32_53 dim 1 : vector<8x128xf32>, i32 -> vector<8x128xf32>
    %c2_i32_54 = arith.constant 2 : i32
    %99 = tpu.dynamic_rotate %94 by %c2_i32_54 dim 1 : vector<8x128xf32>, i32 -> vector<8x128xf32>
    %c1_i32_55 = arith.constant 1 : i32
    %100 = tpu.dynamic_rotate %94 by %c1_i32_55 dim 1 : vector<8x128xf32>, i32 -> vector<8x128xf32>
    %c127_i32_56 = arith.constant 127 : i32
    %101 = tpu.dynamic_rotate %94 by %c127_i32_56 dim 1 : vector<8x128xf32>, i32 -> vector<8x128xf32>
    %c126_i32_57 = arith.constant 126 : i32
    %102 = tpu.dynamic_rotate %94 by %c126_i32_57 dim 1 : vector<8x128xf32>, i32 -> vector<8x128xf32>
    %c125_i32_58 = arith.constant 125 : i32
    %103 = tpu.dynamic_rotate %94 by %c125_i32_58 dim 1 : vector<8x128xf32>, i32 -> vector<8x128xf32>
    %c124_i32_59 = arith.constant 124 : i32
    %104 = tpu.dynamic_rotate %94 by %c124_i32_59 dim 1 : vector<8x128xf32>, i32 -> vector<8x128xf32>
    %cst_60 = arith.constant -3.000000e+38 : f32
    %105 = vector.shape_cast %2 : vector<1x128xi1> to vector<1x128xi1>
    %106 = vector.broadcast %105 : vector<1x128xi1> to vector<32x128xi1>
    %107 = vector.broadcast %cst_60 : f32 to vector<32x128xf32>
    %108 = arith.select %106, %92, %107 : vector<32x128xi1>, vector<32x128xf32>
    %c1_i32_61 = arith.constant 1 : i32
    %109 = tpu.dynamic_rotate %108 by %c1_i32_61 dim 1 : vector<32x128xf32>, i32 -> vector<32x128xf32>
    %110 = arith.maximumf %109, %108 : vector<32x128xf32>
    %c127_i32_62 = arith.constant 127 : i32
    %111 = tpu.dynamic_rotate %108 by %c127_i32_62 dim 1 : vector<32x128xf32>, i32 -> vector<32x128xf32>
    %112 = arith.maximumf %110, %111 : vector<32x128xf32>
    %cst_63 = arith.constant 0.000000e+00 : f32
    %113 = vector.shape_cast %2 : vector<1x128xi1> to vector<1x128xi1>
    %114 = vector.broadcast %113 : vector<1x128xi1> to vector<32x128xi1>
    %115 = vector.broadcast %cst_63 : f32 to vector<32x128xf32>
    %116 = arith.select %114, %112, %115 : vector<32x128xi1>, vector<32x128xf32>
    %117 = tpu.concatenate %97, %98, %99, %100, %94, %101, %102, %103, %104, %116 in 0 : vector<8x128xf32>, vector<8x128xf32>, vector<8x128xf32>, vector<8x128xf32>, vector<8x128xf32>, vector<8x128xf32>, vector<8x128xf32>, vector<8x128xf32>, vector<8x128xf32>, vector<32x128xf32> -> vector<104x128xf32>
    %cst_64 = arith.constant dense<0.000000e+00> : vector<32x128xf32>
    %118 = tpu.matmul %95, %117, %cst_64 {dimension_numbers = #tpu.dot_dimension_numbers<[1], [0], [0], [1], [0, 0, 1, 1], [], []>} : vector<32x104xf32>, vector<104x128xf32>, vector<32x128xf32> -> vector<32x128xf32>
    %119 = vector.broadcast %96 : vector<32x1xf32> to vector<32x128xf32>
    %120 = arith.addf %118, %119 : vector<32x128xf32>
    %cst_65 = arith.constant 0.000000e+00 : f32
    %121 = vector.broadcast %cst_65 : f32 to vector<32x128xf32>
    %122 = arith.cmpf ogt, %120, %121 : vector<32x128xf32>
    %cst_66 = arith.constant 0.000000e+00 : f32
    %123 = vector.broadcast %cst_66 : f32 to vector<32x128xf32>
    %124 = arith.minimumf %120, %123 : vector<32x128xf32>
    %125 = math.exp %124 : vector<32x128xf32>
    %cst_67 = arith.constant 1.000000e+00 : f32
    %126 = vector.broadcast %cst_67 : f32 to vector<32x128xf32>
    %127 = arith.subf %125, %126 : vector<32x128xf32>
    %cst_68 = arith.constant 1.67326319 : f32
    %128 = vector.broadcast %cst_68 : f32 to vector<32x128xf32>
    %129 = arith.mulf %128, %127 : vector<32x128xf32>
    %130 = arith.select %122, %120, %129 : vector<32x128xi1>, vector<32x128xf32>
    %cst_69 = arith.constant 1.05070102 : f32
    %131 = vector.broadcast %cst_69 : f32 to vector<32x128xf32>
    %132 = arith.mulf %131, %130 : vector<32x128xf32>
    %cst_70 = arith.constant 0.000000e+00 : f32
    %133 = vector.shape_cast %2 : vector<1x128xi1> to vector<1x128xi1>
    %134 = vector.broadcast %133 : vector<1x128xi1> to vector<32x128xi1>
    %135 = vector.broadcast %cst_70 : f32 to vector<32x128xf32>
    %136 = arith.select %134, %132, %135 : vector<32x128xi1>, vector<32x128xf32>
    %c0_71 = arith.constant 0 : index
    %c0_72 = arith.constant 0 : index
    %137 = vector.load %arg11[%c0_71, %c0_72] : memref<32x4xf32, #tpu.memory_space<vmem>>, vector<32x4xf32>
    %c0_73 = arith.constant 0 : index
    %c0_74 = arith.constant 0 : index
    %138 = vector.load %arg12[%c0_73, %c0_74] : memref<32x1xf32, #tpu.memory_space<vmem>>, vector<32x1xf32>
    %cst_75 = arith.constant dense<0.000000e+00> : vector<32x128xf32>
    %139 = tpu.matmul %137, %4, %cst_75 {dimension_numbers = #tpu.dot_dimension_numbers<[1], [0], [0], [1], [0, 0, 1, 1], [], []>} : vector<32x4xf32>, vector<4x128xf32>, vector<32x128xf32> -> vector<32x128xf32>
    %140 = vector.broadcast %138 : vector<32x1xf32> to vector<32x128xf32>
    %141 = arith.addf %139, %140 : vector<32x128xf32>
    %142 = arith.addf %136, %141 : vector<32x128xf32>
    %cst_76 = arith.constant 0.000000e+00 : f32
    %143 = vector.broadcast %cst_76 : f32 to vector<32x128xf32>
    %144 = arith.cmpf ogt, %142, %143 : vector<32x128xf32>
    %cst_77 = arith.constant 0.000000e+00 : f32
    %145 = vector.broadcast %cst_77 : f32 to vector<32x128xf32>
    %146 = arith.minimumf %142, %145 : vector<32x128xf32>
    %147 = math.exp %146 : vector<32x128xf32>
    %cst_78 = arith.constant 1.000000e+00 : f32
    %148 = vector.broadcast %cst_78 : f32 to vector<32x128xf32>
    %149 = arith.subf %147, %148 : vector<32x128xf32>
    %cst_79 = arith.constant 1.67326319 : f32
    %150 = vector.broadcast %cst_79 : f32 to vector<32x128xf32>
    %151 = arith.mulf %150, %149 : vector<32x128xf32>
    %152 = arith.select %144, %142, %151 : vector<32x128xi1>, vector<32x128xf32>
    %cst_80 = arith.constant 1.05070102 : f32
    %153 = vector.broadcast %cst_80 : f32 to vector<32x128xf32>
    %154 = arith.mulf %153, %152 : vector<32x128xf32>
    %cst_81 = arith.constant 0.000000e+00 : f32
    %155 = vector.shape_cast %2 : vector<1x128xi1> to vector<1x128xi1>
    %156 = vector.broadcast %155 : vector<1x128xi1> to vector<32x128xi1>
    %157 = vector.broadcast %cst_81 : f32 to vector<32x128xf32>
    %158 = arith.select %156, %154, %157 : vector<32x128xi1>, vector<32x128xf32>
    %c0_82 = arith.constant 0 : index
    %c0_83 = arith.constant 0 : index
    %159 = vector.load %arg13[%c0_82, %c0_83] : memref<8x32xf32, #tpu.memory_space<vmem>>, vector<8x32xf32>
    %cst_84 = arith.constant dense<0.000000e+00> : vector<8x128xf32>
    %160 = tpu.matmul %159, %158, %cst_84 {dimension_numbers = #tpu.dot_dimension_numbers<[1], [0], [0], [1], [0, 0, 1, 1], [], []>} : vector<8x32xf32>, vector<32x128xf32>, vector<8x128xf32> -> vector<8x128xf32>
    %c0_85 = arith.constant 0 : index
    %c0_86 = arith.constant 0 : index
    %161 = vector.load %arg14[%c0_85, %c0_86] : memref<32x104xf32, #tpu.memory_space<vmem>>, vector<32x104xf32>
    %c0_87 = arith.constant 0 : index
    %c0_88 = arith.constant 0 : index
    %162 = vector.load %arg15[%c0_87, %c0_88] : memref<32x1xf32, #tpu.memory_space<vmem>>, vector<32x1xf32>
    %c4_i32_89 = arith.constant 4 : i32
    %163 = tpu.dynamic_rotate %160 by %c4_i32_89 dim 1 : vector<8x128xf32>, i32 -> vector<8x128xf32>
    %c3_i32_90 = arith.constant 3 : i32
    %164 = tpu.dynamic_rotate %160 by %c3_i32_90 dim 1 : vector<8x128xf32>, i32 -> vector<8x128xf32>
    %c2_i32_91 = arith.constant 2 : i32
    %165 = tpu.dynamic_rotate %160 by %c2_i32_91 dim 1 : vector<8x128xf32>, i32 -> vector<8x128xf32>
    %c1_i32_92 = arith.constant 1 : i32
    %166 = tpu.dynamic_rotate %160 by %c1_i32_92 dim 1 : vector<8x128xf32>, i32 -> vector<8x128xf32>
    %c127_i32_93 = arith.constant 127 : i32
    %167 = tpu.dynamic_rotate %160 by %c127_i32_93 dim 1 : vector<8x128xf32>, i32 -> vector<8x128xf32>
    %c126_i32_94 = arith.constant 126 : i32
    %168 = tpu.dynamic_rotate %160 by %c126_i32_94 dim 1 : vector<8x128xf32>, i32 -> vector<8x128xf32>
    %c125_i32_95 = arith.constant 125 : i32
    %169 = tpu.dynamic_rotate %160 by %c125_i32_95 dim 1 : vector<8x128xf32>, i32 -> vector<8x128xf32>
    %c124_i32_96 = arith.constant 124 : i32
    %170 = tpu.dynamic_rotate %160 by %c124_i32_96 dim 1 : vector<8x128xf32>, i32 -> vector<8x128xf32>
    %cst_97 = arith.constant -3.000000e+38 : f32
    %171 = vector.shape_cast %2 : vector<1x128xi1> to vector<1x128xi1>
    %172 = vector.broadcast %171 : vector<1x128xi1> to vector<32x128xi1>
    %173 = vector.broadcast %cst_97 : f32 to vector<32x128xf32>
    %174 = arith.select %172, %158, %173 : vector<32x128xi1>, vector<32x128xf32>
    %c1_i32_98 = arith.constant 1 : i32
    %175 = tpu.dynamic_rotate %174 by %c1_i32_98 dim 1 : vector<32x128xf32>, i32 -> vector<32x128xf32>
    %176 = arith.maximumf %175, %174 : vector<32x128xf32>
    %c127_i32_99 = arith.constant 127 : i32
    %177 = tpu.dynamic_rotate %174 by %c127_i32_99 dim 1 : vector<32x128xf32>, i32 -> vector<32x128xf32>
    %178 = arith.maximumf %176, %177 : vector<32x128xf32>
    %cst_100 = arith.constant 0.000000e+00 : f32
    %179 = vector.shape_cast %2 : vector<1x128xi1> to vector<1x128xi1>
    %180 = vector.broadcast %179 : vector<1x128xi1> to vector<32x128xi1>
    %181 = vector.broadcast %cst_100 : f32 to vector<32x128xf32>
    %182 = arith.select %180, %178, %181 : vector<32x128xi1>, vector<32x128xf32>
    %183 = tpu.concatenate %163, %164, %165, %166, %160, %167, %168, %169, %170, %182 in 0 : vector<8x128xf32>, vector<8x128xf32>, vector<8x128xf32>, vector<8x128xf32>, vector<8x128xf32>, vector<8x128xf32>, vector<8x128xf32>, vector<8x128xf32>, vector<8x128xf32>, vector<32x128xf32> -> vector<104x128xf32>
    %cst_101 = arith.constant dense<0.000000e+00> : vector<32x128xf32>
    %184 = tpu.matmul %161, %183, %cst_101 {dimension_numbers = #tpu.dot_dimension_numbers<[1], [0], [0], [1], [0, 0, 1, 1], [], []>} : vector<32x104xf32>, vector<104x128xf32>, vector<32x128xf32> -> vector<32x128xf32>
    %185 = vector.broadcast %162 : vector<32x1xf32> to vector<32x128xf32>
    %186 = arith.addf %184, %185 : vector<32x128xf32>
    %cst_102 = arith.constant 0.000000e+00 : f32
    %187 = vector.broadcast %cst_102 : f32 to vector<32x128xf32>
    %188 = arith.cmpf ogt, %186, %187 : vector<32x128xf32>
    %cst_103 = arith.constant 0.000000e+00 : f32
    %189 = vector.broadcast %cst_103 : f32 to vector<32x128xf32>
    %190 = arith.minimumf %186, %189 : vector<32x128xf32>
    %191 = math.exp %190 : vector<32x128xf32>
    %cst_104 = arith.constant 1.000000e+00 : f32
    %192 = vector.broadcast %cst_104 : f32 to vector<32x128xf32>
    %193 = arith.subf %191, %192 : vector<32x128xf32>
    %cst_105 = arith.constant 1.67326319 : f32
    %194 = vector.broadcast %cst_105 : f32 to vector<32x128xf32>
    %195 = arith.mulf %194, %193 : vector<32x128xf32>
    %196 = arith.select %188, %186, %195 : vector<32x128xi1>, vector<32x128xf32>
    %cst_106 = arith.constant 1.05070102 : f32
    %197 = vector.broadcast %cst_106 : f32 to vector<32x128xf32>
    %198 = arith.mulf %197, %196 : vector<32x128xf32>
    %cst_107 = arith.constant 0.000000e+00 : f32
    %199 = vector.shape_cast %2 : vector<1x128xi1> to vector<1x128xi1>
    %200 = vector.broadcast %199 : vector<1x128xi1> to vector<32x128xi1>
    %201 = vector.broadcast %cst_107 : f32 to vector<32x128xf32>
    %202 = arith.select %200, %198, %201 : vector<32x128xi1>, vector<32x128xf32>
    %c0_108 = arith.constant 0 : index
    %c0_109 = arith.constant 0 : index
    %203 = vector.load %arg16[%c0_108, %c0_109] : memref<8x32xf32, #tpu.memory_space<vmem>>, vector<8x32xf32>
    %cst_110 = arith.constant dense<0.000000e+00> : vector<8x128xf32>
    %204 = tpu.matmul %203, %202, %cst_110 {dimension_numbers = #tpu.dot_dimension_numbers<[1], [0], [0], [1], [0, 0, 1, 1], [], []>} : vector<8x32xf32>, vector<32x128xf32>, vector<8x128xf32> -> vector<8x128xf32>
    %c0_111 = arith.constant 0 : index
    %c0_112 = arith.constant 0 : index
    %205 = vector.load %arg17[%c0_111, %c0_112] : memref<32x104xf32, #tpu.memory_space<vmem>>, vector<32x104xf32>
    %c0_113 = arith.constant 0 : index
    %c0_114 = arith.constant 0 : index
    %206 = vector.load %arg18[%c0_113, %c0_114] : memref<32x1xf32, #tpu.memory_space<vmem>>, vector<32x1xf32>
    %c4_i32_115 = arith.constant 4 : i32
    %207 = tpu.dynamic_rotate %204 by %c4_i32_115 dim 1 : vector<8x128xf32>, i32 -> vector<8x128xf32>
    %c3_i32_116 = arith.constant 3 : i32
    %208 = tpu.dynamic_rotate %204 by %c3_i32_116 dim 1 : vector<8x128xf32>, i32 -> vector<8x128xf32>
    %c2_i32_117 = arith.constant 2 : i32
    %209 = tpu.dynamic_rotate %204 by %c2_i32_117 dim 1 : vector<8x128xf32>, i32 -> vector<8x128xf32>
    %c1_i32_118 = arith.constant 1 : i32
    %210 = tpu.dynamic_rotate %204 by %c1_i32_118 dim 1 : vector<8x128xf32>, i32 -> vector<8x128xf32>
    %c127_i32_119 = arith.constant 127 : i32
    %211 = tpu.dynamic_rotate %204 by %c127_i32_119 dim 1 : vector<8x128xf32>, i32 -> vector<8x128xf32>
    %c126_i32_120 = arith.constant 126 : i32
    %212 = tpu.dynamic_rotate %204 by %c126_i32_120 dim 1 : vector<8x128xf32>, i32 -> vector<8x128xf32>
    %c125_i32_121 = arith.constant 125 : i32
    %213 = tpu.dynamic_rotate %204 by %c125_i32_121 dim 1 : vector<8x128xf32>, i32 -> vector<8x128xf32>
    %c124_i32_122 = arith.constant 124 : i32
    %214 = tpu.dynamic_rotate %204 by %c124_i32_122 dim 1 : vector<8x128xf32>, i32 -> vector<8x128xf32>
    %cst_123 = arith.constant -3.000000e+38 : f32
    %215 = vector.shape_cast %2 : vector<1x128xi1> to vector<1x128xi1>
    %216 = vector.broadcast %215 : vector<1x128xi1> to vector<32x128xi1>
    %217 = vector.broadcast %cst_123 : f32 to vector<32x128xf32>
    %218 = arith.select %216, %202, %217 : vector<32x128xi1>, vector<32x128xf32>
    %c1_i32_124 = arith.constant 1 : i32
    %219 = tpu.dynamic_rotate %218 by %c1_i32_124 dim 1 : vector<32x128xf32>, i32 -> vector<32x128xf32>
    %220 = arith.maximumf %219, %218 : vector<32x128xf32>
    %c127_i32_125 = arith.constant 127 : i32
    %221 = tpu.dynamic_rotate %218 by %c127_i32_125 dim 1 : vector<32x128xf32>, i32 -> vector<32x128xf32>
    %222 = arith.maximumf %220, %221 : vector<32x128xf32>
    %cst_126 = arith.constant 0.000000e+00 : f32
    %223 = vector.shape_cast %2 : vector<1x128xi1> to vector<1x128xi1>
    %224 = vector.broadcast %223 : vector<1x128xi1> to vector<32x128xi1>
    %225 = vector.broadcast %cst_126 : f32 to vector<32x128xf32>
    %226 = arith.select %224, %222, %225 : vector<32x128xi1>, vector<32x128xf32>
    %227 = tpu.concatenate %207, %208, %209, %210, %204, %211, %212, %213, %214, %226 in 0 : vector<8x128xf32>, vector<8x128xf32>, vector<8x128xf32>, vector<8x128xf32>, vector<8x128xf32>, vector<8x128xf32>, vector<8x128xf32>, vector<8x128xf32>, vector<8x128xf32>, vector<32x128xf32> -> vector<104x128xf32>
    %cst_127 = arith.constant dense<0.000000e+00> : vector<32x128xf32>
    %228 = tpu.matmul %205, %227, %cst_127 {dimension_numbers = #tpu.dot_dimension_numbers<[1], [0], [0], [1], [0, 0, 1, 1], [], []>} : vector<32x104xf32>, vector<104x128xf32>, vector<32x128xf32> -> vector<32x128xf32>
    %229 = vector.broadcast %206 : vector<32x1xf32> to vector<32x128xf32>
    %230 = arith.addf %228, %229 : vector<32x128xf32>
    %cst_128 = arith.constant 0.000000e+00 : f32
    %231 = vector.broadcast %cst_128 : f32 to vector<32x128xf32>
    %232 = arith.cmpf ogt, %230, %231 : vector<32x128xf32>
    %cst_129 = arith.constant 0.000000e+00 : f32
    %233 = vector.broadcast %cst_129 : f32 to vector<32x128xf32>
    %234 = arith.minimumf %230, %233 : vector<32x128xf32>
    %235 = math.exp %234 : vector<32x128xf32>
    %cst_130 = arith.constant 1.000000e+00 : f32
    %236 = vector.broadcast %cst_130 : f32 to vector<32x128xf32>
    %237 = arith.subf %235, %236 : vector<32x128xf32>
    %cst_131 = arith.constant 1.67326319 : f32
    %238 = vector.broadcast %cst_131 : f32 to vector<32x128xf32>
    %239 = arith.mulf %238, %237 : vector<32x128xf32>
    %240 = arith.select %232, %230, %239 : vector<32x128xi1>, vector<32x128xf32>
    %cst_132 = arith.constant 1.05070102 : f32
    %241 = vector.broadcast %cst_132 : f32 to vector<32x128xf32>
    %242 = arith.mulf %241, %240 : vector<32x128xf32>
    %cst_133 = arith.constant 0.000000e+00 : f32
    %243 = vector.shape_cast %2 : vector<1x128xi1> to vector<1x128xi1>
    %244 = vector.broadcast %243 : vector<1x128xi1> to vector<32x128xi1>
    %245 = vector.broadcast %cst_133 : f32 to vector<32x128xf32>
    %246 = arith.select %244, %242, %245 : vector<32x128xi1>, vector<32x128xf32>
    %c0_134 = arith.constant 0 : index
    %c0_135 = arith.constant 0 : index
    %247 = vector.load %arg19[%c0_134, %c0_135] : memref<8x32xf32, #tpu.memory_space<vmem>>, vector<8x32xf32>
    %cst_136 = arith.constant dense<0.000000e+00> : vector<8x128xf32>
    %248 = tpu.matmul %247, %246, %cst_136 {dimension_numbers = #tpu.dot_dimension_numbers<[1], [0], [0], [1], [0, 0, 1, 1], [], []>} : vector<8x32xf32>, vector<32x128xf32>, vector<8x128xf32> -> vector<8x128xf32>
    %c0_137 = arith.constant 0 : index
    %c0_138 = arith.constant 0 : index
    %249 = vector.load %arg20[%c0_137, %c0_138] : memref<32x104xf32, #tpu.memory_space<vmem>>, vector<32x104xf32>
    %c0_139 = arith.constant 0 : index
    %c0_140 = arith.constant 0 : index
    %250 = vector.load %arg21[%c0_139, %c0_140] : memref<32x1xf32, #tpu.memory_space<vmem>>, vector<32x1xf32>
    %c4_i32_141 = arith.constant 4 : i32
    %251 = tpu.dynamic_rotate %248 by %c4_i32_141 dim 1 : vector<8x128xf32>, i32 -> vector<8x128xf32>
    %c3_i32_142 = arith.constant 3 : i32
    %252 = tpu.dynamic_rotate %248 by %c3_i32_142 dim 1 : vector<8x128xf32>, i32 -> vector<8x128xf32>
    %c2_i32_143 = arith.constant 2 : i32
    %253 = tpu.dynamic_rotate %248 by %c2_i32_143 dim 1 : vector<8x128xf32>, i32 -> vector<8x128xf32>
    %c1_i32_144 = arith.constant 1 : i32
    %254 = tpu.dynamic_rotate %248 by %c1_i32_144 dim 1 : vector<8x128xf32>, i32 -> vector<8x128xf32>
    %c127_i32_145 = arith.constant 127 : i32
    %255 = tpu.dynamic_rotate %248 by %c127_i32_145 dim 1 : vector<8x128xf32>, i32 -> vector<8x128xf32>
    %c126_i32_146 = arith.constant 126 : i32
    %256 = tpu.dynamic_rotate %248 by %c126_i32_146 dim 1 : vector<8x128xf32>, i32 -> vector<8x128xf32>
    %c125_i32_147 = arith.constant 125 : i32
    %257 = tpu.dynamic_rotate %248 by %c125_i32_147 dim 1 : vector<8x128xf32>, i32 -> vector<8x128xf32>
    %c124_i32_148 = arith.constant 124 : i32
    %258 = tpu.dynamic_rotate %248 by %c124_i32_148 dim 1 : vector<8x128xf32>, i32 -> vector<8x128xf32>
    %cst_149 = arith.constant -3.000000e+38 : f32
    %259 = vector.shape_cast %2 : vector<1x128xi1> to vector<1x128xi1>
    %260 = vector.broadcast %259 : vector<1x128xi1> to vector<32x128xi1>
    %261 = vector.broadcast %cst_149 : f32 to vector<32x128xf32>
    %262 = arith.select %260, %246, %261 : vector<32x128xi1>, vector<32x128xf32>
    %c1_i32_150 = arith.constant 1 : i32
    %263 = tpu.dynamic_rotate %262 by %c1_i32_150 dim 1 : vector<32x128xf32>, i32 -> vector<32x128xf32>
    %264 = arith.maximumf %263, %262 : vector<32x128xf32>
    %c127_i32_151 = arith.constant 127 : i32
    %265 = tpu.dynamic_rotate %262 by %c127_i32_151 dim 1 : vector<32x128xf32>, i32 -> vector<32x128xf32>
    %266 = arith.maximumf %264, %265 : vector<32x128xf32>
    %cst_152 = arith.constant 0.000000e+00 : f32
    %267 = vector.shape_cast %2 : vector<1x128xi1> to vector<1x128xi1>
    %268 = vector.broadcast %267 : vector<1x128xi1> to vector<32x128xi1>
    %269 = vector.broadcast %cst_152 : f32 to vector<32x128xf32>
    %270 = arith.select %268, %266, %269 : vector<32x128xi1>, vector<32x128xf32>
    %271 = tpu.concatenate %251, %252, %253, %254, %248, %255, %256, %257, %258, %270 in 0 : vector<8x128xf32>, vector<8x128xf32>, vector<8x128xf32>, vector<8x128xf32>, vector<8x128xf32>, vector<8x128xf32>, vector<8x128xf32>, vector<8x128xf32>, vector<8x128xf32>, vector<32x128xf32> -> vector<104x128xf32>
    %cst_153 = arith.constant dense<0.000000e+00> : vector<32x128xf32>
    %272 = tpu.matmul %249, %271, %cst_153 {dimension_numbers = #tpu.dot_dimension_numbers<[1], [0], [0], [1], [0, 0, 1, 1], [], []>} : vector<32x104xf32>, vector<104x128xf32>, vector<32x128xf32> -> vector<32x128xf32>
    %273 = vector.broadcast %250 : vector<32x1xf32> to vector<32x128xf32>
    %274 = arith.addf %272, %273 : vector<32x128xf32>
    %cst_154 = arith.constant 0.000000e+00 : f32
    %275 = vector.broadcast %cst_154 : f32 to vector<32x128xf32>
    %276 = arith.cmpf ogt, %274, %275 : vector<32x128xf32>
    %cst_155 = arith.constant 0.000000e+00 : f32
    %277 = vector.broadcast %cst_155 : f32 to vector<32x128xf32>
    %278 = arith.minimumf %274, %277 : vector<32x128xf32>
    %279 = math.exp %278 : vector<32x128xf32>
    %cst_156 = arith.constant 1.000000e+00 : f32
    %280 = vector.broadcast %cst_156 : f32 to vector<32x128xf32>
    %281 = arith.subf %279, %280 : vector<32x128xf32>
    %cst_157 = arith.constant 1.67326319 : f32
    %282 = vector.broadcast %cst_157 : f32 to vector<32x128xf32>
    %283 = arith.mulf %282, %281 : vector<32x128xf32>
    %284 = arith.select %276, %274, %283 : vector<32x128xi1>, vector<32x128xf32>
    %cst_158 = arith.constant 1.05070102 : f32
    %285 = vector.broadcast %cst_158 : f32 to vector<32x128xf32>
    %286 = arith.mulf %285, %284 : vector<32x128xf32>
    %cst_159 = arith.constant 0.000000e+00 : f32
    %287 = vector.shape_cast %2 : vector<1x128xi1> to vector<1x128xi1>
    %288 = vector.broadcast %287 : vector<1x128xi1> to vector<32x128xi1>
    %289 = vector.broadcast %cst_159 : f32 to vector<32x128xf32>
    %290 = arith.select %288, %286, %289 : vector<32x128xi1>, vector<32x128xf32>
    %c0_160 = arith.constant 0 : index
    %c0_161 = arith.constant 0 : index
    %291 = vector.load %arg22[%c0_160, %c0_161] : memref<32x32xf32, #tpu.memory_space<vmem>>, vector<32x32xf32>
    %c0_162 = arith.constant 0 : index
    %c0_163 = arith.constant 0 : index
    %292 = vector.load %arg23[%c0_162, %c0_163] : memref<32x1xf32, #tpu.memory_space<vmem>>, vector<32x1xf32>
    %cst_164 = arith.constant dense<0.000000e+00> : vector<32x128xf32>
    %293 = tpu.matmul %291, %158, %cst_164 {dimension_numbers = #tpu.dot_dimension_numbers<[1], [0], [0], [1], [0, 0, 1, 1], [], []>} : vector<32x32xf32>, vector<32x128xf32>, vector<32x128xf32> -> vector<32x128xf32>
    %294 = vector.broadcast %292 : vector<32x1xf32> to vector<32x128xf32>
    %295 = arith.addf %293, %294 : vector<32x128xf32>
    %296 = arith.addf %290, %295 : vector<32x128xf32>
    %cst_165 = arith.constant 0.000000e+00 : f32
    %297 = vector.broadcast %cst_165 : f32 to vector<32x128xf32>
    %298 = arith.cmpf ogt, %296, %297 : vector<32x128xf32>
    %cst_166 = arith.constant 0.000000e+00 : f32
    %299 = vector.broadcast %cst_166 : f32 to vector<32x128xf32>
    %300 = arith.minimumf %296, %299 : vector<32x128xf32>
    %301 = math.exp %300 : vector<32x128xf32>
    %cst_167 = arith.constant 1.000000e+00 : f32
    %302 = vector.broadcast %cst_167 : f32 to vector<32x128xf32>
    %303 = arith.subf %301, %302 : vector<32x128xf32>
    %cst_168 = arith.constant 1.67326319 : f32
    %304 = vector.broadcast %cst_168 : f32 to vector<32x128xf32>
    %305 = arith.mulf %304, %303 : vector<32x128xf32>
    %306 = arith.select %298, %296, %305 : vector<32x128xi1>, vector<32x128xf32>
    %cst_169 = arith.constant 1.05070102 : f32
    %307 = vector.broadcast %cst_169 : f32 to vector<32x128xf32>
    %308 = arith.mulf %307, %306 : vector<32x128xf32>
    %cst_170 = arith.constant 0.000000e+00 : f32
    %309 = vector.shape_cast %2 : vector<1x128xi1> to vector<1x128xi1>
    %310 = vector.broadcast %309 : vector<1x128xi1> to vector<32x128xi1>
    %311 = vector.broadcast %cst_170 : f32 to vector<32x128xf32>
    %312 = arith.select %310, %308, %311 : vector<32x128xi1>, vector<32x128xf32>
    %c0_171 = arith.constant 0 : index
    %c0_172 = arith.constant 0 : index
    %313 = vector.load %arg24[%c0_171, %c0_172] : memref<32x3xf32, #tpu.memory_space<vmem>>, vector<32x3xf32>
    %c0_173 = arith.constant 0 : index
    %c0_174 = arith.constant 0 : index
    %314 = vector.load %arg25[%c0_173, %c0_174] : memref<1x3xf32, #tpu.memory_space<vmem>>, vector<1x3xf32>
    %cst_175 = arith.constant dense<0.000000e+00> : vector<32xf32>
    %315 = vector.multi_reduction <add>, %312, %cst_175 [1] : vector<32x128xf32> to vector<32xf32>
    %316 = vector.shape_cast %315 : vector<32xf32> to vector<32x1xf32>
    %cst_176 = arith.constant 3.125000e-02 : f32
    %317 = vector.broadcast %cst_176 : f32 to vector<32x1xf32>
    %318 = arith.mulf %316, %317 : vector<32x1xf32>
    %319 = vector.broadcast %318 : vector<32x1xf32> to vector<32x3xf32>
    %320 = arith.mulf %319, %313 : vector<32x3xf32>
    %cst_177 = arith.constant dense<0.000000e+00> : vector<3xf32>
    %321 = vector.multi_reduction <add>, %320, %cst_177 [0] : vector<32x3xf32> to vector<3xf32>
    %322 = vector.shape_cast %321 : vector<3xf32> to vector<1x3xf32>
    %323 = arith.addf %322, %314 : vector<1x3xf32>
    %c0_178 = arith.constant 0 : index
    %c0_179 = arith.constant 0 : index
    %c0_180 = arith.constant 0 : index
    %324 = vector.load %arg26[%c0_178, %c0_179, %c0_180] : memref<1x1x3xf32, #tpu.memory_space<vmem>>, vector<1x1x3xf32>
    %325 = vector.shape_cast %324 : vector<1x1x3xf32> to vector<1x3xf32>
    %326 = vector.shape_cast %323 : vector<1x3xf32> to vector<1x1x3xf32>
    tpu.vector_store %arg26[%c0_178, %c0_179, %c0_180], %326 {strides = array<i32>} : memref<1x1x3xf32, #tpu.memory_space<vmem>>, vector<1x1x3xf32>,
    return
  }
  func.func @transform_0(%arg0: i32) -> (i32, i32, i32) {
    %c0_i32 = arith.constant 0 : i32
    %c0_i32_0 = arith.constant 0 : i32
    %c0_i32_1 = arith.constant 0 : i32
    return %arg0, %c0_i32, %c0_i32_0 : i32, i32, i32
  }
  func.func @transform_1(%arg0: i32) -> (i32, i32) {
    %c0_i32 = arith.constant 0 : i32
    %c0_i32_0 = arith.constant 0 : i32
    %c0_i32_1 = arith.constant 0 : i32
    return %c0_i32, %c0_i32_0 : i32, i32
  }
  func.func @transform_2(%arg0: i32) -> (i32, i32) {
    %c0_i32 = arith.constant 0 : i32
    %c0_i32_0 = arith.constant 0 : i32
    %c0_i32_1 = arith.constant 0 : i32
    return %c0_i32, %c0_i32_0 : i32, i32
  }
  func.func @transform_3(%arg0: i32) -> (i32, i32) {
    %c0_i32 = arith.constant 0 : i32
    %c0_i32_0 = arith.constant 0 : i32
    %c0_i32_1 = arith.constant 0 : i32
    return %c0_i32, %c0_i32_0 : i32, i32
  }
  func.func @transform_4(%arg0: i32) -> (i32, i32) {
    %c0_i32 = arith.constant 0 : i32
    %c0_i32_0 = arith.constant 0 : i32
    %c0_i32_1 = arith.constant 0 : i32
    return %c0_i32, %c0_i32_0 : i32, i32
  }
  func.func @transform_5(%arg0: i32) -> (i32, i32) {
    %c0_i32 = arith.constant 0 : i32
    %c0_i32_0 = arith.constant 0 : i32
    %c0_i32_1 = arith.constant 0 : i32
    return %c0_i32, %c0_i32_0 : i32, i32
  }
  func.func @transform_6(%arg0: i32) -> (i32, i32) {
    %c0_i32 = arith.constant 0 : i32
    %c0_i32_0 = arith.constant 0 : i32
    %c0_i32_1 = arith.constant 0 : i32
    return %c0_i32, %c0_i32_0 : i32, i32
  }
  func.func @transform_7(%arg0: i32) -> (i32, i32) {
    %c0_i32 = arith.constant 0 : i32
    %c0_i32_0 = arith.constant 0 : i32
    %c0_i32_1 = arith.constant 0 : i32
    return %c0_i32, %c0_i32_0 : i32, i32
  }
  func.func @transform_8(%arg0: i32) -> (i32, i32) {
    %c0_i32 = arith.constant 0 : i32
    %c0_i32_0 = arith.constant 0 : i32
    %c0_i32_1 = arith.constant 0 : i32
    return %c0_i32, %c0_i32_0 : i32, i32
  }
  func.func @transform_9(%arg0: i32) -> (i32, i32) {
    %c0_i32 = arith.constant 0 : i32
    %c0_i32_0 = arith.constant 0 : i32
    %c0_i32_1 = arith.constant 0 : i32
    return %c0_i32, %c0_i32_0 : i32, i32
  }
  func.func @transform_10(%arg0: i32) -> (i32, i32) {
    %c0_i32 = arith.constant 0 : i32
    %c0_i32_0 = arith.constant 0 : i32
    %c0_i32_1 = arith.constant 0 : i32
    return %c0_i32, %c0_i32_0 : i32, i32
  }
  func.func @transform_11(%arg0: i32) -> (i32, i32) {
    %c0_i32 = arith.constant 0 : i32
    %c0_i32_0 = arith.constant 0 : i32
    %c0_i32_1 = arith.constant 0 : i32
    return %c0_i32, %c0_i32_0 : i32, i32
  }
  func.func @transform_12(%arg0: i32) -> (i32, i32) {
    %c0_i32 = arith.constant 0 : i32
    %c0_i32_0 = arith.constant 0 : i32
    %c0_i32_1 = arith.constant 0 : i32
    return %c0_i32, %c0_i32_0 : i32, i32
  }
  func.func @transform_13(%arg0: i32) -> (i32, i32) {
    %c0_i32 = arith.constant 0 : i32
    %c0_i32_0 = arith.constant 0 : i32
    %c0_i32_1 = arith.constant 0 : i32
    return %c0_i32, %c0_i32_0 : i32, i32
  }
  func.func @transform_14(%arg0: i32) -> (i32, i32) {
    %c0_i32 = arith.constant 0 : i32
    %c0_i32_0 = arith.constant 0 : i32
    %c0_i32_1 = arith.constant 0 : i32
    return %c0_i32, %c0_i32_0 : i32, i32
  }
  func.func @transform_15(%arg0: i32) -> (i32, i32) {
    %c0_i32 = arith.constant 0 : i32
    %c0_i32_0 = arith.constant 0 : i32
    %c0_i32_1 = arith.constant 0 : i32
    return %c0_i32, %c0_i32_0 : i32, i32
  }
  func.func @transform_16(%arg0: i32) -> (i32, i32) {
    %c0_i32 = arith.constant 0 : i32
    %c0_i32_0 = arith.constant 0 : i32
    %c0_i32_1 = arith.constant 0 : i32
    return %c0_i32, %c0_i32_0 : i32, i32
  }
  func.func @transform_17(%arg0: i32) -> (i32, i32) {
    %c0_i32 = arith.constant 0 : i32
    %c0_i32_0 = arith.constant 0 : i32
    %c0_i32_1 = arith.constant 0 : i32
    return %c0_i32, %c0_i32_0 : i32, i32
  }
  func.func @transform_18(%arg0: i32) -> (i32, i32) {
    %c0_i32 = arith.constant 0 : i32
    %c0_i32_0 = arith.constant 0 : i32
    %c0_i32_1 = arith.constant 0 : i32
    return %c0_i32, %c0_i32_0 : i32, i32
  }
  func.func @transform_19(%arg0: i32) -> (i32, i32) {
    %c0_i32 = arith.constant 0 : i32
    %c0_i32_0 = arith.constant 0 : i32
    %c0_i32_1 = arith.constant 0 : i32
    return %c0_i32, %c0_i32_0 : i32, i32
  }
  func.func @transform_20(%arg0: i32) -> (i32, i32) {
    %c0_i32 = arith.constant 0 : i32
    %c0_i32_0 = arith.constant 0 : i32
    %c0_i32_1 = arith.constant 0 : i32
    return %c0_i32, %c0_i32_0 : i32, i32
  }
  func.func @transform_21(%arg0: i32) -> (i32, i32) {
    %c0_i32 = arith.constant 0 : i32
    %c0_i32_0 = arith.constant 0 : i32
    %c0_i32_1 = arith.constant 0 : i32
    return %c0_i32, %c0_i32_0 : i32, i32
  }
  func.func @transform_22(%arg0: i32) -> (i32, i32) {
    %c0_i32 = arith.constant 0 : i32
    %c0_i32_0 = arith.constant 0 : i32
    %c0_i32_1 = arith.constant 0 : i32
    return %c0_i32, %c0_i32_0 : i32, i32
  }
  func.func @transform_23(%arg0: i32) -> (i32, i32) {
    %c0_i32 = arith.constant 0 : i32
    %c0_i32_0 = arith.constant 0 : i32
    %c0_i32_1 = arith.constant 0 : i32
    return %c0_i32, %c0_i32_0 : i32, i32
  }
  func.func @transform_24(%arg0: i32) -> (i32, i32) {
    %c0_i32 = arith.constant 0 : i32
    %c0_i32_0 = arith.constant 0 : i32
    %c0_i32_1 = arith.constant 0 : i32
    return %c0_i32, %c0_i32_0 : i32, i32
  }
  func.func @transform_25(%arg0: i32) -> (i32, i32, i32) {
    %c0_i32 = arith.constant 0 : i32
    %c0_i32_0 = arith.constant 0 : i32
    %c0_i32_1 = arith.constant 0 : i32
    return %arg0, %c0_i32, %c0_i32_0 : i32, i32, i32
  }
}

</mosaic_0001>

<llo_original>
// kernel: inception_time_forward.1
$region0: #{inception_time_forward.1}
  #allocation0 [shape = 'u32[]', space=smem, size = 0x4, offset = 0x4, fixed_abs, tag = 'smem constant byte address 0x4 - core index']
  #allocation1 [shape = 'u32[72,128]{1,0:T(1,128)}', space=vmem, size = 0x9000, scoped, tag = 'internal scratch']
  %s0 = inlined_call_operand.vmem [shape: f32[2,4,128], index: 0, kind: input, shape index: {}]
  %s1 = inlined_call_operand.vmem [shape: f32[8,4], index: 1, kind: input, shape index: {}]
  %s2 = inlined_call_operand.vmem [shape: f32[32,76], index: 2, kind: input, shape index: {}]
  %s3 = inlined_call_operand.vmem [shape: f32[32,1], index: 3, kind: input, shape index: {}]
  %s4 = inlined_call_operand.vmem [shape: f32[8,32], index: 4, kind: input, shape index: {}]
  %s5 = inlined_call_operand.vmem [shape: f32[32,104], index: 5, kind: input, shape index: {}]
  %s6 = inlined_call_operand.vmem [shape: f32[32,1], index: 6, kind: input, shape index: {}]
  %s7 = inlined_call_operand.vmem [shape: f32[8,32], index: 7, kind: input, shape index: {}]
  %s8 = inlined_call_operand.vmem [shape: f32[32,104], index: 8, kind: input, shape index: {}]
  %s9 = inlined_call_operand.vmem [shape: f32[32,1], index: 9, kind: input, shape index: {}]
  %s10 = inlined_call_operand.vmem [shape: f32[32,4], index: 10, kind: input, shape index: {}]
  %s11 = inlined_call_operand.vmem [shape: f32[32,1], index: 11, kind: input, shape index: {}]
  %s12 = inlined_call_operand.vmem [shape: f32[8,32], index: 12, kind: input, shape index: {}]
  %s13 = inlined_call_operand.vmem [shape: f32[32,104], index: 13, kind: input, shape index: {}]
  %s14 = inlined_call_operand.vmem [shape: f32[32,1], index: 14, kind: input, shape index: {}]
  %s15 = inlined_call_operand.vmem [shape: f32[8,32], index: 15, kind: input, shape index: {}]
  %s16 = inlined_call_operand.vmem [shape: f32[32,104], index: 16, kind: input, shape index: {}]
  %s17 = inlined_call_operand.vmem [shape: f32[32,1], index: 17, kind: input, shape index: {}]
  %s18 = inlined_call_operand.vmem [shape: f32[8,32], index: 18, kind: input, shape index: {}]
  %s19 = inlined_call_operand.vmem [shape: f32[32,104], index: 19, kind: input, shape index: {}]
  %s20 = inlined_call_operand.vmem [shape: f32[32,1], index: 20, kind: input, shape index: {}]
  %s21 = inlined_call_operand.vmem [shape: f32[32,32], index: 21, kind: input, shape index: {}]
  %s22 = inlined_call_operand.vmem [shape: f32[32,1], index: 22, kind: input, shape index: {}]
  %s23 = inlined_call_operand.vmem [shape: f32[32,3], index: 23, kind: input, shape index: {}]
  %s24 = inlined_call_operand.vmem [shape: f32[1,3], index: 24, kind: input, shape index: {}]
  %s25 = inlined_call_operand.hbm [shape: f32[2,1,3], index: 25, kind: output, shape index: {}]
  %s26 = sld [smem:[#allocation0]]
  $region133: #{inception_time_forward.1} parent=0
    _
  %s28 = ssub.s32 1, %s26
  %s29 = scalar_select 0, %s28, %s26
  $region1: #{inception_time_forward.1} parent=0
    #allocation2 [shape = 'u8[1024]{0}', space=vmem, size = 0x400, scoped, tag = 'output window, operand 0']
    #allocation3 [shape = 's32[2]{0}', space=sflag, size = 0x8, scoped, tag = 'scoped memory for inception_time_forward.1']
    %30 = vsyncpa [#allocation3], 0
    %s31 = scalar_lea.sflag [#allocation3], 1
    %32 = vsyncpa %s31, 0
    loop: start=0, step=1, limit=4
    $region2: #{inception_time_forward.1} parent=1 // loop_pre_header
      _
    $region3: #{inception_time_forward.1} parent=1 // loop_header
      %s34 = sphi 0, %s38
      %p35 = scmp.ge.s32.totalorder %s34, 4
      %s44 = sphi 0, %s46
      %s47 = sphi 0, %s44
      %s48 = sphi 0, %s47
      %s64 = sphi 0, %s48
      %s68 = sphi 0, %s68
      %s70 = sphi 0, %s68
      %s71 = sphi 0, %s70
      %s85 = sphi 0, %s71
      %s89 = sphi 0, %s89
      %s91 = sphi 0, %s89
      %s92 = sphi 0, %s91
      %s106 = sphi 0, %s92
      %s110 = sphi 0, %s110
      %s112 = sphi 0, %s110
      %s113 = sphi 0, %s112
      %s127 = sphi 0, %s113
      %s131 = sphi 0, %s131
      %s133 = sphi 0, %s131
      %s134 = sphi 0, %s133
      %s148 = sphi 0, %s134
      %s152 = sphi 0, %s152
      %s154 = sphi 0, %s152
      %s155 = sphi 0, %s154
      %s169 = sphi 0, %s155
      %s173 = sphi 0, %s173
      %s175 = sphi 0, %s173
      %s176 = sphi 0, %s175
      %s190 = sphi 0, %s176
      %s194 = sphi 0, %s194
      %s196 = sphi 0, %s194
      %s197 = sphi 0, %s196
      %s211 = sphi 0, %s197
      %s215 = sphi 0, %s215
      %s217 = sphi 0, %s215
      %s218 = sphi 0, %s217
      %s232 = sphi 0, %s218
      %s236 = sphi 0, %s236
      %s238 = sphi 0, %s236
      %s239 = sphi 0, %s238
      %s253 = sphi 0, %s239
      %s257 = sphi 0, %s257
      %s259 = sphi 0, %s257
      %s260 = sphi 0, %s259
      %s274 = sphi 0, %s260
      %s278 = sphi 0, %s278
      %s280 = sphi 0, %s278
      %s281 = sphi 0, %s280
      %s295 = sphi 0, %s281
      %s299 = sphi 0, %s299
      %s301 = sphi 0, %s299
      %s302 = sphi 0, %s301
      %s316 = sphi 0, %s302
      %s320 = sphi 0, %s320
      %s322 = sphi 0, %s320
      %s323 = sphi 0, %s322
      %s337 = sphi 0, %s323
      %s341 = sphi 0, %s341
      %s343 = sphi 0, %s341
      %s344 = sphi 0, %s343
      %s358 = sphi 0, %s344
      %s362 = sphi 0, %s362
      %s364 = sphi 0, %s362
      %s365 = sphi 0, %s364
      %s379 = sphi 0, %s365
      %s383 = sphi 0, %s383
      %s385 = sphi 0, %s383
      %s386 = sphi 0, %s385
      %s400 = sphi 0, %s386
      %s404 = sphi 0, %s404
      %s406 = sphi 0, %s404
      %s407 = sphi 0, %s406
      %s421 = sphi 0, %s407
      %s425 = sphi 0, %s425
      %s427 = sphi 0, %s425
      %s428 = sphi 0, %s427
      %s442 = sphi 0, %s428
      %s446 = sphi 0, %s446
      %s448 = sphi 0, %s446
      %s449 = sphi 0, %s448
      %s463 = sphi 0, %s449
      %s467 = sphi 0, %s467
      %s469 = sphi 0, %s467
      %s470 = sphi 0, %s469
      %s484 = sphi 0, %s470
      %s488 = sphi 0, %s488
      %s490 = sphi 0, %s488
      %s491 = sphi 0, %s490
      %s505 = sphi 0, %s491
      %s509 = sphi 0, %s509
      %s511 = sphi 0, %s509
      %s512 = sphi 0, %s511
      %s526 = sphi 0, %s512
      %s530 = sphi 0, %s530
      %s532 = sphi 0, %s530
      %s533 = sphi 0, %s532
      %s547 = sphi 0, %s533
      %s551 = sphi 0, %s551
      %s553 = sphi 0, %s551
      %s554 = sphi 0, %s553
      %s568 = sphi 0, %s554
      %s574 = sphi 0, %s576
      %s577 = sphi 0, %s574
      %s578 = sphi 0, %s577
      %s594 = sphi 0, %s578
    $region4: #{inception_time_forward.1} parent=1 // loop_header_branch
      %37 = sbr.rel (%p35) target = $region8
    $region5: #{inception_time_forward.1} parent=1 // loop_body
      %s39 = ssub.s32 %s34, 1
      %s40 = ssub.s32 %s34, 2
      %s41 = sadd.s32 %s34, 1
      %s42 = ssub.s32 %s34, %s41
      %p43 = scmp.eq.s32.totalorder %s42, 0
      %s45 = sadd.s32 %s44, 1
      %s46 = scalar_select %p43, %s44, %s45
      %p49 = pneg %p43
      %p50 = scmp.eq.s32.totalorder %s34, 1
      %p51 = por %p49, %p50
      %p52 = scmp.ne.s32.totalorder %s44, %s47
      %p53 = scmp.eq.s32.totalorder %s34, 0
      %p54 = por %p52, %p53
      %p55 = scmp.ne.s32.totalorder %s44, %s47
      %p56 = scmp.eq.s32.totalorder %s39, 1
      %p57 = por %p55, %p56
      %p58 = scmp.ne.s32.totalorder %s47, %s48
      %p59 = scmp.eq.s32.totalorder %s39, 0
      %p60 = por %p58, %p59
      %p61 = scmp.ne.s32.totalorder %s47, %s48
      %p62 = scmp.eq.s32.totalorder %s40, 1
      %p63 = por %p61, %p62
      %p65 = scmp.ne.s32.totalorder %s48, %s64
      %p66 = scmp.eq.s32.totalorder %s40, 0
      %p67 = por %p65, %p66
      %s69 = sadd.s32 %s68, 1
      %p72 = scmp.eq.s32.totalorder %s34, 1
      %p73 = scmp.ne.s32.totalorder %s68, %s70
      %p74 = scmp.eq.s32.totalorder %s34, 0
      %p75 = por %p73, %p74
      %p76 = scmp.ne.s32.totalorder %s68, %s70
      %p77 = scmp.eq.s32.totalorder %s39, 1
      %p78 = por %p76, %p77
      %p79 = scmp.ne.s32.totalorder %s70, %s71
      %p80 = scmp.eq.s32.totalorder %s39, 0
      %p81 = por %p79, %p80
      %p82 = scmp.ne.s32.totalorder %s70, %s71
      %p83 = scmp.eq.s32.totalorder %s40, 1
      %p84 = por %p82, %p83
      %p86 = scmp.ne.s32.totalorder %s71, %s85
      %p87 = scmp.eq.s32.totalorder %s40, 0
      %p88 = por %p86, %p87
      %s90 = sadd.s32 %s89, 1
      %p93 = scmp.eq.s32.totalorder %s34, 1
      %p94 = scmp.ne.s32.totalorder %s89, %s91
      %p95 = scmp.eq.s32.totalorder %s34, 0
      %p96 = por %p94, %p95
      %p97 = scmp.ne.s32.totalorder %s89, %s91
      %p98 = scmp.eq.s32.totalorder %s39, 1
      %p99 = por %p97, %p98
      %p100 = scmp.ne.s32.totalorder %s91, %s92
      %p101 = scmp.eq.s32.totalorder %s39, 0
      %p102 = por %p100, %p101
      %p103 = scmp.ne.s32.totalorder %s91, %s92
      %p104 = scmp.eq.s32.totalorder %s40, 1
      %p105 = por %p103, %p104
      %p107 = scmp.ne.s32.totalorder %s92, %s106
      %p108 = scmp.eq.s32.totalorder %s40, 0
      %p109 = por %p107, %p108
      %s111 = sadd.s32 %s110, 1
      %p114 = scmp.eq.s32.totalorder %s34, 1
      %p115 = scmp.ne.s32.totalorder %s110, %s112
      %p116 = scmp.eq.s32.totalorder %s34, 0
      %p117 = por %p115, %p116
      %p118 = scmp.ne.s32.totalorder %s110, %s112
      %p119 = scmp.eq.s32.totalorder %s39, 1
      %p120 = por %p118, %p119
      %p121 = scmp.ne.s32.totalorder %s112, %s113
      %p122 = scmp.eq.s32.totalorder %s39, 0
      %p123 = por %p121, %p122
      %p124 = scmp.ne.s32.totalorder %s112, %s113
      %p125 = scmp.eq.s32.totalorder %s40, 1
      %p126 = por %p124, %p125
      %p128 = scmp.ne.s32.totalorder %s113, %s127
      %p129 = scmp.eq.s32.totalorder %s40, 0
      %p130 = por %p128, %p129
      %s132 = sadd.s32 %s131, 1
      %p135 = scmp.eq.s32.totalorder %s34, 1
      %p136 = scmp.ne.s32.totalorder %s131, %s133
      %p137 = scmp.eq.s32.totalorder %s34, 0
      %p138 = por %p136, %p137
      %p139 = scmp.ne.s32.totalorder %s131, %s133
      %p140 = scmp.eq.s32.totalorder %s39, 1
      %p141 = por %p139, %p140
      %p142 = scmp.ne.s32.totalorder %s133, %s134
      %p143 = scmp.eq.s32.totalorder %s39, 0
      %p144 = por %p142, %p143
      %p145 = scmp.ne.s32.totalorder %s133, %s134
      %p146 = scmp.eq.s32.totalorder %s40, 1
      %p147 = por %p145, %p146
      %p149 = scmp.ne.s32.totalorder %s134, %s148
      %p150 = scmp.eq.s32.totalorder %s40, 0
      %p151 = por %p149, %p150
      %s153 = sadd.s32 %s152, 1
      %p156 = scmp.eq.s32.totalorder %s34, 1
      %p157 = scmp.ne.s32.totalorder %s152, %s154
      %p158 = scmp.eq.s32.totalorder %s34, 0
      %p159 = por %p157, %p158
      %p160 = scmp.ne.s32.totalorder %s152, %s154
      %p161 = scmp.eq.s32.totalorder %s39, 1
      %p162 = por %p160, %p161
      %p163 = scmp.ne.s32.totalorder %s154, %s155
      %p164 = scmp.eq.s32.totalorder %s39, 0
      %p165 = por %p163, %p164
      %p166 = scmp.ne.s32.totalorder %s154, %s155
      %p167 = scmp.eq.s32.totalorder %s40, 1
      %p168 = por %p166, %p167
      %p170 = scmp.ne.s32.totalorder %s155, %s169
      %p171 = scmp.eq.s32.totalorder %s40, 0
      %p172 = por %p170, %p171
      %s174 = sadd.s32 %s173, 1
      %p177 = scmp.eq.s32.totalorder %s34, 1
      %p178 = scmp.ne.s32.totalorder %s173, %s175
      %p179 = scmp.eq.s32.totalorder %s34, 0
      %p180 = por %p178, %p179
      %p181 = scmp.ne.s32.totalorder %s173, %s175
      %p182 = scmp.eq.s32.totalorder %s39, 1
      %p183 = por %p181, %p182
      %p184 = scmp.ne.s32.totalorder %s175, %s176
      %p185 = scmp.eq.s32.totalorder %s39, 0
      %p186 = por %p184, %p185
      %p187 = scmp.ne.s32.totalorder %s175, %s176
      %p188 = scmp.eq.s32.totalorder %s40, 1
      %p189 = por %p187, %p188
      %p191 = scmp.ne.s32.totalorder %s176, %s190
      %p192 = scmp.eq.s32.totalorder %s40, 0
      %p193 = por %p191, %p192
      %s195 = sadd.s32 %s194, 1
      %p198 = scmp.eq.s32.totalorder %s34, 1
      %p199 = scmp.ne.s32.totalorder %s194, %s196
      %p200 = scmp.eq.s32.totalorder %s34, 0
      %p201 = por %p199, %p200
      %p202 = scmp.ne.s32.totalorder %s194, %s196
      %p203 = scmp.eq.s32.totalorder %s39, 1
      %p204 = por %p202, %p203
      %p205 = scmp.ne.s32.totalorder %s196, %s197
      %p206 = scmp.eq.s32.totalorder %s39, 0
      %p207 = por %p205, %p206
      %p208 = scmp.ne.s32.totalorder %s196, %s197
      %p209 = scmp.eq.s32.totalorder %s40, 1
      %p210 = por %p208, %p209
      %p212 = scmp.ne.s32.totalorder %s197, %s211
      %p213 = scmp.eq.s32.totalorder %s40, 0
      %p214 = por %p212, %p213
      %s216 = sadd.s32 %s215, 1
      %p219 = scmp.eq.s32.totalorder %s34, 1
      %p220 = scmp.ne.s32.totalorder %s215, %s217
      %p221 = scmp.eq.s32.totalorder %s34, 0
      %p222 = por %p220, %p221
      %p223 = scmp.ne.s32.totalorder %s215, %s217
      %p224 = scmp.eq.s32.totalorder %s39, 1
      %p225 = por %p223, %p224
      %p226 = scmp.ne.s32.totalorder %s217, %s218
      %p227 = scmp.eq.s32.totalorder %s39, 0
      %p228 = por %p226, %p227
      %p229 = scmp.ne.s32.totalorder %s217, %s218
      %p230 = scmp.eq.s32.totalorder %s40, 1
      %p231 = por %p229, %p230
      %p233 = scmp.ne.s32.totalorder %s218, %s232
      %p234 = scmp.eq.s32.totalorder %s40, 0
      %p235 = por %p233, %p234
      %s237 = sadd.s32 %s236, 1
      %p240 = scmp.eq.s32.totalorder %s34, 1
      %p241 = scmp.ne.s32.totalorder %s236, %s238
      %p242 = scmp.eq.s32.totalorder %s34, 0
      %p243 = por %p241, %p242
      %p244 = scmp.ne.s32.totalorder %s236, %s238
      %p245 = scmp.eq.s32.totalorder %s39, 1
      %p246 = por %p244, %p245
      %p247 = scmp.ne.s32.totalorder %s238, %s239
      %p248 = scmp.eq.s32.totalorder %s39, 0
      %p249 = por %p247, %p248
      %p250 = scmp.ne.s32.totalorder %s238, %s239
      %p251 = scmp.eq.s32.totalorder %s40, 1
      %p252 = por %p250, %p251
      %p254 = scmp.ne.s32.totalorder %s239, %s253
      %p255 = scmp.eq.s32.totalorder %s40, 0
      %p256 = por %p254, %p255
      %s258 = sadd.s32 %s257, 1
      %p261 = scmp.eq.s32.totalorder %s34, 1
      %p262 = scmp.ne.s32.totalorder %s257, %s259
      %p263 = scmp.eq.s32.totalorder %s34, 0
      %p264 = por %p262, %p263
      %p265 = scmp.ne.s32.totalorder %s257, %s259
      %p266 = scmp.eq.s32.totalorder %s39, 1
      %p267 = por %p265, %p266
      %p268 = scmp.ne.s32.totalorder %s259, %s260
      %p269 = scmp.eq.s32.totalorder %s39, 0
      %p270 = por %p268, %p269
      %p271 = scmp.ne.s32.totalorder %s259, %s260
      %p272 = scmp.eq.s32.totalorder %s40, 1
      %p273 = por %p271, %p272
      %p275 = scmp.ne.s32.totalorder %s260, %s274
      %p276 = scmp.eq.s32.totalorder %s40, 0
      %p277 = por %p275, %p276
      %s279 = sadd.s32 %s278, 1
      %p282 = scmp.eq.s32.totalorder %s34, 1
      %p283 = scmp.ne.s32.totalorder %s278, %s280
      %p284 = scmp.eq.s32.totalorder %s34, 0
      %p285 = por %p283, %p284
      %p286 = scmp.ne.s32.totalorder %s278, %s280
      %p287 = scmp.eq.s32.totalorder %s39, 1
      %p288 = por %p286, %p287
      %p289 = scmp.ne.s32.totalorder %s280, %s281
      %p290 = scmp.eq.s32.totalorder %s39, 0
      %p291 = por %p289, %p290
      %p292 = scmp.ne.s32.totalorder %s280, %s281
      %p293 = scmp.eq.s32.totalorder %s40, 1
      %p294 = por %p292, %p293
      %p296 = scmp.ne.s32.totalorder %s281, %s295
      %p297 = scmp.eq.s32.totalorder %s40, 0
      %p298 = por %p296, %p297
      %s300 = sadd.s32 %s299, 1
      %p303 = scmp.eq.s32.totalorder %s34, 1
      %p304 = scmp.ne.s32.totalorder %s299, %s301
      %p305 = scmp.eq.s32.totalorder %s34, 0
      %p306 = por %p304, %p305
      %p307 = scmp.ne.s32.totalorder %s299, %s301
      %p308 = scmp.eq.s32.totalorder %s39, 1
      %p309 = por %p307, %p308
      %p310 = scmp.ne.s32.totalorder %s301, %s302
      %p311 = scmp.eq.s32.totalorder %s39, 0
      %p312 = por %p310, %p311
      %p313 = scmp.ne.s32.totalorder %s301, %s302
      %p314 = scmp.eq.s32.totalorder %s40, 1
      %p315 = por %p313, %p314
      %p317 = scmp.ne.s32.totalorder %s302, %s316
      %p318 = scmp.eq.s32.totalorder %s40, 0
      %p319 = por %p317, %p318
      %s321 = sadd.s32 %s320, 1
      %p324 = scmp.eq.s32.totalorder %s34, 1
      %p325 = scmp.ne.s32.totalorder %s320, %s322
      %p326 = scmp.eq.s32.totalorder %s34, 0
      %p327 = por %p325, %p326
      %p328 = scmp.ne.s32.totalorder %s320, %s322
      %p329 = scmp.eq.s32.totalorder %s39, 1
      %p330 = por %p328, %p329
      %p331 = scmp.ne.s32.totalorder %s322, %s323
      %p332 = scmp.eq.s32.totalorder %s39, 0
      %p333 = por %p331, %p332
      %p334 = scmp.ne.s32.totalorder %s322, %s323
      %p335 = scmp.eq.s32.totalorder %s40, 1
      %p336 = por %p334, %p335
      %p338 = scmp.ne.s32.totalorder %s323, %s337
      %p339 = scmp.eq.s32.totalorder %s40, 0
      %p340 = por %p338, %p339
      %s342 = sadd.s32 %s341, 1
      %p345 = scmp.eq.s32.totalorder %s34, 1
      %p346 = scmp.ne.s32.totalorder %s341, %s343
      %p347 = scmp.eq.s32.totalorder %s34, 0
      %p348 = por %p346, %p347
      %p349 = scmp.ne.s32.totalorder %s341, %s343
      %p350 = scmp.eq.s32.totalorder %s39, 1
      %p351 = por %p349, %p350
      %p352 = scmp.ne.s32.totalorder %s343, %s344
      %p353 = scmp.eq.s32.totalorder %s39, 0
      %p354 = por %p352, %p353
      %p355 = scmp.ne.s32.totalorder %s343, %s344
      %p356 = scmp.eq.s32.totalorder %s40, 1
      %p357 = por %p355, %p356
      %p359 = scmp.ne.s32.totalorder %s344, %s358
      %p360 = scmp.eq.s32.totalorder %s40, 0
      %p361 = por %p359, %p360
      %s363 = sadd.s32 %s362, 1
      %p366 = scmp.eq.s32.totalorder %s34, 1
      %p367 = scmp.ne.s32.totalorder %s362, %s364
      %p368 = scmp.eq.s32.totalorder %s34, 0
      %p369 = por %p367, %p368
      %p370 = scmp.ne.s32.totalorder %s362, %s364
      %p371 = scmp.eq.s32.totalorder %s39, 1
      %p372 = por %p370, %p371
      %p373 = scmp.ne.s32.totalorder %s364, %s365
      %p374 = scmp.eq.s32.totalorder %s39, 0
      %p375 = por %p373, %p374
      %p376 = scmp.ne.s32.totalorder %s364, %s365
      %p377 = scmp.eq.s32.totalorder %s40, 1
      %p378 = por %p376, %p377
      %p380 = scmp.ne.s32.totalorder %s365, %s379
      %p381 = scmp.eq.s32.totalorder %s40, 0
      %p382 = por %p380, %p381
      %s384 = sadd.s32 %s383, 1
      %p387 = scmp.eq.s32.totalorder %s34, 1
      %p388 = scmp.ne.s32.totalorder %s383, %s385
      %p389 = scmp.eq.s32.totalorder %s34, 0
      %p390 = por %p388, %p389
      %p391 = scmp.ne.s32.totalorder %s383, %s385
      %p392 = scmp.eq.s32.totalorder %s39, 1
      %p393 = por %p391, %p392
      %p394 = scmp.ne.s32.totalorder %s385, %s386
      %p395 = scmp.eq.s32.totalorder %s39, 0
      %p396 = por %p394, %p395
      %p397 = scmp.ne.s32.totalorder %s385, %s386
      %p398 = scmp.eq.s32.totalorder %s40, 1
      %p399 = por %p397, %p398
      %p401 = scmp.ne.s32.totalorder %s386, %s400
      %p402 = scmp.eq.s32.totalorder %s40, 0
      %p403 = por %p401, %p402
      %s405 = sadd.s32 %s404, 1
      %p408 = scmp.eq.s32.totalorder %s34, 1
      %p409 = scmp.ne.s32.totalorder %s404, %s406
      %p410 = scmp.eq.s32.totalorder %s34, 0
      %p411 = por %p409, %p410
      %p412 = scmp.ne.s32.totalorder %s404, %s406
      %p413 = scmp.eq.s32.totalorder %s39, 1
      %p414 = por %p412, %p413
      %p415 = scmp.ne.s32.totalorder %s406, %s407
      %p416 = scmp.eq.s32.totalorder %s39, 0
      %p417 = por %p415, %p416
      %p418 = scmp.ne.s32.totalorder %s406, %s407
      %p419 = scmp.eq.s32.totalorder %s40, 1
      %p420 = por %p418, %p419
      %p422 = scmp.ne.s32.totalorder %s407, %s421
      %p423 = scmp.eq.s32.totalorder %s40, 0
      %p424 = por %p422, %p423
      %s426 = sadd.s32 %s425, 1
      %p429 = scmp.eq.s32.totalorder %s34, 1
      %p430 = scmp.ne.s32.totalorder %s425, %s427
      %p431 = scmp.eq.s32.totalorder %s34, 0
      %p432 = por %p430, %p431
      %p433 = scmp.ne.s32.totalorder %s425, %s427
      %p434 = scmp.eq.s32.totalorder %s39, 1
      %p435 = por %p433, %p434
      %p436 = scmp.ne.s32.totalorder %s427, %s428
      %p437 = scmp.eq.s32.totalorder %s39, 0
      %p438 = por %p436, %p437
      %p439 = scmp.ne.s32.totalorder %s427, %s428
      %p440 = scmp.eq.s32.totalorder %s40, 1
      %p441 = por %p439, %p440
      %p443 = scmp.ne.s32.totalorder %s428, %s442
      %p444 = scmp.eq.s32.totalorder %s40, 0
      %p445 = por %p443, %p444
      %s447 = sadd.s32 %s446, 1
      %p450 = scmp.eq.s32.totalorder %s34, 1
      %p451 = scmp.ne.s32.totalorder %s446, %s448
      %p452 = scmp.eq.s32.totalorder %s34, 0
      %p453 = por %p451, %p452
      %p454 = scmp.ne.s32.totalorder %s446, %s448
      %p455 = scmp.eq.s32.totalorder %s39, 1
      %p456 = por %p454, %p455
      %p457 = scmp.ne.s32.totalorder %s448, %s449
      %p458 = scmp.eq.s32.totalorder %s39, 0
      %p459 = por %p457, %p458
      %p460 = scmp.ne.s32.totalorder %s448, %s449
      %p461 = scmp.eq.s32.totalorder %s40, 1
      %p462 = por %p460, %p461
      %p464 = scmp.ne.s32.totalorder %s449, %s463
      %p465 = scmp.eq.s32.totalorder %s40, 0
      %p466 = por %p464, %p465
      %s468 = sadd.s32 %s467, 1
      %p471 = scmp.eq.s32.totalorder %s34, 1
      %p472 = scmp.ne.s32.totalorder %s467, %s469
      %p473 = scmp.eq.s32.totalorder %s34, 0
      %p474 = por %p472, %p473
      %p475 = scmp.ne.s32.totalorder %s467, %s469
      %p476 = scmp.eq.s32.totalorder %s39, 1
      %p477 = por %p475, %p476
      %p478 = scmp.ne.s32.totalorder %s469, %s470
      %p479 = scmp.eq.s32.totalorder %s39, 0
      %p480 = por %p478, %p479
      %p481 = scmp.ne.s32.totalorder %s469, %s470
      %p482 = scmp.eq.s32.totalorder %s40, 1
      %p483 = por %p481, %p482
      %p485 = scmp.ne.s32.totalorder %s470, %s484
      %p486 = scmp.eq.s32.totalorder %s40, 0
      %p487 = por %p485, %p486
      %s489 = sadd.s32 %s488, 1
      %p492 = scmp.eq.s32.totalorder %s34, 1
      %p493 = scmp.ne.s32.totalorder %s488, %s490
      %p494 = scmp.eq.s32.totalorder %s34, 0
      %p495 = por %p493, %p494
      %p496 = scmp.ne.s32.totalorder %s488, %s490
      %p497 = scmp.eq.s32.totalorder %s39, 1
      %p498 = por %p496, %p497
      %p499 = scmp.ne.s32.totalorder %s490, %s491
      %p500 = scmp.eq.s32.totalorder %s39, 0
      %p501 = por %p499, %p500
      %p502 = scmp.ne.s32.totalorder %s490, %s491
      %p503 = scmp.eq.s32.totalorder %s40, 1
      %p504 = por %p502, %p503
      %p506 = scmp.ne.s32.totalorder %s491, %s505
      %p507 = scmp.eq.s32.totalorder %s40, 0
      %p508 = por %p506, %p507
      %s510 = sadd.s32 %s509, 1
      %p513 = scmp.eq.s32.totalorder %s34, 1
      %p514 = scmp.ne.s32.totalorder %s509, %s511
      %p515 = scmp.eq.s32.totalorder %s34, 0
      %p516 = por %p514, %p515
      %p517 = scmp.ne.s32.totalorder %s509, %s511
      %p518 = scmp.eq.s32.totalorder %s39, 1
      %p519 = por %p517, %p518
      %p520 = scmp.ne.s32.totalorder %s511, %s512
      %p521 = scmp.eq.s32.totalorder %s39, 0
      %p522 = por %p520, %p521
      %p523 = scmp.ne.s32.totalorder %s511, %s512
      %p524 = scmp.eq.s32.totalorder %s40, 1
      %p525 = por %p523, %p524
      %p527 = scmp.ne.s32.totalorder %s512, %s526
      %p528 = scmp.eq.s32.totalorder %s40, 0
      %p529 = por %p527, %p528
      %s531 = sadd.s32 %s530, 1
      %p534 = scmp.eq.s32.totalorder %s34, 1
      %p535 = scmp.ne.s32.totalorder %s530, %s532
      %p536 = scmp.eq.s32.totalorder %s34, 0
      %p537 = por %p535, %p536
      %p538 = scmp.ne.s32.totalorder %s530, %s532
      %p539 = scmp.eq.s32.totalorder %s39, 1
      %p540 = por %p538, %p539
      %p541 = scmp.ne.s32.totalorder %s532, %s533
      %p542 = scmp.eq.s32.totalorder %s39, 0
      %p543 = por %p541, %p542
      %p544 = scmp.ne.s32.totalorder %s532, %s533
      %p545 = scmp.eq.s32.totalorder %s40, 1
      %p546 = por %p544, %p545
      %p548 = scmp.ne.s32.totalorder %s533, %s547
      %p549 = scmp.eq.s32.totalorder %s40, 0
      %p550 = por %p548, %p549
      %s552 = sadd.s32 %s551, 1
      %p555 = scmp.eq.s32.totalorder %s34, 1
      %p556 = scmp.ne.s32.totalorder %s551, %s553
      %p557 = scmp.eq.s32.totalorder %s34, 0
      %p558 = por %p556, %p557
      %p559 = scmp.ne.s32.totalorder %s551, %s553
      %p560 = scmp.eq.s32.totalorder %s39, 1
      %p561 = por %p559, %p560
      %p562 = scmp.ne.s32.totalorder %s553, %s554
      %p563 = scmp.eq.s32.totalorder %s39, 0
      %p564 = por %p562, %p563
      %p565 = scmp.ne.s32.totalorder %s553, %s554
      %p566 = scmp.eq.s32.totalorder %s40, 1
      %p567 = por %p565, %p566
      %p569 = scmp.ne.s32.totalorder %s554, %s568
      %p570 = scmp.eq.s32.totalorder %s40, 0
      %p571 = por %p569, %p570
      %s572 = ssub.s32 %s34, %s41
      %p573 = scmp.eq.s32.totalorder %s572, 0
      %s575 = sadd.s32 %s574, 1
      %s576 = scalar_select %p573, %s574, %s575
      %p579 = pneg %p573
      %p580 = scmp.eq.s32.totalorder %s34, 1
      %p581 = por %p579, %p580
      %p582 = scmp.ne.s32.totalorder %s574, %s577
      %p583 = scmp.eq.s32.totalorder %s34, 0
      %p584 = por %p582, %p583
      %p585 = scmp.ne.s32.totalorder %s574, %s577
      %p586 = scmp.eq.s32.totalorder %s39, 1
      %p587 = por %p585, %p586
      %p588 = scmp.ne.s32.totalorder %s577, %s578
      %p589 = scmp.eq.s32.totalorder %s39, 0
      %p590 = por %p588, %p589
      %p591 = scmp.ne.s32.totalorder %s577, %s578
      %p592 = scmp.eq.s32.totalorder %s40, 1
      %p593 = por %p591, %p592
      %p595 = scmp.ne.s32.totalorder %s578, %s594
      %p596 = scmp.eq.s32.totalorder %s40, 0
      %p597 = por %p595, %p596
      %p598 = scmp.le.s32.totalorder 1, %s34
      %p599 = scmp.lt.s32.totalorder %s34, 3
      %p600 = pnand %p598, %p599
      %p601 = pneg %p600
      // Predicated region
      $region9: #{inception_time_forward.1} parent=5 // pred_check
        _
      $region10: #{inception_time_forward.1} parent=5 // pred_check_branch
        %603 = sbr.rel (%p600) target = $region12
      $region11: #{inception_time_forward.1} parent=5 // pred_region
        %s604 = ssub.s32 %s34, 1
        // Predicated region
        $region13: #{inception_time_forward.1} parent=11 // pred_check
          %p605 = pneg %p81
        $region14: #{inception_time_forward.1} parent=11 // pred_check_branch
          %607 = sbr.rel (%p605) target = $region16
        $region15: #{inception_time_forward.1} parent=11 // pred_region
          _
        $region16: #{inception_time_forward.1} parent=11 // pred_fallthru
          _
        // Predicated region
        $region17: #{inception_time_forward.1} parent=11 // pred_check
          %p608 = pneg %p102
        $region18: #{inception_time_forward.1} parent=11 // pred_check_branch
          %610 = sbr.rel (%p608) target = $region20
        $region19: #{inception_time_forward.1} parent=11 // pred_region
          _
        $region20: #{inception_time_forward.1} parent=11 // pred_fallthru
          _
        // Predicated region
        $region21: #{inception_time_forward.1} parent=11 // pred_check
          %p611 = pneg %p123
        $region22: #{inception_time_forward.1} parent=11 // pred_check_branch
          %613 = sbr.rel (%p611) target = $region24
        $region23: #{inception_time_forward.1} parent=11 // pred_region
          _
        $region24: #{inception_time_forward.1} parent=11 // pred_fallthru
          _
        // Predicated region
        $region25: #{inception_time_forward.1} parent=11 // pred_check
          %p614 = pneg %p144
        $region26: #{inception_time_forward.1} parent=11 // pred_check_branch
          %616 = sbr.rel (%p614) target = $region28
        $region27: #{inception_time_forward.1} parent=11 // pred_region
          _
        $region28: #{inception_time_forward.1} parent=11 // pred_fallthru
          _
        // Predicated region
        $region29: #{inception_time_forward.1} parent=11 // pred_check
          %p617 = pneg %p165
        $region30: #{inception_time_forward.1} parent=11 // pred_check_branch
          %619 = sbr.rel (%p617) target = $region32
        $region31: #{inception_time_forward.1} parent=11 // pred_region
          _
        $region32: #{inception_time_forward.1} parent=11 // pred_fallthru
          _
        // Predicated region
        $region33: #{inception_time_forward.1} parent=11 // pred_check
          %p620 = pneg %p186
        $region34: #{inception_time_forward.1} parent=11 // pred_check_branch
          %622 = sbr.rel (%p620) target = $region36
        $region35: #{inception_time_forward.1} parent=11 // pred_region
          _
        $region36: #{inception_time_forward.1} parent=11 // pred_fallthru
          _
        // Predicated region
        $region37: #{inception_time_forward.1} parent=11 // pred_check
          %p623 = pneg %p207
        $region38: #{inception_time_forward.1} parent=11 // pred_check_branch
          %625 = sbr.rel (%p623) target = $region40
        $region39: #{inception_time_forward.1} parent=11 // pred_region
          _
        $region40: #{inception_time_forward.1} parent=11 // pred_fallthru
          _
        // Predicated region
        $region41: #{inception_time_forward.1} parent=11 // pred_check
          %p626 = pneg %p228
        $region42: #{inception_time_forward.1} parent=11 // pred_check_branch
          %628 = sbr.rel (%p626) target = $region44
        $region43: #{inception_time_forward.1} parent=11 // pred_region
          _
        $region44: #{inception_time_forward.1} parent=11 // pred_fallthru
          _
        // Predicated region
        $region45: #{inception_time_forward.1} parent=11 // pred_check
          %p629 = pneg %p249
        $region46: #{inception_time_forward.1} parent=11 // pred_check_branch
          %631 = sbr.rel (%p629) target = $region48
        $region47: #{inception_time_forward.1} parent=11 // pred_region
          _
        $region48: #{inception_time_forward.1} parent=11 // pred_fallthru
          _
        // Predicated region
        $region49: #{inception_time_forward.1} parent=11 // pred_check
          %p632 = pneg %p270
        $region50: #{inception_time_forward.1} parent=11 // pred_check_branch
          %634 = sbr.rel (%p632) target = $region52
        $region51: #{inception_time_forward.1} parent=11 // pred_region
          _
        $region52: #{inception_time_forward.1} parent=11 // pred_fallthru
          _
        // Predicated region
        $region53: #{inception_time_forward.1} parent=11 // pred_check
          %p635 = pneg %p291
        $region54: #{inception_time_forward.1} parent=11 // pred_check_branch
          %637 = sbr.rel (%p635) target = $region56
        $region55: #{inception_time_forward.1} parent=11 // pred_region
          _
        $region56: #{inception_time_forward.1} parent=11 // pred_fallthru
          _
        // Predicated region
        $region57: #{inception_time_forward.1} parent=11 // pred_check
          %p638 = pneg %p312
        $region58: #{inception_time_forward.1} parent=11 // pred_check_branch
          %640 = sbr.rel (%p638) target = $region60
        $region59: #{inception_time_forward.1} parent=11 // pred_region
          _
        $region60: #{inception_time_forward.1} parent=11 // pred_fallthru
          _
        // Predicated region
        $region61: #{inception_time_forward.1} parent=11 // pred_check
          %p641 = pneg %p333
        $region62: #{inception_time_forward.1} parent=11 // pred_check_branch
          %643 = sbr.rel (%p641) target = $region64
        $region63: #{inception_time_forward.1} parent=11 // pred_region
          _
        $region64: #{inception_time_forward.1} parent=11 // pred_fallthru
          _
        // Predicated region
        $region65: #{inception_time_forward.1} parent=11 // pred_check
          %p644 = pneg %p354
        $region66: #{inception_time_forward.1} parent=11 // pred_check_branch
          %646 = sbr.rel (%p644) target = $region68
        $region67: #{inception_time_forward.1} parent=11 // pred_region
          _
        $region68: #{inception_time_forward.1} parent=11 // pred_fallthru
          _
        // Predicated region
        $region69: #{inception_time_forward.1} parent=11 // pred_check
          %p647 = pneg %p375
        $region70: #{inception_time_forward.1} parent=11 // pred_check_branch
          %649 = sbr.rel (%p647) target = $region72
        $region71: #{inception_time_forward.1} parent=11 // pred_region
          _
        $region72: #{inception_time_forward.1} parent=11 // pred_fallthru
          _
        // Predicated region
        $region73: #{inception_time_forward.1} parent=11 // pred_check
          %p650 = pneg %p396
        $region74: #{inception_time_forward.1} parent=11 // pred_check_branch
          %652 = sbr.rel (%p650) target = $region76
        $region75: #{inception_time_forward.1} parent=11 // pred_region
          _
        $region76: #{inception_time_forward.1} parent=11 // pred_fallthru
          _
        // Predicated region
        $region77: #{inception_time_forward.1} parent=11 // pred_check
          %p653 = pneg %p417
        $region78: #{inception_time_forward.1} parent=11 // pred_check_branch
          %655 = sbr.rel (%p653) target = $region80
        $region79: #{inception_time_forward.1} parent=11 // pred_region
          _
        $region80: #{inception_time_forward.1} parent=11 // pred_fallthru
          _
        // Predicated region
        $region81: #{inception_time_forward.1} parent=11 // pred_check
          %p656 = pneg %p438
        $region82: #{inception_time_forward.1} parent=11 // pred_check_branch
          %658 = sbr.rel (%p656) target = $region84
        $region83: #{inception_time_forward.1} parent=11 // pred_region
          _
        $region84: #{inception_time_forward.1} parent=11 // pred_fallthru
          _
        // Predicated region
        $region85: #{inception_time_forward.1} parent=11 // pred_check
          %p659 = pneg %p459
        $region86: #{inception_time_forward.1} parent=11 // pred_check_branch
          %661 = sbr.rel (%p659) target = $region88
        $region87: #{inception_time_forward.1} parent=11 // pred_region
          _
        $region88: #{inception_time_forward.1} parent=11 // pred_fallthru
          _
        // Predicated region
        $region89: #{inception_time_forward.1} parent=11 // pred_check
          %p662 = pneg %p480
        $region90: #{inception_time_forward.1} parent=11 // pred_check_branch
          %664 = sbr.rel (%p662) target = $region92
        $region91: #{inception_time_forward.1} parent=11 // pred_region
          _
        $region92: #{inception_time_forward.1} parent=11 // pred_fallthru
          _
        // Predicated region
        $region93: #{inception_time_forward.1} parent=11 // pred_check
          %p665 = pneg %p501
        $region94: #{inception_time_forward.1} parent=11 // pred_check_branch
          %667 = sbr.rel (%p665) target = $region96
        $region95: #{inception_time_forward.1} parent=11 // pred_region
          _
        $region96: #{inception_time_forward.1} parent=11 // pred_fallthru
          _
        // Predicated region
        $region97: #{inception_time_forward.1} parent=11 // pred_check
          %p668 = pneg %p522
        $region98: #{inception_time_forward.1} parent=11 // pred_check_branch
          %670 = sbr.rel (%p668) target = $region100
        $region99: #{inception_time_forward.1} parent=11 // pred_region
          _
        $region100: #{inception_time_forward.1} parent=11 // pred_fallthru
          _
        // Predicated region
        $region101: #{inception_time_forward.1} parent=11 // pred_check
          %p671 = pneg %p543
        $region102: #{inception_time_forward.1} parent=11 // pred_check_branch
          %673 = sbr.rel (%p671) target = $region104
        $region103: #{inception_time_forward.1} parent=11 // pred_region
          _
        $region104: #{inception_time_forward.1} parent=11 // pred_fallthru
          _
        // Predicated region
        $region105: #{inception_time_forward.1} parent=11 // pred_check
          %p674 = pneg %p564
        $region106: #{inception_time_forward.1} parent=11 // pred_check_branch
          %676 = sbr.rel (%p674) target = $region108
        $region107: #{inception_time_forward.1} parent=11 // pred_region
          _
        $region108: #{inception_time_forward.1} parent=11 // pred_fallthru
          _
      $region12: #{inception_time_forward.1} parent=5 // pred_fallthru
        _
      %p677 = scmp.lt.s32.totalorder %s34, 2
      // Predicated region
      $region109: #{inception_time_forward.1} parent=5 // pred_check
        %p678 = pneg %p677
      $region110: #{inception_time_forward.1} parent=5 // pred_check_branch
        %680 = sbr.rel (%p678) target = $region112
      $region111: #{inception_time_forward.1} parent=5 // pred_region
        // Predicated region
        $region113: #{inception_time_forward.1} parent=111 // pred_check
          %p681 = pneg %p54
        $region114: #{inception_time_forward.1} parent=111 // pred_check_branch
          %683 = sbr.rel (%p681) target = $region116
        $region115: #{inception_time_forward.1} parent=111 // pred_region
          %p684 = scmp.lt.s32.totalorder %s34, 1
          %s685 = scalar_select %p684, %s34, 1
          %s686 = smul.addr %s685, 4
          %s687 = scalar_lea.vmem %s0, %s686
        $region116: #{inception_time_forward.1} parent=111 // pred_fallthru
          _
      $region112: #{inception_time_forward.1} parent=5 // pred_fallthru
        _
      %p688 = scmp.le.s32.totalorder 1, %s34
      %p689 = scmp.lt.s32.totalorder %s34, 3
      %p690 = pnand %p688, %p689
      %p691 = pneg %p690
      // Predicated region
      $region117: #{inception_time_forward.1} parent=5 // pred_check
        _
      $region118: #{inception_time_forward.1} parent=5 // pred_check_branch
        %693 = sbr.rel (%p690) target = $region120
      $region119: #{inception_time_forward.1} parent=5 // pred_region
        %s694 = ssub.s32 %s34, 1
        %p695 = scmp.lt.s32.totalorder %s39, 1
        %s696 = scalar_select %p695, %s39, 1
        %s697 = smul.addr %s696, 4
        %s698 = scalar_lea.vmem %s0, %s697
        %p699 = pneg %p60
        %p700 = pneg %p57
        %p701 = pneg %p81
        %p702 = pneg %p78
        %p703 = pneg %p102
        %p704 = pneg %p99
        %p705 = pneg %p123
        %p706 = pneg %p120
        %p707 = pneg %p144
        %p708 = pneg %p141
        %p709 = pneg %p165
        %p710 = pneg %p162
        %p711 = pneg %p186
        %p712 = pneg %p183
        %p713 = pneg %p207
        %p714 = pneg %p204
        %p715 = pneg %p228
        %p716 = pneg %p225
        %p717 = pneg %p249
        %p718 = pneg %p246
        %p719 = pneg %p270
        %p720 = pneg %p267
        %p721 = pneg %p291
        %p722 = pneg %p288
        %p723 = pneg %p312
        %p724 = pneg %p309
        %p725 = pneg %p333
        %p726 = pneg %p330
        %p727 = pneg %p354
        %p728 = pneg %p351
        %p729 = pneg %p375
        %p730 = pneg %p372
        %p731 = pneg %p396
        %p732 = pneg %p393
        %p733 = pneg %p417
        %p734 = pneg %p414
        %p735 = pneg %p438
        %p736 = pneg %p435
        %p737 = pneg %p459
        %p738 = pneg %p456
        %p739 = pneg %p480
        %p740 = pneg %p477
        %p741 = pneg %p501
        %p742 = pneg %p498
        %p743 = pneg %p522
        %p744 = pneg %p519
        %p745 = pneg %p543
        %p746 = pneg %p540
        %p747 = pneg %p564
        %p748 = pneg %p561
        %p749 = pneg %p590
        %p750 = pneg %p587
        %s751 = sand.u32 %s577, 1
        %s752 = scalar_lea.sflag [#allocation3], %s751
        %s753 = sand.u32 %s577, 1
        %s754 = scalar_lea.vmem [#allocation2], %s753
        %p755 = scmp.lt.s32.totalorder %s39, 1
        %s756 = scalar_select %p755, %s39, 1
        %s757 = smul.addr %s756, 4
        %s758 = scalar_lea.vmem %s0, %s757
        %v759 = vlaneseq
        %v760 = vand.u32 %v759, 127
        %vm761 = vcmp.lt.s32.totalorder %v760, 32
        %v762 = vld [vmem:[%s758] sm:$0xf]
        %v763 = vld [vmem:[%s1] sm:$0xff]
        %vm764 = vcmask 31744
        %v766 = vsel %vm764, %v763, 0
        %vm768 = vcmask 1043456
        %v770 = vsel %vm768, %v762, 0
        %772 = vmatpush.msra.mxu0 0.0
        %773 = vmatpush.msra.mxu0 0.0
        %774 = vmatpush.msra.mxu0 0.0
        %775 = vmatpush.msra.mxu0 0.0
        %776 = vmatpush.msra.mxu0 0.0
        %777 = vmatpush.msra.mxu0 0.0
        %778 = vmatpush.msra.mxu0 0.0
        %779 = vmatpush.msra.mxu0 0.0
        %780 = vmatpush.msra.mxu0 0.0
        %781 = vmatpush.msra.mxu0 0.0
        %782 = vmatpush.msra.mxu0 0.0
        %783 = vmatpush.msra.mxu0 0.0
        %784 = vmatpush.msra.mxu0 0.0
        %785 = vmatpush.msra.mxu0 0.0
        %786 = vmatpush.msra.mxu0 0.0
        %787 = vmatpush.msra.mxu0 %v770
        %788 = vmatmul.f32.gmra.mxu0 %v766
        %v789 = vpop.f32.mrf.mxu0
        %v790 = vadd.f32 0.0, %v789
        %791 = vdwg.mxu0
        %v792 = vld [vmem:[%s2] sm:$0xff]
        %v793 = vld [vmem:[%s2 + $0x8] sm:$0xff]
        %v794 = vld [vmem:[%s2 + $0x10] sm:$0xff]
        %v795 = vld [vmem:[%s2 + $0x18] sm:$0xff]
        %v796 = vld [vmem:[%s3] sm:$0xff]
        %v797 = vld [vmem:[%s3 + $0x8] sm:$0xff]
        %v798 = vld [vmem:[%s3 + $0x10] sm:$0xff]
        %v799 = vld [vmem:[%s3 + $0x18] sm:$0xff]
        %800 = vrot.lane.b32.xlu0 %v790, 4
        %v801 = vpop.permute.xlu0 %800
        %802 = vrot.lane.b32.xlu0 %v790, 3
        %v803 = vpop.permute.xlu0 %802
        %804 = vrot.lane.b32.xlu0 %v790, 2
        %v805 = vpop.permute.xlu0 %804
        %806 = vrot.lane.b32.xlu0 %v790, 1
        %v807 = vpop.permute.xlu0 %806
        %808 = vrot.lane.b32.xlu0 %v790, 127
        %v809 = vpop.permute.xlu0 %808
        %810 = vrot.lane.b32.xlu0 %v790, 126
        %v811 = vpop.permute.xlu0 %810
        %812 = vrot.lane.b32.xlu0 %v790, 125
        %v813 = vpop.permute.xlu0 %812
        %814 = vrot.lane.b32.xlu0 %v790, 124
        %v815 = vpop.permute.xlu0 %814
        %v816 = vsel %vm761, 1, 0
        %vm817 = vcmp.eq.s32.totalorder %v816, 1
        %v818 = vsel %vm817, %v762, -3e+38
        %819 = vrot.lane.b32.xlu0 %v818, 1
        %v820 = vpop.permute.xlu0 %819
        %v821 = vmax.f32 %v820, %v818
        %822 = vrot.lane.b32.xlu0 %v818, 127
        %v823 = vpop.permute.xlu0 %822
        %v824 = vmax.f32 %v821, %v823
        %v825 = vsel %vm817, %v824, 0.0
        %827 = vset.pattern.permute.xlu0 0
        %828 = vperm.xlu0 %827, %v796
        %v829 = vpop.permute.xlu0 %828
        %832 = vset.pattern.permute.xlu0 0
        %833 = vperm.xlu0 %832, %v797
        %v834 = vpop.permute.xlu0 %833
        %837 = vset.pattern.permute.xlu0 0
        %838 = vperm.xlu0 %837, %v798
        %v839 = vpop.permute.xlu0 %838
        %842 = vset.pattern.permute.xlu0 0
        %843 = vperm.xlu0 %842, %v799
        %v844 = vpop.permute.xlu0 %843
        %vm846 = vcmask 621568
        %v848 = vsel %vm846, %v792, 0
        %v851 = vsel %vm846, %v793, 0
        %v854 = vsel %vm846, %v794, 0
        %v857 = vsel %vm846, %v795, 0
        %v860 = vsel %vm768, %v825, 0
        %862 = vmatpush.msra.mxu0 0.0
        %863 = vmatpush.msra.mxu0 0.0
        %864 = vmatpush.msra.mxu0 0.0
        %865 = vmatpush.msra.mxu0 0.0
        %866 = vmatpush.msra.mxu0 0.0
        %867 = vmatpush.msra.mxu0 0.0
        %868 = vmatpush.msra.mxu0 %v860
        %869 = vmatpush.msra.mxu0 %v815
        %870 = vmatpush.msra.mxu0 %v813
        %871 = vmatpush.msra.mxu0 %v811
        %872 = vmatpush.msra.mxu0 %v809
        %873 = vmatpush.msra.mxu0 %v790
        %874 = vmatpush.msra.mxu0 %v807
        %875 = vmatpush.msra.mxu0 %v805
        %876 = vmatpush.msra.mxu0 %v803
        %877 = vmatpush.msra.mxu0 %v801
        %878 = vmatmul.f32.gmra.mxu0 %v848
        %v879 = vpop.f32.mrf.mxu0
        %v880 = vadd.f32 %v829, %v879
        %881 = vmatmul.f32.gmra.mxu0 %v851
        %v882 = vpop.f32.mrf.mxu0
        %v883 = vadd.f32 %v834, %v882
        %884 = vmatmul.f32.gmra.mxu0 %v854
        %v885 = vpop.f32.mrf.mxu0
        %v886 = vadd.f32 %v839, %v885
        %887 = vmatmul.f32.gmra.mxu0 %v857
        %v888 = vpop.f32.mrf.mxu0
        %v889 = vadd.f32 %v844, %v888
        %890 = vdwg.mxu0
        %vm891 = vcmp.gt.f32.partialorder %v880, 0.0
        %vm892 = vcmp.gt.f32.partialorder %v883, 0.0
        %vm893 = vcmp.gt.f32.partialorder %v886, 0.0
        %vm894 = vcmp.gt.f32.partialorder %v889, 0.0
        %v895 = vmin.f32 %v880, 0.0
        %v896 = vmin.f32 %v883, 0.0
        %v897 = vmin.f32 %v886, 0.0
        %v898 = vmin.f32 %v889, 0.0
        %v899 = vmul.f32 %v895, 1.442695
        %v900 = vpow.pop %v899
        %v901 = vmul.f32 %v896, 1.442695
        %v902 = vpow.pop %v901
        %v903 = vmul.f32 %v897, 1.442695
        %v904 = vpow.pop %v903
        %v905 = vmul.f32 %v898, 1.442695
        %v906 = vpow.pop %v905
        %v907 = vsub.f32 %v900, 1.0
        %v908 = vsub.f32 %v902, 1.0
        %v909 = vsub.f32 %v904, 1.0
        %v910 = vsub.f32 %v906, 1.0
        %v911 = vmul.f32 %v907, 1.6732632
        %v912 = vmul.f32 %v908, 1.6732632
        %v913 = vmul.f32 %v909, 1.6732632
        %v914 = vmul.f32 %v910, 1.6732632
        %v915 = vsel %vm891, %v880, %v911
        %v916 = vsel %vm892, %v883, %v912
        %v917 = vsel %vm893, %v886, %v913
        %v918 = vsel %vm894, %v889, %v914
        %v919 = vmul.f32 %v915, 1.050701
        %v920 = vmul.f32 %v916, 1.050701
        %v921 = vmul.f32 %v917, 1.050701
        %v922 = vmul.f32 %v918, 1.050701
        %v923 = vsel %vm817, %v919, 0.0
        %v924 = vsel %vm817, %v920, 0.0
        %v925 = vsel %vm817, %v921, 0.0
        %v926 = vsel %vm817, %v922, 0.0
        %v927 = vld [vmem:[%s4] sm:$0xff]
        %vm928 = vcmask 261120
        %v930 = vsel %vm928, %v927, 0
        %932 = vmatpush.msra.mxu0 0.0
        %933 = vmatpush.msra.mxu0 0.0
        %934 = vmatpush.msra.mxu0 0.0
        %935 = vmatpush.msra.mxu0 0.0
        %936 = vmatpush.msra.mxu0 0.0
        %937 = vmatpush.msra.mxu0 0.0
        %938 = vmatpush.msra.mxu0 0.0
        %939 = vmatpush.msra.mxu0 0.0
        %940 = vmatpush.msra.mxu0 0.0
        %941 = vmatpush.msra.mxu0 0.0
        %942 = vmatpush.msra.mxu0 0.0
        %943 = vmatpush.msra.mxu0 0.0
        %944 = vmatpush.msra.mxu0 %v926
        %945 = vmatpush.msra.mxu0 %v925
        %946 = vmatpush.msra.mxu0 %v924
        %947 = vmatpush.msra.mxu0 %v923
        %948 = vmatmul.f32.gmra.mxu0 %v930
        %v949 = vpop.f32.mrf.mxu0
        %v950 = vadd.f32 0.0, %v949
        %951 = vdwg.mxu0
        %v952 = vld [vmem:[%s5] sm:$0xff]
        %v953 = vld [vmem:[%s5 + $0x8] sm:$0xff]
        %v954 = vld [vmem:[%s5 + $0x10] sm:$0xff]
        %v955 = vld [vmem:[%s5 + $0x18] sm:$0xff]
        %v956 = vld [vmem:[%s6] sm:$0xff]
        %v957 = vld [vmem:[%s6 + $0x8] sm:$0xff]
        %v958 = vld [vmem:[%s6 + $0x10] sm:$0xff]
        %v959 = vld [vmem:[%s6 + $0x18] sm:$0xff]
        %960 = vrot.lane.b32.xlu0 %v950, 4
        %v961 = vpop.permute.xlu0 %960
        %962 = vrot.lane.b32.xlu0 %v950, 3
        %v963 = vpop.permute.xlu0 %962
        %964 = vrot.lane.b32.xlu0 %v950, 2
        %v965 = vpop.permute.xlu0 %964
        %966 = vrot.lane.b32.xlu0 %v950, 1
        %v967 = vpop.permute.xlu0 %966
        %968 = vrot.lane.b32.xlu0 %v950, 127
        %v969 = vpop.permute.xlu0 %968
        %970 = vrot.lane.b32.xlu0 %v950, 126
        %v971 = vpop.permute.xlu0 %970
        %972 = vrot.lane.b32.xlu0 %v950, 125
        %v973 = vpop.permute.xlu0 %972
        %974 = vrot.lane.b32.xlu0 %v950, 124
        %v975 = vpop.permute.xlu0 %974
        %v976 = vsel %vm817, %v919, -3e+38
        %v977 = vsel %vm817, %v920, -3e+38
        %v978 = vsel %vm817, %v921, -3e+38
        %v979 = vsel %vm817, %v922, -3e+38
        %980 = vrot.lane.b32.xlu0 %v976, 1
        %v981 = vpop.permute.xlu0 %980
        %982 = vrot.lane.b32.xlu0 %v977, 1
        %v983 = vpop.permute.xlu0 %982
        %984 = vrot.lane.b32.xlu0 %v978, 1
        %v985 = vpop.permute.xlu0 %984
        %986 = vrot.lane.b32.xlu0 %v979, 1
        %v987 = vpop.permute.xlu0 %986
        %v988 = vmax.f32 %v981, %v976
        %v989 = vmax.f32 %v983, %v977
        %v990 = vmax.f32 %v985, %v978
        %v991 = vmax.f32 %v987, %v979
        %992 = vrot.lane.b32.xlu0 %v976, 127
        %v993 = vpop.permute.xlu0 %992
        %994 = vrot.lane.b32.xlu0 %v977, 127
        %v995 = vpop.permute.xlu0 %994
        %996 = vrot.lane.b32.xlu0 %v978, 127
        %v997 = vpop.permute.xlu0 %996
        %998 = vrot.lane.b32.xlu0 %v979, 127
        %v999 = vpop.permute.xlu0 %998
        %v1000 = vmax.f32 %v988, %v993
        %v1001 = vmax.f32 %v989, %v995
        %v1002 = vmax.f32 %v990, %v997
        %v1003 = vmax.f32 %v991, %v999
        %v1004 = vsel %vm817, %v1000, 0.0
        %v1005 = vsel %vm817, %v1001, 0.0
        %v1006 = vsel %vm817, %v1002, 0.0
        %v1007 = vsel %vm817, %v1003, 0.0
        %1009 = vset.pattern.permute.xlu0 0
        %1010 = vperm.xlu0 %1009, %v956
        %v1011 = vpop.permute.xlu0 %1010
        %1014 = vset.pattern.permute.xlu0 0
        %1015 = vperm.xlu0 %1014, %v957
        %v1016 = vpop.permute.xlu0 %1015
        %1019 = vset.pattern.permute.xlu0 0
        %1020 = vperm.xlu0 %1019, %v958
        %v1021 = vpop.permute.xlu0 %1020
        %1024 = vset.pattern.permute.xlu0 0
        %1025 = vperm.xlu0 %1024, %v959
        %v1026 = vpop.permute.xlu0 %1025
        %vm1028 = vcmask 850944
        %v1030 = vsel %vm1028, %v952, 0
        %v1033 = vsel %vm1028, %v953, 0
        %v1036 = vsel %vm1028, %v954, 0
        %v1039 = vsel %vm1028, %v955, 0
        %1041 = vmatpush.msra.mxu0 0.0
        %1042 = vmatpush.msra.mxu0 0.0
        %1043 = vmatpush.msra.mxu0 0.0
        %1044 = vmatpush.msra.mxu0 %v1007
        %1045 = vmatpush.msra.mxu0 %v1006
        %1046 = vmatpush.msra.mxu0 %v1005
        %1047 = vmatpush.msra.mxu0 %v1004
        %1048 = vmatpush.msra.mxu0 %v975
        %1049 = vmatpush.msra.mxu0 %v973
        %1050 = vmatpush.msra.mxu0 %v971
        %1051 = vmatpush.msra.mxu0 %v969
        %1052 = vmatpush.msra.mxu0 %v950
        %1053 = vmatpush.msra.mxu0 %v967
        %1054 = vmatpush.msra.mxu0 %v965
        %1055 = vmatpush.msra.mxu0 %v963
        %1056 = vmatpush.msra.mxu0 %v961
        %1057 = vmatmul.f32.gmra.mxu0 %v1030
        %v1058 = vpop.f32.mrf.mxu0
        %v1059 = vadd.f32 %v1011, %v1058
        %1060 = vmatmul.f32.gmra.mxu0 %v1033
        %v1061 = vpop.f32.mrf.mxu0
        %v1062 = vadd.f32 %v1016, %v1061
        %1063 = vmatmul.f32.gmra.mxu0 %v1036
        %v1064 = vpop.f32.mrf.mxu0
        %v1065 = vadd.f32 %v1021, %v1064
        %1066 = vmatmul.f32.gmra.mxu0 %v1039
        %v1067 = vpop.f32.mrf.mxu0
        %v1068 = vadd.f32 %v1026, %v1067
        %1069 = vdwg.mxu0
        %vm1070 = vcmp.gt.f32.partialorder %v1059, 0.0
        %vm1071 = vcmp.gt.f32.partialorder %v1062, 0.0
        %vm1072 = vcmp.gt.f32.partialorder %v1065, 0.0
        %vm1073 = vcmp.gt.f32.partialorder %v1068, 0.0
        %v1074 = vmin.f32 %v1059, 0.0
        %v1075 = vmin.f32 %v1062, 0.0
        %v1076 = vmin.f32 %v1065, 0.0
        %v1077 = vmin.f32 %v1068, 0.0
        %v1078 = vmul.f32 %v1074, 1.442695
        %v1079 = vpow.pop %v1078
        %v1080 = vmul.f32 %v1075, 1.442695
        %v1081 = vpow.pop %v1080
        %v1082 = vmul.f32 %v1076, 1.442695
        %v1083 = vpow.pop %v1082
        %v1084 = vmul.f32 %v1077, 1.442695
        %v1085 = vpow.pop %v1084
        %v1086 = vsub.f32 %v1079, 1.0
        %v1087 = vsub.f32 %v1081, 1.0
        %v1088 = vsub.f32 %v1083, 1.0
        %v1089 = vsub.f32 %v1085, 1.0
        %v1090 = vmul.f32 %v1086, 1.6732632
        %v1091 = vmul.f32 %v1087, 1.6732632
        %v1092 = vmul.f32 %v1088, 1.6732632
        %v1093 = vmul.f32 %v1089, 1.6732632
        %v1094 = vsel %vm1070, %v1059, %v1090
        %v1095 = vsel %vm1071, %v1062, %v1091
        %v1096 = vsel %vm1072, %v1065, %v1092
        %v1097 = vsel %vm1073, %v1068, %v1093
        %v1098 = vmul.f32 %v1094, 1.050701
        %v1099 = vmul.f32 %v1095, 1.050701
        %v1100 = vmul.f32 %v1096, 1.050701
        %v1101 = vmul.f32 %v1097, 1.050701
        %v1102 = vsel %vm817, %v1098, 0.0
        %v1103 = vsel %vm817, %v1099, 0.0
        %v1104 = vsel %vm817, %v1100, 0.0
        %v1105 = vsel %vm817, %v1101, 0.0
        %v1106 = vld [vmem:[%s7] sm:$0xff]
        %v1108 = vsel %vm928, %v1106, 0
        %1110 = vmatpush.msra.mxu0 0.0
        %1111 = vmatpush.msra.mxu0 0.0
        %1112 = vmatpush.msra.mxu0 0.0
        %1113 = vmatpush.msra.mxu0 0.0
        %1114 = vmatpush.msra.mxu0 0.0
        %1115 = vmatpush.msra.mxu0 0.0
        %1116 = vmatpush.msra.mxu0 0.0
        %1117 = vmatpush.msra.mxu0 0.0
        %1118 = vmatpush.msra.mxu0 0.0
        %1119 = vmatpush.msra.mxu0 0.0
        %1120 = vmatpush.msra.mxu0 0.0
        %1121 = vmatpush.msra.mxu0 0.0
        %1122 = vmatpush.msra.mxu0 %v1105
        %1123 = vmatpush.msra.mxu0 %v1104
        %1124 = vmatpush.msra.mxu0 %v1103
        %1125 = vmatpush.msra.mxu0 %v1102
        %1126 = vmatmul.f32.gmra.mxu0 %v1108
        %v1127 = vpop.f32.mrf.mxu0
        %v1128 = vadd.f32 0.0, %v1127
        %1129 = vdwg.mxu0
        %v1130 = vld [vmem:[%s8] sm:$0xff]
        %v1131 = vld [vmem:[%s8 + $0x8] sm:$0xff]
        %v1132 = vld [vmem:[%s8 + $0x10] sm:$0xff]
        %v1133 = vld [vmem:[%s8 + $0x18] sm:$0xff]
        %v1134 = vld [vmem:[%s9] sm:$0xff]
        %v1135 = vld [vmem:[%s9 + $0x8] sm:$0xff]
        %v1136 = vld [vmem:[%s9 + $0x10] sm:$0xff]
        %v1137 = vld [vmem:[%s9 + $0x18] sm:$0xff]
        %1138 = vrot.lane.b32.xlu0 %v1128, 4
        %v1139 = vpop.permute.xlu0 %1138
        %1140 = vrot.lane.b32.xlu0 %v1128, 3
        %v1141 = vpop.permute.xlu0 %1140
        %1142 = vrot.lane.b32.xlu0 %v1128, 2
        %v1143 = vpop.permute.xlu0 %1142
        %1144 = vrot.lane.b32.xlu0 %v1128, 1
        %v1145 = vpop.permute.xlu0 %1144
        %1146 = vrot.lane.b32.xlu0 %v1128, 127
        %v1147 = vpop.permute.xlu0 %1146
        %1148 = vrot.lane.b32.xlu0 %v1128, 126
        %v1149 = vpop.permute.xlu0 %1148
        %1150 = vrot.lane.b32.xlu0 %v1128, 125
        %v1151 = vpop.permute.xlu0 %1150
        %1152 = vrot.lane.b32.xlu0 %v1128, 124
        %v1153 = vpop.permute.xlu0 %1152
        %v1154 = vsel %vm817, %v1098, -3e+38
        %v1155 = vsel %vm817, %v1099, -3e+38
        %v1156 = vsel %vm817, %v1100, -3e+38
        %v1157 = vsel %vm817, %v1101, -3e+38
        %1158 = vrot.lane.b32.xlu0 %v1154, 1
        %v1159 = vpop.permute.xlu0 %1158
        %1160 = vrot.lane.b32.xlu0 %v1155, 1
        %v1161 = vpop.permute.xlu0 %1160
        %1162 = vrot.lane.b32.xlu0 %v1156, 1
        %v1163 = vpop.permute.xlu0 %1162
        %1164 = vrot.lane.b32.xlu0 %v1157, 1
        %v1165 = vpop.permute.xlu0 %1164
        %v1166 = vmax.f32 %v1159, %v1154
        %v1167 = vmax.f32 %v1161, %v1155
        %v1168 = vmax.f32 %v1163, %v1156
        %v1169 = vmax.f32 %v1165, %v1157
        %1170 = vrot.lane.b32.xlu0 %v1154, 127
        %v1171 = vpop.permute.xlu0 %1170
        %1172 = vrot.lane.b32.xlu0 %v1155, 127
        %v1173 = vpop.permute.xlu0 %1172
        %1174 = vrot.lane.b32.xlu0 %v1156, 127
        %v1175 = vpop.permute.xlu0 %1174
        %1176 = vrot.lane.b32.xlu0 %v1157, 127
        %v1177 = vpop.permute.xlu0 %1176
        %v1178 = vmax.f32 %v1166, %v1171
        %v1179 = vmax.f32 %v1167, %v1173
        %v1180 = vmax.f32 %v1168, %v1175
        %v1181 = vmax.f32 %v1169, %v1177
        %v1182 = vsel %vm817, %v1178, 0.0
        %v1183 = vsel %vm817, %v1179, 0.0
        %v1184 = vsel %vm817, %v1180, 0.0
        %v1185 = vsel %vm817, %v1181, 0.0
        %1187 = vset.pattern.permute.xlu0 0
        %1188 = vperm.xlu0 %1187, %v1134
        %v1189 = vpop.permute.xlu0 %1188
        %1192 = vset.pattern.permute.xlu0 0
        %1193 = vperm.xlu0 %1192, %v1135
        %v1194 = vpop.permute.xlu0 %1193
        %1197 = vset.pattern.permute.xlu0 0
        %1198 = vperm.xlu0 %1197, %v1136
        %v1199 = vpop.permute.xlu0 %1198
        %1202 = vset.pattern.permute.xlu0 0
        %1203 = vperm.xlu0 %1202, %v1137
        %v1204 = vpop.permute.xlu0 %1203
        %v1207 = vsel %vm1028, %v1130, 0
        %v1210 = vsel %vm1028, %v1131, 0
        %v1213 = vsel %vm1028, %v1132, 0
        %v1216 = vsel %vm1028, %v1133, 0
        %1218 = vmatpush.msra.mxu0 0.0
        %1219 = vmatpush.msra.mxu0 0.0
        %1220 = vmatpush.msra.mxu0 0.0
        %1221 = vmatpush.msra.mxu0 %v1185
        %1222 = vmatpush.msra.mxu0 %v1184
        %1223 = vmatpush.msra.mxu0 %v1183
        %1224 = vmatpush.msra.mxu0 %v1182
        %1225 = vmatpush.msra.mxu0 %v1153
        %1226 = vmatpush.msra.mxu0 %v1151
        %1227 = vmatpush.msra.mxu0 %v1149
        %1228 = vmatpush.msra.mxu0 %v1147
        %1229 = vmatpush.msra.mxu0 %v1128
        %1230 = vmatpush.msra.mxu0 %v1145
        %1231 = vmatpush.msra.mxu0 %v1143
        %1232 = vmatpush.msra.mxu0 %v1141
        %1233 = vmatpush.msra.mxu0 %v1139
        %1234 = vmatmul.f32.gmra.mxu0 %v1207
        %v1235 = vpop.f32.mrf.mxu0
        %v1236 = vadd.f32 %v1189, %v1235
        %1237 = vmatmul.f32.gmra.mxu0 %v1210
        %v1238 = vpop.f32.mrf.mxu0
        %v1239 = vadd.f32 %v1194, %v1238
        %1240 = vmatmul.f32.gmra.mxu0 %v1213
        %v1241 = vpop.f32.mrf.mxu0
        %v1242 = vadd.f32 %v1199, %v1241
        %1243 = vmatmul.f32.gmra.mxu0 %v1216
        %v1244 = vpop.f32.mrf.mxu0
        %v1245 = vadd.f32 %v1204, %v1244
        %1246 = vdwg.mxu0
        %vm1247 = vcmp.gt.f32.partialorder %v1236, 0.0
        %vm1248 = vcmp.gt.f32.partialorder %v1239, 0.0
        %vm1249 = vcmp.gt.f32.partialorder %v1242, 0.0
        %vm1250 = vcmp.gt.f32.partialorder %v1245, 0.0
        %v1251 = vmin.f32 %v1236, 0.0
        %v1252 = vmin.f32 %v1239, 0.0
        %v1253 = vmin.f32 %v1242, 0.0
        %v1254 = vmin.f32 %v1245, 0.0
        %v1255 = vmul.f32 %v1251, 1.442695
        %v1256 = vpow.pop %v1255
        %v1257 = vmul.f32 %v1252, 1.442695
        %v1258 = vpow.pop %v1257
        %v1259 = vmul.f32 %v1253, 1.442695
        %v1260 = vpow.pop %v1259
        %v1261 = vmul.f32 %v1254, 1.442695
        %v1262 = vpow.pop %v1261
        %v1263 = vsub.f32 %v1256, 1.0
        %v1264 = vsub.f32 %v1258, 1.0
        %v1265 = vsub.f32 %v1260, 1.0
        %v1266 = vsub.f32 %v1262, 1.0
        %v1267 = vmul.f32 %v1263, 1.6732632
        %v1268 = vmul.f32 %v1264, 1.6732632
        %v1269 = vmul.f32 %v1265, 1.6732632
        %v1270 = vmul.f32 %v1266, 1.6732632
        %v1271 = vsel %vm1247, %v1236, %v1267
        %v1272 = vsel %vm1248, %v1239, %v1268
        %v1273 = vsel %vm1249, %v1242, %v1269
        %v1274 = vsel %vm1250, %v1245, %v1270
        %v1275 = vmul.f32 %v1271, 1.050701
        %v1276 = vmul.f32 %v1272, 1.050701
        %v1277 = vmul.f32 %v1273, 1.050701
        %v1278 = vmul.f32 %v1274, 1.050701
        %v1279 = vsel %vm817, %v1275, 0.0
        %v1280 = vsel %vm817, %v1276, 0.0
        %v1281 = vsel %vm817, %v1277, 0.0
        %v1282 = vsel %vm817, %v1278, 0.0
        %v1283 = vld [vmem:[%s10] sm:$0xff]
        %v1284 = vld [vmem:[%s10 + $0x8] sm:$0xff]
        %v1285 = vld [vmem:[%s10 + $0x10] sm:$0xff]
        %v1286 = vld [vmem:[%s10 + $0x18] sm:$0xff]
        %v1287 = vld [vmem:[%s11] sm:$0xff]
        %v1288 = vld [vmem:[%s11 + $0x8] sm:$0xff]
        %v1289 = vld [vmem:[%s11 + $0x10] sm:$0xff]
        %v1290 = vld [vmem:[%s11 + $0x18] sm:$0xff]
        %1292 = vset.pattern.permute.xlu0 0
        %1293 = vperm.xlu0 %1292, %v1287
        %v1294 = vpop.permute.xlu0 %1293
        %1297 = vset.pattern.permute.xlu0 0
        %1298 = vperm.xlu0 %1297, %v1288
        %v1299 = vpop.permute.xlu0 %1298
        %1302 = vset.pattern.permute.xlu0 0
        %1303 = vperm.xlu0 %1302, %v1289
        %v1304 = vpop.permute.xlu0 %1303
        %1307 = vset.pattern.permute.xlu0 0
        %1308 = vperm.xlu0 %1307, %v1290
        %v1309 = vpop.permute.xlu0 %1308
        %v1312 = vsel %vm764, %v1283, 0
        %v1315 = vsel %vm764, %v1284, 0
        %v1318 = vsel %vm764, %v1285, 0
        %v1321 = vsel %vm764, %v1286, 0
        %1323 = vmatpush.msra.mxu0 0.0
        %1324 = vmatpush.msra.mxu0 0.0
        %1325 = vmatpush.msra.mxu0 0.0
        %1326 = vmatpush.msra.mxu0 0.0
        %1327 = vmatpush.msra.mxu0 0.0
        %1328 = vmatpush.msra.mxu0 0.0
        %1329 = vmatpush.msra.mxu0 0.0
        %1330 = vmatpush.msra.mxu0 0.0
        %1331 = vmatpush.msra.mxu0 0.0
        %1332 = vmatpush.msra.mxu0 0.0
        %1333 = vmatpush.msra.mxu0 0.0
        %1334 = vmatpush.msra.mxu0 0.0
        %1335 = vmatpush.msra.mxu0 0.0
        %1336 = vmatpush.msra.mxu0 0.0
        %1337 = vmatpush.msra.mxu0 0.0
        %1338 = vmatpush.msra.mxu0 %v770
        %1339 = vmatmul.f32.gmra.mxu0 %v1312
        %v1340 = vpop.f32.mrf.mxu0
        %v1341 = vadd.f32 %v1294, %v1340
        %1342 = vmatmul.f32.gmra.mxu0 %v1315
        %v1343 = vpop.f32.mrf.mxu0
        %v1344 = vadd.f32 %v1299, %v1343
        %1345 = vmatmul.f32.gmra.mxu0 %v1318
        %v1346 = vpop.f32.mrf.mxu0
        %v1347 = vadd.f32 %v1304, %v1346
        %1348 = vmatmul.f32.gmra.mxu0 %v1321
        %v1349 = vpop.f32.mrf.mxu0
        %v1350 = vadd.f32 %v1309, %v1349
        %1351 = vdwg.mxu0
        %v1352 = vadd.f32 %v1279, %v1341
        %v1353 = vadd.f32 %v1280, %v1344
        %v1354 = vadd.f32 %v1281, %v1347
        %v1355 = vadd.f32 %v1282, %v1350
        %vm1356 = vcmp.gt.f32.partialorder %v1352, 0.0
        %vm1357 = vcmp.gt.f32.partialorder %v1353, 0.0
        %vm1358 = vcmp.gt.f32.partialorder %v1354, 0.0
        %vm1359 = vcmp.gt.f32.partialorder %v1355, 0.0
        %v1360 = vmin.f32 %v1352, 0.0
        %v1361 = vmin.f32 %v1353, 0.0
        %v1362 = vmin.f32 %v1354, 0.0
        %v1363 = vmin.f32 %v1355, 0.0
        %v1364 = vmul.f32 %v1360, 1.442695
        %v1365 = vpow.pop %v1364
        %v1366 = vmul.f32 %v1361, 1.442695
        %v1367 = vpow.pop %v1366
        %v1368 = vmul.f32 %v1362, 1.442695
        %v1369 = vpow.pop %v1368
        %v1370 = vmul.f32 %v1363, 1.442695
        %v1371 = vpow.pop %v1370
        %v1372 = vsub.f32 %v1365, 1.0
        %v1373 = vsub.f32 %v1367, 1.0
        %v1374 = vsub.f32 %v1369, 1.0
        %v1375 = vsub.f32 %v1371, 1.0
        %v1376 = vmul.f32 %v1372, 1.6732632
        %v1377 = vmul.f32 %v1373, 1.6732632
        %v1378 = vmul.f32 %v1374, 1.6732632
        %v1379 = vmul.f32 %v1375, 1.6732632
        %v1380 = vsel %vm1356, %v1352, %v1376
        %v1381 = vsel %vm1357, %v1353, %v1377
        %v1382 = vsel %vm1358, %v1354, %v1378
        %v1383 = vsel %vm1359, %v1355, %v1379
        %v1384 = vmul.f32 %v1380, 1.050701
        %v1385 = vmul.f32 %v1381, 1.050701
        %v1386 = vmul.f32 %v1382, 1.050701
        %v1387 = vmul.f32 %v1383, 1.050701
        %v1388 = vsel %vm817, %v1384, 0.0
        %v1389 = vsel %vm817, %v1385, 0.0
        %v1390 = vsel %vm817, %v1386, 0.0
        %v1391 = vsel %vm817, %v1387, 0.0
        %v1392 = vld [vmem:[%s12] sm:$0xff]
        %v1394 = vsel %vm928, %v1392, 0
        %1396 = vmatpush.msra.mxu0 0.0
        %1397 = vmatpush.msra.mxu0 0.0
        %1398 = vmatpush.msra.mxu0 0.0
        %1399 = vmatpush.msra.mxu0 0.0
        %1400 = vmatpush.msra.mxu0 0.0
        %1401 = vmatpush.msra.mxu0 0.0
        %1402 = vmatpush.msra.mxu0 0.0
        %1403 = vmatpush.msra.mxu0 0.0
        %1404 = vmatpush.msra.mxu0 0.0
        %1405 = vmatpush.msra.mxu0 0.0
        %1406 = vmatpush.msra.mxu0 0.0
        %1407 = vmatpush.msra.mxu0 0.0
        %1408 = vmatpush.msra.mxu0 %v1391
        %1409 = vmatpush.msra.mxu0 %v1390
        %1410 = vmatpush.msra.mxu0 %v1389
        %1411 = vmatpush.msra.mxu0 %v1388
        %1412 = vmatmul.f32.gmra.mxu0 %v1394
        %v1413 = vpop.f32.mrf.mxu0
        %v1414 = vadd.f32 0.0, %v1413
        %1415 = vdwg.mxu0
        %v1416 = vld [vmem:[%s13] sm:$0xff]
        %v1417 = vld [vmem:[%s13 + $0x8] sm:$0xff]
        %v1418 = vld [vmem:[%s13 + $0x10] sm:$0xff]
        %v1419 = vld [vmem:[%s13 + $0x18] sm:$0xff]
        %v1420 = vld [vmem:[%s14] sm:$0xff]
        %v1421 = vld [vmem:[%s14 + $0x8] sm:$0xff]
        %v1422 = vld [vmem:[%s14 + $0x10] sm:$0xff]
        %v1423 = vld [vmem:[%s14 + $0x18] sm:$0xff]
        %1424 = vrot.lane.b32.xlu0 %v1414, 4
        %v1425 = vpop.permute.xlu0 %1424
        %1426 = vrot.lane.b32.xlu0 %v1414, 3
        %v1427 = vpop.permute.xlu0 %1426
        %1428 = vrot.lane.b32.xlu0 %v1414, 2
        %v1429 = vpop.permute.xlu0 %1428
        %1430 = vrot.lane.b32.xlu0 %v1414, 1
        %v1431 = vpop.permute.xlu0 %1430
        %1432 = vrot.lane.b32.xlu0 %v1414, 127
        %v1433 = vpop.permute.xlu0 %1432
        %1434 = vrot.lane.b32.xlu0 %v1414, 126
        %v1435 = vpop.permute.xlu0 %1434
        %1436 = vrot.lane.b32.xlu0 %v1414, 125
        %v1437 = vpop.permute.xlu0 %1436
        %1438 = vrot.lane.b32.xlu0 %v1414, 124
        %v1439 = vpop.permute.xlu0 %1438
        %v1440 = vsel %vm817, %v1384, -3e+38
        %v1441 = vsel %vm817, %v1385, -3e+38
        %v1442 = vsel %vm817, %v1386, -3e+38
        %v1443 = vsel %vm817, %v1387, -3e+38
        %1444 = vrot.lane.b32.xlu0 %v1440, 1
        %v1445 = vpop.permute.xlu0 %1444
        %1446 = vrot.lane.b32.xlu0 %v1441, 1
        %v1447 = vpop.permute.xlu0 %1446
        %1448 = vrot.lane.b32.xlu0 %v1442, 1
        %v1449 = vpop.permute.xlu0 %1448
        %1450 = vrot.lane.b32.xlu0 %v1443, 1
        %v1451 = vpop.permute.xlu0 %1450
        %v1452 = vmax.f32 %v1445, %v1440
        %v1453 = vmax.f32 %v1447, %v1441
        %v1454 = vmax.f32 %v1449, %v1442
        %v1455 = vmax.f32 %v1451, %v1443
        %1456 = vrot.lane.b32.xlu0 %v1440, 127
        %v1457 = vpop.permute.xlu0 %1456
        %1458 = vrot.lane.b32.xlu0 %v1441, 127
        %v1459 = vpop.permute.xlu0 %1458
        %1460 = vrot.lane.b32.xlu0 %v1442, 127
        %v1461 = vpop.permute.xlu0 %1460
        %1462 = vrot.lane.b32.xlu0 %v1443, 127
        %v1463 = vpop.permute.xlu0 %1462
        %v1464 = vmax.f32 %v1452, %v1457
        %v1465 = vmax.f32 %v1453, %v1459
        %v1466 = vmax.f32 %v1454, %v1461
        %v1467 = vmax.f32 %v1455, %v1463
        %v1468 = vsel %vm817, %v1464, 0.0
        %v1469 = vsel %vm817, %v1465, 0.0
        %v1470 = vsel %vm817, %v1466, 0.0
        %v1471 = vsel %vm817, %v1467, 0.0
        %1473 = vset.pattern.permute.xlu0 0
        %1474 = vperm.xlu0 %1473, %v1420
        %v1475 = vpop.permute.xlu0 %1474
        %1478 = vset.pattern.permute.xlu0 0
        %1479 = vperm.xlu0 %1478, %v1421
        %v1480 = vpop.permute.xlu0 %1479
        %1483 = vset.pattern.permute.xlu0 0
        %1484 = vperm.xlu0 %1483, %v1422
        %v1485 = vpop.permute.xlu0 %1484
        %1488 = vset.pattern.permute.xlu0 0
        %1489 = vperm.xlu0 %1488, %v1423
        %v1490 = vpop.permute.xlu0 %1489
        %v1493 = vsel %vm1028, %v1416, 0
        %v1496 = vsel %vm1028, %v1417, 0
        %v1499 = vsel %vm1028, %v1418, 0
        %v1502 = vsel %vm1028, %v1419, 0
        %1504 = vmatpush.msra.mxu0 0.0
        %1505 = vmatpush.msra.mxu0 0.0
        %1506 = vmatpush.msra.mxu0 0.0
        %1507 = vmatpush.msra.mxu0 %v1471
        %1508 = vmatpush.msra.mxu0 %v1470
        %1509 = vmatpush.msra.mxu0 %v1469
        %1510 = vmatpush.msra.mxu0 %v1468
        %1511 = vmatpush.msra.mxu0 %v1439
        %1512 = vmatpush.msra.mxu0 %v1437
        %1513 = vmatpush.msra.mxu0 %v1435
        %1514 = vmatpush.msra.mxu0 %v1433
        %1515 = vmatpush.msra.mxu0 %v1414
        %1516 = vmatpush.msra.mxu0 %v1431
        %1517 = vmatpush.msra.mxu0 %v1429
        %1518 = vmatpush.msra.mxu0 %v1427
        %1519 = vmatpush.msra.mxu0 %v1425
        %1520 = vmatmul.f32.gmra.mxu0 %v1493
        %v1521 = vpop.f32.mrf.mxu0
        %v1522 = vadd.f32 %v1475, %v1521
        %1523 = vmatmul.f32.gmra.mxu0 %v1496
        %v1524 = vpop.f32.mrf.mxu0
        %v1525 = vadd.f32 %v1480, %v1524
        %1526 = vmatmul.f32.gmra.mxu0 %v1499
        %v1527 = vpop.f32.mrf.mxu0
        %v1528 = vadd.f32 %v1485, %v1527
        %1529 = vmatmul.f32.gmra.mxu0 %v1502
        %v1530 = vpop.f32.mrf.mxu0
        %v1531 = vadd.f32 %v1490, %v1530
        %1532 = vdwg.mxu0
        %vm1533 = vcmp.gt.f32.partialorder %v1522, 0.0
        %vm1534 = vcmp.gt.f32.partialorder %v1525, 0.0
        %vm1535 = vcmp.gt.f32.partialorder %v1528, 0.0
        %vm1536 = vcmp.gt.f32.partialorder %v1531, 0.0
        %v1537 = vmin.f32 %v1522, 0.0
        %v1538 = vmin.f32 %v1525, 0.0
        %v1539 = vmin.f32 %v1528, 0.0
        %v1540 = vmin.f32 %v1531, 0.0
        %v1541 = vmul.f32 %v1537, 1.442695
        %v1542 = vpow.pop %v1541
        %v1543 = vmul.f32 %v1538, 1.442695
        %v1544 = vpow.pop %v1543
        %v1545 = vmul.f32 %v1539, 1.442695
        %v1546 = vpow.pop %v1545
        %v1547 = vmul.f32 %v1540, 1.442695
        %v1548 = vpow.pop %v1547
        %v1549 = vsub.f32 %v1542, 1.0
        %v1550 = vsub.f32 %v1544, 1.0
        %v1551 = vsub.f32 %v1546, 1.0
        %v1552 = vsub.f32 %v1548, 1.0
        %v1553 = vmul.f32 %v1549, 1.6732632
        %v1554 = vmul.f32 %v1550, 1.6732632
        %v1555 = vmul.f32 %v1551, 1.6732632
        %v1556 = vmul.f32 %v1552, 1.6732632
        %v1557 = vsel %vm1533, %v1522, %v1553
        %v1558 = vsel %vm1534, %v1525, %v1554
        %v1559 = vsel %vm1535, %v1528, %v1555
        %v1560 = vsel %vm1536, %v1531, %v1556
        %v1561 = vmul.f32 %v1557, 1.050701
        %v1562 = vmul.f32 %v1558, 1.050701
        %v1563 = vmul.f32 %v1559, 1.050701
        %v1564 = vmul.f32 %v1560, 1.050701
        %v1565 = vsel %vm817, %v1561, 0.0
        %v1566 = vsel %vm817, %v1562, 0.0
        %v1567 = vsel %vm817, %v1563, 0.0
        %v1568 = vsel %vm817, %v1564, 0.0
        %v1569 = vld [vmem:[%s15] sm:$0xff]
        %v1571 = vsel %vm928, %v1569, 0
        %1573 = vmatpush.msra.mxu0 0.0
        %1574 = vmatpush.msra.mxu0 0.0
        %1575 = vmatpush.msra.mxu0 0.0
        %1576 = vmatpush.msra.mxu0 0.0
        %1577 = vmatpush.msra.mxu0 0.0
        %1578 = vmatpush.msra.mxu0 0.0
        %1579 = vmatpush.msra.mxu0 0.0
        %1580 = vmatpush.msra.mxu0 0.0
        %1581 = vmatpush.msra.mxu0 0.0
        %1582 = vmatpush.msra.mxu0 0.0
        %1583 = vmatpush.msra.mxu0 0.0
        %1584 = vmatpush.msra.mxu0 0.0
        %1585 = vmatpush.msra.mxu0 %v1568
        %1586 = vmatpush.msra.mxu0 %v1567
        %1587 = vmatpush.msra.mxu0 %v1566
        %1588 = vmatpush.msra.mxu0 %v1565
        %1589 = vmatmul.f32.gmra.mxu0 %v1571
        %v1590 = vpop.f32.mrf.mxu0
        %v1591 = vadd.f32 0.0, %v1590
        %1592 = vdwg.mxu0
        %v1593 = vld [vmem:[%s16] sm:$0xff]
        %v1594 = vld [vmem:[%s16 + $0x8] sm:$0xff]
        %v1595 = vld [vmem:[%s16 + $0x10] sm:$0xff]
        %v1596 = vld [vmem:[%s16 + $0x18] sm:$0xff]
        %v1597 = vld [vmem:[%s17] sm:$0xff]
        %v1598 = vld [vmem:[%s17 + $0x8] sm:$0xff]
        %v1599 = vld [vmem:[%s17 + $0x10] sm:$0xff]
        %v1600 = vld [vmem:[%s17 + $0x18] sm:$0xff]
        %1601 = vrot.lane.b32.xlu0 %v1591, 4
        %v1602 = vpop.permute.xlu0 %1601
        %1603 = vrot.lane.b32.xlu0 %v1591, 3
        %v1604 = vpop.permute.xlu0 %1603
        %1605 = vrot.lane.b32.xlu0 %v1591, 2
        %v1606 = vpop.permute.xlu0 %1605
        %1607 = vrot.lane.b32.xlu0 %v1591, 1
        %v1608 = vpop.permute.xlu0 %1607
        %1609 = vrot.lane.b32.xlu0 %v1591, 127
        %v1610 = vpop.permute.xlu0 %1609
        %1611 = vrot.lane.b32.xlu0 %v1591, 126
        %v1612 = vpop.permute.xlu0 %1611
        %1613 = vrot.lane.b32.xlu0 %v1591, 125
        %v1614 = vpop.permute.xlu0 %1613
        %1615 = vrot.lane.b32.xlu0 %v1591, 124
        %v1616 = vpop.permute.xlu0 %1615
        %v1617 = vsel %vm817, %v1561, -3e+38
        %v1618 = vsel %vm817, %v1562, -3e+38
        %v1619 = vsel %vm817, %v1563, -3e+38
        %v1620 = vsel %vm817, %v1564, -3e+38
        %1621 = vrot.lane.b32.xlu0 %v1617, 1
        %v1622 = vpop.permute.xlu0 %1621
        %1623 = vrot.lane.b32.xlu0 %v1618, 1
        %v1624 = vpop.permute.xlu0 %1623
        %1625 = vrot.lane.b32.xlu0 %v1619, 1
        %v1626 = vpop.permute.xlu0 %1625
        %1627 = vrot.lane.b32.xlu0 %v1620, 1
        %v1628 = vpop.permute.xlu0 %1627
        %v1629 = vmax.f32 %v1622, %v1617
        %v1630 = vmax.f32 %v1624, %v1618
        %v1631 = vmax.f32 %v1626, %v1619
        %v1632 = vmax.f32 %v1628, %v1620
        %1633 = vrot.lane.b32.xlu0 %v1617, 127
        %v1634 = vpop.permute.xlu0 %1633
        %1635 = vrot.lane.b32.xlu0 %v1618, 127
        %v1636 = vpop.permute.xlu0 %1635
        %1637 = vrot.lane.b32.xlu0 %v1619, 127
        %v1638 = vpop.permute.xlu0 %1637
        %1639 = vrot.lane.b32.xlu0 %v1620, 127
        %v1640 = vpop.permute.xlu0 %1639
        %v1641 = vmax.f32 %v1629, %v1634
        %v1642 = vmax.f32 %v1630, %v1636
        %v1643 = vmax.f32 %v1631, %v1638
        %v1644 = vmax.f32 %v1632, %v1640
        %v1645 = vsel %vm817, %v1641, 0.0
        %v1646 = vsel %vm817, %v1642, 0.0
        %v1647 = vsel %vm817, %v1643, 0.0
        %v1648 = vsel %vm817, %v1644, 0.0
        %1650 = vset.pattern.permute.xlu0 0
        %1651 = vperm.xlu0 %1650, %v1597
        %v1652 = vpop.permute.xlu0 %1651
        %1655 = vset.pattern.permute.xlu0 0
        %1656 = vperm.xlu0 %1655, %v1598
        %v1657 = vpop.permute.xlu0 %1656
        %1660 = vset.pattern.permute.xlu0 0
        %1661 = vperm.xlu0 %1660, %v1599
        %v1662 = vpop.permute.xlu0 %1661
        %1665 = vset.pattern.permute.xlu0 0
        %1666 = vperm.xlu0 %1665, %v1600
        %v1667 = vpop.permute.xlu0 %1666
        %v1670 = vsel %vm1028, %v1593, 0
        %v1673 = vsel %vm1028, %v1594, 0
        %v1676 = vsel %vm1028, %v1595, 0
        %v1679 = vsel %vm1028, %v1596, 0
        %1681 = vmatpush.msra.mxu0 0.0
        %1682 = vmatpush.msra.mxu0 0.0
        %1683 = vmatpush.msra.mxu0 0.0
        %1684 = vmatpush.msra.mxu0 %v1648
        %1685 = vmatpush.msra.mxu0 %v1647
        %1686 = vmatpush.msra.mxu0 %v1646
        %1687 = vmatpush.msra.mxu0 %v1645
        %1688 = vmatpush.msra.mxu0 %v1616
        %1689 = vmatpush.msra.mxu0 %v1614
        %1690 = vmatpush.msra.mxu0 %v1612
        %1691 = vmatpush.msra.mxu0 %v1610
        %1692 = vmatpush.msra.mxu0 %v1591
        %1693 = vmatpush.msra.mxu0 %v1608
        %1694 = vmatpush.msra.mxu0 %v1606
        %1695 = vmatpush.msra.mxu0 %v1604
        %1696 = vmatpush.msra.mxu0 %v1602
        %1697 = vmatmul.f32.gmra.mxu0 %v1670
        %v1698 = vpop.f32.mrf.mxu0
        %v1699 = vadd.f32 %v1652, %v1698
        %1700 = vmatmul.f32.gmra.mxu0 %v1673
        %v1701 = vpop.f32.mrf.mxu0
        %v1702 = vadd.f32 %v1657, %v1701
        %1703 = vmatmul.f32.gmra.mxu0 %v1676
        %v1704 = vpop.f32.mrf.mxu0
        %v1705 = vadd.f32 %v1662, %v1704
        %1706 = vmatmul.f32.gmra.mxu0 %v1679
        %v1707 = vpop.f32.mrf.mxu0
        %v1708 = vadd.f32 %v1667, %v1707
        %1709 = vdwg.mxu0
        %vm1710 = vcmp.gt.f32.partialorder %v1699, 0.0
        %vm1711 = vcmp.gt.f32.partialorder %v1702, 0.0
        %vm1712 = vcmp.gt.f32.partialorder %v1705, 0.0
        %vm1713 = vcmp.gt.f32.partialorder %v1708, 0.0
        %v1714 = vmin.f32 %v1699, 0.0
        %v1715 = vmin.f32 %v1702, 0.0
        %v1716 = vmin.f32 %v1705, 0.0
        %v1717 = vmin.f32 %v1708, 0.0
        %v1718 = vmul.f32 %v1714, 1.442695
        %v1719 = vpow.pop %v1718
        %v1720 = vmul.f32 %v1715, 1.442695
        %v1721 = vpow.pop %v1720
        %v1722 = vmul.f32 %v1716, 1.442695
        %v1723 = vpow.pop %v1722
        %v1724 = vmul.f32 %v1717, 1.442695
        %v1725 = vpow.pop %v1724
        %v1726 = vsub.f32 %v1719, 1.0
        %v1727 = vsub.f32 %v1721, 1.0
        %v1728 = vsub.f32 %v1723, 1.0
        %v1729 = vsub.f32 %v1725, 1.0
        %v1730 = vmul.f32 %v1726, 1.6732632
        %v1731 = vmul.f32 %v1727, 1.6732632
        %v1732 = vmul.f32 %v1728, 1.6732632
        %v1733 = vmul.f32 %v1729, 1.6732632
        %v1734 = vsel %vm1710, %v1699, %v1730
        %v1735 = vsel %vm1711, %v1702, %v1731
        %v1736 = vsel %vm1712, %v1705, %v1732
        %v1737 = vsel %vm1713, %v1708, %v1733
        %v1738 = vmul.f32 %v1734, 1.050701
        %v1739 = vmul.f32 %v1735, 1.050701
        %v1740 = vmul.f32 %v1736, 1.050701
        %v1741 = vmul.f32 %v1737, 1.050701
        %v1742 = vsel %vm817, %v1738, 0.0
        %v1743 = vsel %vm817, %v1739, 0.0
        %v1744 = vsel %vm817, %v1740, 0.0
        %v1745 = vsel %vm817, %v1741, 0.0
        %v1746 = vld [vmem:[%s18] sm:$0xff]
        %v1748 = vsel %vm928, %v1746, 0
        %1750 = vmatpush.msra.mxu0 0.0
        %1751 = vmatpush.msra.mxu0 0.0
        %1752 = vmatpush.msra.mxu0 0.0
        %1753 = vmatpush.msra.mxu0 0.0
        %1754 = vmatpush.msra.mxu0 0.0
        %1755 = vmatpush.msra.mxu0 0.0
        %1756 = vmatpush.msra.mxu0 0.0
        %1757 = vmatpush.msra.mxu0 0.0
        %1758 = vmatpush.msra.mxu0 0.0
        %1759 = vmatpush.msra.mxu0 0.0
        %1760 = vmatpush.msra.mxu0 0.0
        %1761 = vmatpush.msra.mxu0 0.0
        %1762 = vmatpush.msra.mxu0 %v1745
        %1763 = vmatpush.msra.mxu0 %v1744
        %1764 = vmatpush.msra.mxu0 %v1743
        %1765 = vmatpush.msra.mxu0 %v1742
        %1766 = vmatmul.f32.gmra.mxu0 %v1748
        %v1767 = vpop.f32.mrf.mxu0
        %v1768 = vadd.f32 0.0, %v1767
        %1769 = vdwg.mxu0
        %v1770 = vld [vmem:[%s19] sm:$0xff]
        %v1771 = vld [vmem:[%s19 + $0x8] sm:$0xff]
        %v1772 = vld [vmem:[%s19 + $0x10] sm:$0xff]
        %v1773 = vld [vmem:[%s19 + $0x18] sm:$0xff]
        %v1774 = vld [vmem:[%s20] sm:$0xff]
        %v1775 = vld [vmem:[%s20 + $0x8] sm:$0xff]
        %v1776 = vld [vmem:[%s20 + $0x10] sm:$0xff]
        %v1777 = vld [vmem:[%s20 + $0x18] sm:$0xff]
        %1778 = vrot.lane.b32.xlu0 %v1768, 4
        %v1779 = vpop.permute.xlu0 %1778
        %1780 = vrot.lane.b32.xlu0 %v1768, 3
        %v1781 = vpop.permute.xlu0 %1780
        %1782 = vrot.lane.b32.xlu0 %v1768, 2
        %v1783 = vpop.permute.xlu0 %1782
        %1784 = vrot.lane.b32.xlu0 %v1768, 1
        %v1785 = vpop.permute.xlu0 %1784
        %1786 = vrot.lane.b32.xlu0 %v1768, 127
        %v1787 = vpop.permute.xlu0 %1786
        %1788 = vrot.lane.b32.xlu0 %v1768, 126
        %v1789 = vpop.permute.xlu0 %1788
        %1790 = vrot.lane.b32.xlu0 %v1768, 125
        %v1791 = vpop.permute.xlu0 %1790
        %1792 = vrot.lane.b32.xlu0 %v1768, 124
        %v1793 = vpop.permute.xlu0 %1792
        %v1794 = vsel %vm817, %v1738, -3e+38
        %v1795 = vsel %vm817, %v1739, -3e+38
        %v1796 = vsel %vm817, %v1740, -3e+38
        %v1797 = vsel %vm817, %v1741, -3e+38
        %1798 = vrot.lane.b32.xlu0 %v1794, 1
        %v1799 = vpop.permute.xlu0 %1798
        %1800 = vrot.lane.b32.xlu0 %v1795, 1
        %v1801 = vpop.permute.xlu0 %1800
        %1802 = vrot.lane.b32.xlu0 %v1796, 1
        %v1803 = vpop.permute.xlu0 %1802
        %1804 = vrot.lane.b32.xlu0 %v1797, 1
        %v1805 = vpop.permute.xlu0 %1804
        %v1806 = vmax.f32 %v1799, %v1794
        %v1807 = vmax.f32 %v1801, %v1795
        %v1808 = vmax.f32 %v1803, %v1796
        %v1809 = vmax.f32 %v1805, %v1797
        %1810 = vrot.lane.b32.xlu0 %v1794, 127
        %v1811 = vpop.permute.xlu0 %1810
        %1812 = vrot.lane.b32.xlu0 %v1795, 127
        %v1813 = vpop.permute.xlu0 %1812
        %1814 = vrot.lane.b32.xlu0 %v1796, 127
        %v1815 = vpop.permute.xlu0 %1814
        %1816 = vrot.lane.b32.xlu0 %v1797, 127
        %v1817 = vpop.permute.xlu0 %1816
        %v1818 = vmax.f32 %v1806, %v1811
        %v1819 = vmax.f32 %v1807, %v1813
        %v1820 = vmax.f32 %v1808, %v1815
        %v1821 = vmax.f32 %v1809, %v1817
        %v1822 = vsel %vm817, %v1818, 0.0
        %v1823 = vsel %vm817, %v1819, 0.0
        %v1824 = vsel %vm817, %v1820, 0.0
        %v1825 = vsel %vm817, %v1821, 0.0
        %1827 = vset.pattern.permute.xlu0 0
        %1828 = vperm.xlu0 %1827, %v1774
        %v1829 = vpop.permute.xlu0 %1828
        %1832 = vset.pattern.permute.xlu0 0
        %1833 = vperm.xlu0 %1832, %v1775
        %v1834 = vpop.permute.xlu0 %1833
        %1837 = vset.pattern.permute.xlu0 0
        %1838 = vperm.xlu0 %1837, %v1776
        %v1839 = vpop.permute.xlu0 %1838
        %1842 = vset.pattern.permute.xlu0 0
        %1843 = vperm.xlu0 %1842, %v1777
        %v1844 = vpop.permute.xlu0 %1843
        %v1847 = vsel %vm1028, %v1770, 0
        %v1850 = vsel %vm1028, %v1771, 0
        %v1853 = vsel %vm1028, %v1772, 0
        %v1856 = vsel %vm1028, %v1773, 0
        %1858 = vmatpush.msra.mxu0 0.0
        %1859 = vmatpush.msra.mxu0 0.0
        %1860 = vmatpush.msra.mxu0 0.0
        %1861 = vmatpush.msra.mxu0 %v1825
        %1862 = vmatpush.msra.mxu0 %v1824
        %1863 = vmatpush.msra.mxu0 %v1823
        %1864 = vmatpush.msra.mxu0 %v1822
        %1865 = vmatpush.msra.mxu0 %v1793
        %1866 = vmatpush.msra.mxu0 %v1791
        %1867 = vmatpush.msra.mxu0 %v1789
        %1868 = vmatpush.msra.mxu0 %v1787
        %1869 = vmatpush.msra.mxu0 %v1768
        %1870 = vmatpush.msra.mxu0 %v1785
        %1871 = vmatpush.msra.mxu0 %v1783
        %1872 = vmatpush.msra.mxu0 %v1781
        %1873 = vmatpush.msra.mxu0 %v1779
        %1874 = vmatmul.f32.gmra.mxu0 %v1847
        %v1875 = vpop.f32.mrf.mxu0
        %v1876 = vadd.f32 %v1829, %v1875
        %1877 = vmatmul.f32.gmra.mxu0 %v1850
        %v1878 = vpop.f32.mrf.mxu0
        %v1879 = vadd.f32 %v1834, %v1878
        %1880 = vmatmul.f32.gmra.mxu0 %v1853
        %v1881 = vpop.f32.mrf.mxu0
        %v1882 = vadd.f32 %v1839, %v1881
        %1883 = vmatmul.f32.gmra.mxu0 %v1856
        %v1884 = vpop.f32.mrf.mxu0
        %v1885 = vadd.f32 %v1844, %v1884
        %1886 = vdwg.mxu0
        %vm1887 = vcmp.gt.f32.partialorder %v1876, 0.0
        %vm1888 = vcmp.gt.f32.partialorder %v1879, 0.0
        %vm1889 = vcmp.gt.f32.partialorder %v1882, 0.0
        %vm1890 = vcmp.gt.f32.partialorder %v1885, 0.0
        %v1891 = vmin.f32 %v1876, 0.0
        %v1892 = vmin.f32 %v1879, 0.0
        %v1893 = vmin.f32 %v1882, 0.0
        %v1894 = vmin.f32 %v1885, 0.0
        %v1895 = vmul.f32 %v1891, 1.442695
        %v1896 = vpow.pop %v1895
        %v1897 = vmul.f32 %v1892, 1.442695
        %v1898 = vpow.pop %v1897
        %v1899 = vmul.f32 %v1893, 1.442695
        %v1900 = vpow.pop %v1899
        %v1901 = vmul.f32 %v1894, 1.442695
        %v1902 = vpow.pop %v1901
        %v1903 = vsub.f32 %v1896, 1.0
        %v1904 = vsub.f32 %v1898, 1.0
        %v1905 = vsub.f32 %v1900, 1.0
        %v1906 = vsub.f32 %v1902, 1.0
        %v1907 = vmul.f32 %v1903, 1.6732632
        %v1908 = vmul.f32 %v1904, 1.6732632
        %v1909 = vmul.f32 %v1905, 1.6732632
        %v1910 = vmul.f32 %v1906, 1.6732632
        %v1911 = vsel %vm1887, %v1876, %v1907
        %v1912 = vsel %vm1888, %v1879, %v1908
        %v1913 = vsel %vm1889, %v1882, %v1909
        %v1914 = vsel %vm1890, %v1885, %v1910
        %v1915 = vmul.f32 %v1911, 1.050701
        %v1916 = vmul.f32 %v1912, 1.050701
        %v1917 = vmul.f32 %v1913, 1.050701
        %v1918 = vmul.f32 %v1914, 1.050701
        %v1919 = vsel %vm817, %v1915, 0.0
        %v1920 = vsel %vm817, %v1916, 0.0
        %v1921 = vsel %vm817, %v1917, 0.0
        %v1922 = vsel %vm817, %v1918, 0.0
        %v1923 = vld [vmem:[%s21] sm:$0xff]
        %v1924 = vld [vmem:[%s21 + $0x8] sm:$0xff]
        %v1925 = vld [vmem:[%s21 + $0x10] sm:$0xff]
        %v1926 = vld [vmem:[%s21 + $0x18] sm:$0xff]
        %v1927 = vld [vmem:[%s22] sm:$0xff]
        %v1928 = vld [vmem:[%s22 + $0x8] sm:$0xff]
        %v1929 = vld [vmem:[%s22 + $0x10] sm:$0xff]
        %v1930 = vld [vmem:[%s22 + $0x18] sm:$0xff]
        %1932 = vset.pattern.permute.xlu0 0
        %1933 = vperm.xlu0 %1932, %v1927
        %v1934 = vpop.permute.xlu0 %1933
        %1937 = vset.pattern.permute.xlu0 0
        %1938 = vperm.xlu0 %1937, %v1928
        %v1939 = vpop.permute.xlu0 %1938
        %1942 = vset.pattern.permute.xlu0 0
        %1943 = vperm.xlu0 %1942, %v1929
        %v1944 = vpop.permute.xlu0 %1943
        %1947 = vset.pattern.permute.xlu0 0
        %1948 = vperm.xlu0 %1947, %v1930
        %v1949 = vpop.permute.xlu0 %1948
        %v1952 = vsel %vm928, %v1923, 0
        %v1955 = vsel %vm928, %v1924, 0
        %v1958 = vsel %vm928, %v1925, 0
        %v1961 = vsel %vm928, %v1926, 0
        %1963 = vmatpush.msra.mxu0 0.0
        %1964 = vmatpush.msra.mxu0 0.0
        %1965 = vmatpush.msra.mxu0 0.0
        %1966 = vmatpush.msra.mxu0 0.0
        %1967 = vmatpush.msra.mxu0 0.0
        %1968 = vmatpush.msra.mxu0 0.0
        %1969 = vmatpush.msra.mxu0 0.0
        %1970 = vmatpush.msra.mxu0 0.0
        %1971 = vmatpush.msra.mxu0 0.0
        %1972 = vmatpush.msra.mxu0 0.0
        %1973 = vmatpush.msra.mxu0 0.0
        %1974 = vmatpush.msra.mxu0 0.0
        %1975 = vmatpush.msra.mxu0 %v1391
        %1976 = vmatpush.msra.mxu0 %v1390
        %1977 = vmatpush.msra.mxu0 %v1389
        %1978 = vmatpush.msra.mxu0 %v1388
        %1979 = vmatmul.f32.gmra.mxu0 %v1952
        %v1980 = vpop.f32.mrf.mxu0
        %v1981 = vadd.f32 %v1934, %v1980
        %1982 = vmatmul.f32.gmra.mxu0 %v1955
        %v1983 = vpop.f32.mrf.mxu0
        %v1984 = vadd.f32 %v1939, %v1983
        %1985 = vmatmul.f32.gmra.mxu0 %v1958
        %v1986 = vpop.f32.mrf.mxu0
        %v1987 = vadd.f32 %v1944, %v1986
        %1988 = vmatmul.f32.gmra.mxu0 %v1961
        %v1989 = vpop.f32.mrf.mxu0
        %v1990 = vadd.f32 %v1949, %v1989
        %1991 = vdwg.mxu0
        %v1992 = vadd.f32 %v1919, %v1981
        %v1993 = vadd.f32 %v1920, %v1984
        %v1994 = vadd.f32 %v1921, %v1987
        %v1995 = vadd.f32 %v1922, %v1990
        %vm1996 = vcmp.gt.f32.partialorder %v1992, 0.0
        %vm1997 = vcmp.gt.f32.partialorder %v1993, 0.0
        %vm1998 = vcmp.gt.f32.partialorder %v1994, 0.0
        %vm1999 = vcmp.gt.f32.partialorder %v1995, 0.0
        %v2000 = vmin.f32 %v1992, 0.0
        %v2001 = vmin.f32 %v1993, 0.0
        %v2002 = vmin.f32 %v1994, 0.0
        %v2003 = vmin.f32 %v1995, 0.0
        %v2004 = vmul.f32 %v2000, 1.442695
        %v2005 = vpow.pop %v2004
        %v2006 = vmul.f32 %v2001, 1.442695
        %v2007 = vpow.pop %v2006
        %v2008 = vmul.f32 %v2002, 1.442695
        %v2009 = vpow.pop %v2008
        %v2010 = vmul.f32 %v2003, 1.442695
        %v2011 = vpow.pop %v2010
        %v2012 = vsub.f32 %v2005, 1.0
        %v2013 = vsub.f32 %v2007, 1.0
        %v2014 = vsub.f32 %v2009, 1.0
        %v2015 = vsub.f32 %v2011, 1.0
        %v2016 = vmul.f32 %v2012, 1.6732632
        %v2017 = vmul.f32 %v2013, 1.6732632
        %v2018 = vmul.f32 %v2014, 1.6732632
        %v2019 = vmul.f32 %v2015, 1.6732632
        %v2020 = vsel %vm1996, %v1992, %v2016
        %v2021 = vsel %vm1997, %v1993, %v2017
        %v2022 = vsel %vm1998, %v1994, %v2018
        %v2023 = vsel %vm1999, %v1995, %v2019
        %v2024 = vmul.f32 %v2020, 1.050701
        %v2025 = vmul.f32 %v2021, 1.050701
        %v2026 = vmul.f32 %v2022, 1.050701
        %v2027 = vmul.f32 %v2023, 1.050701
        %v2028 = vsel %vm817, %v2024, 0.0
        %v2029 = vsel %vm817, %v2025, 0.0
        %v2030 = vsel %vm817, %v2026, 0.0
        %v2031 = vsel %vm817, %v2027, 0.0
        %v2032 = vld [vmem:[%s23] sm:$0xff]
        %v2033 = vld [vmem:[%s23 + $0x8] sm:$0xff]
        %v2034 = vld [vmem:[%s23 + $0x10] sm:$0xff]
        %v2035 = vld [vmem:[%s23 + $0x18] sm:$0xff]
        %v2036 = vld [vmem:[%s24] sm:$0x1]
        %2037 = vadd.xlane.f32.xlu0 %v2028
        %v2038 = vpop.xlane.xlu0 %2037
        %2039 = vadd.xlane.f32.xlu0 %v2029
        %v2040 = vpop.xlane.xlu0 %2039
        %2041 = vadd.xlane.f32.xlu0 %v2030
        %v2042 = vpop.xlane.xlu0 %2041
        %2043 = vadd.xlane.f32.xlu0 %v2031
        %v2044 = vpop.xlane.xlu0 %2043
        %v2045 = vmul.f32 %v2038, 0.03125
        %v2046 = vmul.f32 %v2040, 0.03125
        %v2047 = vmul.f32 %v2042, 0.03125
        %v2048 = vmul.f32 %v2044, 0.03125
        %v2049 = vmul.f32 %v2045, %v2032
        %v2050 = vmul.f32 %v2046, %v2033
        %v2051 = vmul.f32 %v2047, %v2034
        %v2052 = vmul.f32 %v2048, %v2035
        %vm2053 = vcmask 23552
        %v2054 = vsel %vm2053, %v2049, 0.0
        %v2055 = vsel %vm2053, %v2050, 0.0
        %v2056 = vadd.f32 %v2054, %v2055
        %v2057 = vsel %vm2053, %v2051, 0.0
        %v2058 = vadd.f32 %v2056, %v2057
        %v2059 = vsel %vm2053, %v2052, 0.0
        %v2060 = vadd.f32 %v2058, %v2059
        %v2061 = vrot.slane %v2060, 4
        %v2062 = vadd.f32 %v2060, %v2061
        %v2063 = vrot.slane %v2062, 2
        %v2064 = vadd.f32 %v2062, %v2063
        %v2065 = vrot.slane %v2064, 1
        %v2066 = vadd.f32 %v2064, %v2065
        %v2067 = vadd.f32 %v2066, %v2036
        %vm2068 = vcmask 16384
        %2069 = vst.msk [vmem:[%s754] sm:$0x1] %vm2068, %v2067
        %s2070 = sand.u32 %s577, 1
        %s2071 = scalar_lea.sflag [#allocation3], %s2070
        %s2072 = sand.u32 %s577, 1
        %s2073 = scalar_lea.vmem [#allocation2], %s2072
        // Predicated region
        $region121: #{inception_time_forward.1} parent=119 // pred_check
          %p2074 = pneg %p587
        $region122: #{inception_time_forward.1} parent=119 // pred_check_branch
          %2076 = sbr.rel (%p2074) target = $region124
        $region123: #{inception_time_forward.1} parent=119 // pred_region
          %2078 = vsyncadd %s2071, 0
          %s2079 = scalar_lea.hbm %s25, %s39
          %s2081 = sshll.u32 %s2073, 4
          %s2082 = int_to_ptr.vmem [resolvable:$true] %s2081
          %s2083 = sshll.u32 %s2079, 4
          %s2084 = int_to_ptr.hbm [resolvable:$true] %s2083
          %2086 = dma.vmem_to_hbm [thread:$0]  %s2082, 16, %s2084, %s2071
        $region124: #{inception_time_forward.1} parent=119 // pred_fallthru
          _
      $region120: #{inception_time_forward.1} parent=5 // pred_fallthru
        _
      %p2087 = scmp.le.s32.totalorder 2, %s34
      // Predicated region
      $region125: #{inception_time_forward.1} parent=5 // pred_check
        %p2088 = pneg %p2087
      $region126: #{inception_time_forward.1} parent=5 // pred_check_branch
        %2090 = sbr.rel (%p2088) target = $region128
      $region127: #{inception_time_forward.1} parent=5 // pred_region
        %s2091 = ssub.s32 %s34, 2
        // Predicated region
        $region129: #{inception_time_forward.1} parent=127 // pred_check
          %p2092 = pneg %p593
        $region130: #{inception_time_forward.1} parent=127 // pred_check_branch
          %2094 = sbr.rel (%p2092) target = $region132
        $region131: #{inception_time_forward.1} parent=127 // pred_region
          %s2095 = sand.u32 %s578, 1
          %s2096 = scalar_lea.sflag [#allocation3], %s2095
          %s2097 = sand.u32 %s578, 1
          %s2098 = scalar_lea.vmem [#allocation2], %s2097
          %2100 = dma.done %s2096, 16
        $region132: #{inception_time_forward.1} parent=127 // pred_fallthru
          _
      $region128: #{inception_time_forward.1} parent=5 // pred_fallthru
        _
    $region6: #{inception_time_forward.1} parent=1 // loop_footer
      %s38 = sadd.s32 1, %s34
    $region7: #{inception_time_forward.1} parent=1 // loop_footer_branch
      %33 = sbr.rel target = $region3
    $region8: #{inception_time_forward.1} parent=1 // loop_exit
      _
    %2101 = vsyncpa [#allocation3], 1
    %s2102 = scalar_lea.sflag [#allocation3], 1
    %2103 = vsyncpa %s2102, 1

</llo_original>
